<compile_context>
chip_gen: v7x
topology: tpu7x:2x2x1
jax: 0.10.0
libtpu: 0.0.40
codegen_flags: <defaults>
</compile_context>

<pallas_src>
import functools

import jax
import jax.numpy as jnp
from jax import lax
from jax.experimental import pallas as pl
from jax.experimental.pallas import tpu as pltpu


def _cdiv(a, b):
    return -(-a // b)


def _vmem_limit_bytes():
    # Keep the per-core VMEM budget explicit per generation (v7x has 64 MiB/TC
    # vs 128 MiB on v5e/v6e).  The tiles here are tiny, so this is headroom.
    try:
        cap = int(pltpu.get_tpu_info().vmem_capacity_bytes)
        return max(16 * 1024 * 1024, min(cap // 2, 64 * 1024 * 1024))
    except Exception:
        return 32 * 1024 * 1024


# ----------------------------- Pallas kernels ------------------------------ #

def _accumulate_taps(xa_ref, xb_ref, w_ref, xcat_ref, *, shifts, tf):
    """In-kernel im2col: sum over the 4 (ph, pw) taps of
         W[t] (OC, 4C)  @  X[:, f + shift_t] (4C, TF)
    where X is the space-to-depth activation, flat spatial on the lane axis.
    xa covers lanes [i*TF, (i+1)*TF); xb the small spill window after it."""
    xcat_ref[:, :tf] = xa_ref[...]
    xcat_ref[:, tf:] = xb_ref[...]
    acc = None
    for t, s in enumerate(shifts):
        part = jnp.dot(w_ref[t], xcat_ref[:, s:s + tf],
                       preferred_element_type=jnp.float32)
        acc = part if acc is None else acc + part
    return acc  # (OC, TF) f32


def _conv_s2d_bn_kernel(xa_ref, xb_ref, w_ref, mask_ref,
                        y_ref, sum_ref, sq_ref, xcat_ref, *, shifts, tf):
    acc = _accumulate_taps(xa_ref, xb_ref, w_ref, xcat_ref, shifts=shifts, tf=tf)
    # pre-BN activation stored bf16 (halves this tensor's HBM write+read);
    # the store is lane-dense: last dim is the TF lane tile (multiple of 128).
    y_ref[...] = acc.astype(y_ref.dtype)
    # fused per-tile BatchNorm statistics from the f32 accumulator; the mask
    # zeroes junk columns / padded lanes of the flat-shift layout.
    accm = acc * mask_ref[...]                     # (OC, TF) * (1, TF)
    sum_ref[...] = jnp.sum(accm, axis=1, keepdims=True)        # (OC, 1)
    sq_ref[...] = jnp.sum(accm * acc, axis=1, keepdims=True)   # (OC, 1)


def _conv_s2d_bias_act_kernel(xa_ref, xb_ref, w_ref, b_ref,
                              y_ref, xcat_ref, *, shifts, tf, slope):
    acc = _accumulate_taps(xa_ref, xb_ref, w_ref, xcat_ref, shifts=shifts, tf=tf)
    acc = acc + b_ref[...]                          # (OC, 1) broadcast over lanes
    acc = jnp.where(acc >= 0, acc, slope * acc)     # LeakyReLU fused in epilogue
    y_ref[...] = acc.astype(y_ref.dtype)


def _gemm_bias_kernel(x_ref, w_ref, b_ref, o_ref):
    acc = jnp.dot(x_ref[...], w_ref[...], preferred_element_type=jnp.float32)
    o_ref[...] = (acc + b_ref[...]).astype(o_ref.dtype)


# --------------------- layout prep (fused XLA, ~1x bytes) ------------------- #

def _space_to_depth_flat(act, *, tf_lane_target=512):
    """act: (N, C, H, W) post-activation, channels-first.

    Builds the flat-shift operand for a 4x4 / stride-2 / pad-1 conv:
      A    : (N, 4C, MpA) bf16   space-to-depth image, flat spatial (lanes)
      mask : (1, nt*TF) f32      1.0 on valid output lanes (drops the junk
                                 column of the flat-shift trick and tile pad)
    One fused XLA layout pass; the caller folds the previous layer's BN affine
    + LeakyReLU into `act` so no standalone activation pass is needed.
    tf_lane_target: raise toward 1024-2048 on v6e for large-M layers (review);
    kept moderate so wide layers stay inside v7x's 64 MiB/core VMEM.
    """
    n, c, h, w = act.shape
    assert h % 2 == 0 and w % 2 == 0
    oh, ow = h // 2, w // 2
    ohp, owp = oh + 1, ow + 1
    m_out = oh * owp                            # flat output length (junk col incl.)
    tb = 128 * _cdiv(owp + 1, 128)              # >= max tap shift (= owp + 1)
    kmul = max(1, min(_cdiv(tf_lane_target, tb), _cdiv(m_out, tb)))
    tf = tb * kmul
    nt = _cdiv(m_out, tf)
    mp_out = nt * tf
    mp_a = nt * tf + tb

    xp = jnp.pad(act, ((0, 0), (0, 0), (1, 1), (1, 1)))
    xs = xp.reshape(n, c, ohp, 2, owp, 2).transpose(0, 3, 5, 1, 2, 4)
    xs = xs.reshape(n, 4 * c, ohp * owp).astype(jnp.bfloat16)
    a = jnp.pad(xs, ((0, 0), (0, 0), (0, mp_a - ohp * owp)))

    f = jnp.arange(mp_out, dtype=jnp.int32)
    mask = (((f % owp) < ow) & (f < m_out)).astype(jnp.float32).reshape(1, mp_out)

    geom = dict(n=n, c4=4 * c, oh=oh, ow=ow, owp=owp, m_out=m_out,
                tf=tf, tb=tb, nt=nt, mp_out=mp_out,
                shifts=(0, 1, owp, owp + 1))
    return a, mask, geom


def _w_taps(w):
    """(OC, IC, 4, 4) -> (4, OC, 4*IC) bf16: tap = 2*ph+pw, contraction index
    = (rh*2+rw)*IC + ic, matching the space-to-depth channel order."""
    oc, ic = w.shape[0], w.shape[1]
    wt = w.reshape(oc, ic, 2, 2, 2, 2).transpose(2, 4, 0, 3, 5, 1)
    return wt.reshape(4, oc, 4 * ic).astype(jnp.bfloat16)


def _unflatten_act(y_flat, geom, oc):
    """(N, OC, nt*TF) flat-shift output -> (N, OC, OH, OW) (drops junk/pad)."""
    n, oh, ow, owp, m_out = (geom["n"], geom["oh"], geom["ow"],
                             geom["owp"], geom["m_out"])
    y = y_flat[:, :, :m_out].reshape(n, oc, oh, owp)
    return y[:, :, :, :ow]


# ------------------------------ kernel wrappers ----------------------------- #

def conv4x4s2_bn(a, w_taps, mask, geom):
    """4x4/stride-2/pad-1 conv (bias-free) with fused per-tile BN statistics.
    Returns (y: (N, OC, nt*TF) bf16 transposed conv output, sum/sq: (OC,) f32)."""
    n, c4, nt, tf, tb = geom["n"], geom["c4"], geom["nt"], geom["tf"], geom["tb"]
    oc = w_taps.shape[1]
    mp_out = geom["mp_out"]
    kb = tf // tb
    cost = pl.CostEstimate(
        flops=int(2 * n * nt * (4 * oc * c4 * tf + 2 * oc * tf)),
        transcendentals=0,
        bytes_accessed=int(n * nt * (tf + tb) * c4 * 2 + 4 * oc * c4 * 2
                           + n * mp_out * oc * 2 + 2 * n * nt * oc * 4))
    y, s1, s2 = pl.pallas_call(
        functools.partial(_conv_s2d_bn_kernel, shifts=geom["shifts"], tf=tf),
        out_shape=(
            jax.ShapeDtypeStruct((n, oc, mp_out), jnp.bfloat16),
            jax.ShapeDtypeStruct((n * nt, oc, 1), jnp.float32),
            jax.ShapeDtypeStruct((n * nt, oc, 1), jnp.float32),
        ),
        grid=(n, nt),
        in_specs=[
            pl.BlockSpec((None, c4, tf), lambda b, i: (b, 0, i)),
            pl.BlockSpec((None, c4, tb), lambda b, i: (b, 0, (i + 1) * kb)),
            pl.BlockSpec((4, oc, c4), lambda b, i: (0, 0, 0)),
            pl.BlockSpec((1, tf), lambda b, i: (0, i)),
        ],
        out_specs=(
            pl.BlockSpec((None, oc, tf), lambda b, i: (b, 0, i)),
            pl.BlockSpec((None, oc, 1), lambda b, i: (b * nt + i, 0, 0)),
            pl.BlockSpec((None, oc, 1), lambda b, i: (b * nt + i, 0, 0)),
        ),
        scratch_shapes=[pltpu.VMEM((c4, tf + tb), jnp.bfloat16)],
        compiler_params=pltpu.CompilerParams(
            dimension_semantics=("parallel", "parallel"),
            vmem_limit_bytes=_vmem_limit_bytes()),
        cost_estimate=cost,
    )(a, a, w_taps, mask)
    return y, jnp.sum(s1, axis=(0, 2)), jnp.sum(s2, axis=(0, 2))


def conv4x4s2_bias_act(a, w_taps, bias, geom, *, slope=0.2):
    """4x4/stride-2/pad-1 conv + bias + LeakyReLU (layer 0), fused epilogue."""
    n, c4, nt, tf, tb = geom["n"], geom["c4"], geom["nt"], geom["tf"], geom["tb"]
    oc = w_taps.shape[1]
    mp_out = geom["mp_out"]
    kb = tf // tb
    cost = pl.CostEstimate(
        flops=int(2 * n * nt * 4 * oc * c4 * tf + 3 * n * nt * oc * tf),
        transcendentals=0,
        bytes_accessed=int(n * nt * (tf + tb) * c4 * 2 + 4 * oc * c4 * 2
                           + n * mp_out * oc * 2 + oc * 4))
    return pl.pallas_call(
        functools.partial(_conv_s2d_bias_act_kernel,
                          shifts=geom["shifts"], tf=tf, slope=slope),
        out_shape=jax.ShapeDtypeStruct((n, oc, mp_out), jnp.bfloat16),
        grid=(n, nt),
        in_specs=[
            pl.BlockSpec((None, c4, tf), lambda b, i: (b, 0, i)),
            pl.BlockSpec((None, c4, tb), lambda b, i: (b, 0, (i + 1) * kb)),
            pl.BlockSpec((4, oc, c4), lambda b, i: (0, 0, 0)),
            pl.BlockSpec((oc, 1), lambda b, i: (0, 0)),
        ],
        out_specs=pl.BlockSpec((None, oc, tf), lambda b, i: (b, 0, i)),
        scratch_shapes=[pltpu.VMEM((c4, tf + tb), jnp.bfloat16)],
        compiler_params=pltpu.CompilerParams(
            dimension_semantics=("parallel", "parallel"),
            vmem_limit_bytes=_vmem_limit_bytes()),
        cost_estimate=cost,
    )(a, a, w_taps, bias.reshape(oc, 1).astype(jnp.float32))


def dense_bias(x2d, w2d, bias, *, out_dtype=jnp.float32):
    """Final 4x4/stride-1/pad-0 conv on a 4x4 input == one GEMM + bias."""
    m, k = x2d.shape
    oc = w2d.shape[1]
    return pl.pallas_call(
        _gemm_bias_kernel,
        out_shape=jax.ShapeDtypeStruct((m, oc), out_dtype),
        grid=(1,),
        in_specs=[
            pl.BlockSpec((m, k), lambda i: (0, 0)),
            pl.BlockSpec((k, oc), lambda i: (0, 0)),
            pl.BlockSpec((1, oc), lambda i: (0, 0)),
        ],
        out_specs=pl.BlockSpec((m, oc), lambda i: (0, 0)),
        compiler_params=pltpu.CompilerParams(
            dimension_semantics=("arbitrary",),
            vmem_limit_bytes=_vmem_limit_bytes()),
        cost_estimate=pl.CostEstimate(flops=int(2 * m * k * oc), transcendentals=0,
                                      bytes_accessed=int(2 * (m * k + k * oc) + 4 * m * oc)),
    )(x2d, w2d, bias.reshape(1, oc).astype(jnp.float32))


# --------------------------------- module ----------------------------------- #

def cnn_module_forward(x, params, *, bn_eps=1e-5, slope=0.2, tf_lane_target=512):
    """Pallas forward equivalent of CNN_Module.forward (use_batch_norm=True).

    x: (N, C, H, W) f32 (PyTorch layout).  Returns (N, o_size) f32 for the
    canonical img_size == 2 ** (h_layers + 3).
    """
    n = x.shape[0]

    # layer 0: Conv2d(i_ch, fm, 4, 2, 1, bias=True) + LeakyReLU(0.2), fused
    p0 = params[0]
    a, _, geom = _space_to_depth_flat(x, tf_lane_target=tf_lane_target)
    y0 = conv4x4s2_bias_act(a, _w_taps(p0["w"]), p0["b"], geom, slope=slope)
    h_act = _unflatten_act(y0, geom, p0["w"].shape[0])          # (N, fm, H/2, W/2) bf16

    # hidden layers: Conv2d(.., 4, 2, 1, bias=False) + BatchNorm2d + LeakyReLU
    for p in params[1:-1]:
        oc = p["w"].shape[0]
        a, mask, geom = _space_to_depth_flat(h_act, tf_lane_target=tf_lane_target)
        y, s1, s2 = conv4x4s2_bn(a, _w_taps(p["w"]), mask, geom)
        cnt = n * geom["oh"] * geom["ow"]                       # N*OH*OW valid rows
        mean = s1 / cnt
        var = jnp.maximum(s2 / cnt - mean * mean, 0.0)          # biased var, clamped
        scale = p["gamma"] * lax.rsqrt(var + bn_eps)
        shift = p["beta"] - mean * scale
        y_img = _unflatten_act(y, geom, oc)
        # BN affine + LeakyReLU: elementwise, fused by XLA into the next
        # layer's pad/space-to-depth repack (no standalone activation pass).
        h = (y_img.astype(jnp.float32) * scale[None, :, None, None]
             + shift[None, :, None, None])
        h_act = jnp.where(h >= 0, h, slope * h).astype(jnp.bfloat16)

    # final layer: Conv2d(.., o_size, 4, 1, 0, bias=True), no activation
    pL = params[-1]
    oc = pL["w"].shape[0]
    nL, cL, hL, wL = h_act.shape
    # canonical configuration: final conv input is 4x4 -> a single 1x1 output,
    # i.e. one flattened GEMM per image.
    assert hL == 4 and wL == 4, "final layer implemented for img_size == 2**(h_layers+3)"
    # TODO(synk): general (S > 4) final 4x4/stride-1 conv via the same
    # flat-shift tap-GEMM kernel (16 taps, no space-to-depth).
    x2d = h_act.reshape(nL, cL * 16)
    w2d = jnp.transpose(pL["w"].reshape(oc, cL * 16)).astype(jnp.bfloat16)
    out = dense_bias(x2d, w2d, pL["b"], out_dtype=jnp.float32)
    return out.reshape(n, -1)


# ------------------------ deterministic parameter init ---------------------- #

def init_params(key, i_channels, o_size, feature_maps, h_layers):
    params = []
    keys = iter(jax.random.split(key, 4 * (h_layers + 2)))
    params.append({
        "w": 0.02 * jax.random.normal(next(keys), (feature_maps, i_channels, 4, 4), jnp.float32),
        "b": 0.01 * jax.random.normal(next(keys), (feature_maps,), jnp.float32),
    })
    for hh in range(h_layers):
        ic = (2 ** hh) * feature_maps
        oc = (2 ** (hh + 1)) * feature_maps
        params.append({
            "w": 0.02 * jax.random.normal(next(keys), (oc, ic, 4, 4), jnp.float32),
            "gamma": 1.0 + 0.02 * jax.random.normal(next(keys), (oc,), jnp.float32),
            "beta": jnp.zeros((oc,), jnp.float32),
        })
    ic = (2 ** h_layers) * feature_maps
    params.append({
        "w": 0.02 * jax.random.normal(next(keys), (o_size, ic, 4, 4), jnp.float32),
        "b": 0.01 * jax.random.normal(next(keys), (o_size,), jnp.float32),
    })
    return params


# --------------------------- pure-JAX references ----------------------------- #

def _ref_forward_f32(x, params, *, bn_eps=1e-5):
    """Module semantics in pure f32 (NCHW)."""
    def conv(x, w, b, stride, pad):
        y = lax.conv_general_dilated(
            x, w, window_strides=(stride, stride),
            padding=((pad, pad), (pad, pad)),
            dimension_numbers=("NCHW", "OIHW", "NCHW"))
        if b is not None:
            y = y + b[None, :, None, None]
        return y

    lrelu = lambda v: jnp.where(v >= 0, v, 0.2 * v)
    p = params[0]
    x = lrelu(conv(x, p["w"], p["b"], 2, 1))
    for p in params[1:-1]:
        y = conv(x, p["w"], None, 2, 1)
        mean = jnp.mean(y, axis=(0, 2, 3), keepdims=True)
        var = jnp.mean(jnp.square(y), axis=(0, 2, 3), keepdims=True) - jnp.square(mean)
        y = (y - mean) / jnp.sqrt(var + bn_eps)
        x = lrelu(y * p["gamma"][None, :, None, None] + p["beta"][None, :, None, None])
    p = params[-1]
    y = conv(x, p["w"], p["b"], 1, 0)
    return y.reshape(x.shape[0], -1)


def _ref_forward_mixed(x, params, *, bn_eps=1e-5, slope=0.2):
    """Reference with the kernel's precision policy: bf16 conv operands, f32
    accumulation / BN statistics, bf16 pre-BN y and inter-layer activations."""
    def conv(xb, w, stride, pad):
        return lax.conv_general_dilated(
            xb.astype(jnp.bfloat16), w.astype(jnp.bfloat16),
            window_strides=(stride, stride), padding=((pad, pad), (pad, pad)),
            dimension_numbers=("NCHW", "OIHW", "NCHW"),
            preferred_element_type=jnp.float32)

    lrelu = lambda v: jnp.where(v >= 0, v, slope * v)
    p = params[0]
    h = lrelu(conv(x, p["w"], 2, 1) + p["b"][None, :, None, None]).astype(jnp.bfloat16)
    for p in params[1:-1]:
        y = conv(h, p["w"], 2, 1)
        mean = jnp.mean(y, axis=(0, 2, 3))
        var = jnp.maximum(jnp.mean(y * y, axis=(0, 2, 3)) - mean * mean, 0.0)
        scale = p["gamma"] * lax.rsqrt(var + bn_eps)
        shift = p["beta"] - mean * scale
        yb = y.astype(jnp.bfloat16).astype(jnp.float32)   # kernel stores pre-BN y in bf16
        h = lrelu(yb * scale[None, :, None, None]
                  + shift[None, :, None, None]).astype(jnp.bfloat16)
    p = params[-1]
    y = conv(h, p["w"], 1, 0) + p["b"][None, :, None, None]
    return y.reshape(x.shape[0], -1)


# ----------------------------------- main ----------------------------------- #

if __name__ == "__main__":
    # small configuration: i_channels=3, o_size=8, feature_maps=8, h_layers=2
    # img_size = 2 ** (h_layers + 3) = 32  ->  output shape (N, o_size)
    i_channels, o_size, feature_maps, h_layers = 3, 8, 8, 2
    img_size = 2 ** (h_layers + 3)
    batch = 2

    key = jax.random.PRNGKey(0)
    k_x, k_p = jax.random.split(key)
    x = jax.random.normal(k_x, (batch, i_channels, img_size, img_size), jnp.float32)
    params = init_params(k_p, i_channels, o_size, feature_maps, h_layers)

    fwd = jax.jit(cnn_module_forward)
    out = jax.block_until_ready(fwd(x, params))
    assert out.shape == (batch, o_size), out.shape

    # tight check vs. a reference with identical precision policy -> validates
    # the space-to-depth / flat-shift conv, BN and activation wiring.
    ref_mx = jax.block_until_ready(_ref_forward_mixed(x, params))
    err_mx = float(jnp.max(jnp.abs(out - ref_mx)))
    assert jnp.allclose(out, ref_mx, atol=1e-2, rtol=1e-2), err_mx

    # loose check vs. the pure-f32 module semantics (difference = the chosen
    # bf16 operand / activation precision policy).
    ref32 = jax.block_until_ready(_ref_forward_f32(x, params))
    err32 = float(jnp.max(jnp.abs(out - ref32)))
    assert jnp.allclose(out, ref32, atol=5e-2, rtol=5e-2), err32

    print("KERNEL_OK")
</pallas_src>

<mosaic_0001>
module attributes {stable_mosaic.version = 11 : i64} {
  func.func @_conv_s2d_bias_act_kernel(%arg0: i32, %arg1: i32, %arg2: memref<1x12x384xbf16, #tpu.memory_space<vmem>>, %arg3: memref<1x12x128xbf16, #tpu.memory_space<vmem>>, %arg4: memref<4x8x12xbf16, #tpu.memory_space<vmem>>, %arg5: memref<8x1xf32, #tpu.memory_space<vmem>>, %arg6: memref<1x8x384xbf16, #tpu.memory_space<vmem>>, %arg7: memref<12x512xbf16, #tpu.memory_space<vmem>>) attributes {dimension_semantics = [#tpu.dimension_semantics<parallel>, #tpu.dimension_semantics<parallel>], iteration_bounds = array<i64: 2, 1>, scalar_prefetch = 0 : i64, scratch_operands = 1 : i64, tpu.core_type = #tpu.core_type<tc>, window_params = [{transform_indices = @transform_0, window_bounds = array<i64: 1, 12, 384>}, {transform_indices = @transform_1, window_bounds = array<i64: 1, 12, 128>}, {pipeline_mode = #tpu.pipeline_mode<synchronous>, transform_indices = @transform_2, window_bounds = array<i64: 4, 8, 12>}, {pipeline_mode = #tpu.pipeline_mode<synchronous>, transform_indices = @transform_3, window_bounds = array<i64: 8, 1>}, {transform_indices = @transform_4, window_bounds = array<i64: 1, 8, 384>}]} {
    %c0 = arith.constant 0 : index
    %c0_0 = arith.constant 0 : index
    %c0_1 = arith.constant 0 : index
    %0 = vector.load %arg2[%c0, %c0_0, %c0_1] : memref<1x12x384xbf16, #tpu.memory_space<vmem>>, vector<1x12x384xbf16>
    %1 = vector.shape_cast %0 : vector<1x12x384xbf16> to vector<12x384xbf16>
    %c0_2 = arith.constant 0 : index
    %c0_3 = arith.constant 0 : index
    %2 = vector.load %arg7[%c0_2, %c0_3] : memref<12x512xbf16, #tpu.memory_space<vmem>>, vector<12x384xbf16>
    tpu.vector_store %arg7[%c0_2, %c0_3], %1 {strides = array<i32>} : memref<12x512xbf16, #tpu.memory_space<vmem>>, vector<12x384xbf16>,
    %c0_4 = arith.constant 0 : index
    %c0_5 = arith.constant 0 : index
    %c0_6 = arith.constant 0 : index
    %3 = vector.load %arg3[%c0_4, %c0_5, %c0_6] : memref<1x12x128xbf16, #tpu.memory_space<vmem>>, vector<1x12x128xbf16>
    %4 = vector.shape_cast %3 : vector<1x12x128xbf16> to vector<12x128xbf16>
    %c0_7 = arith.constant 0 : index
    %c384 = arith.constant 384 : index
    %5 = vector.load %arg7[%c0_7, %c384] : memref<12x512xbf16, #tpu.memory_space<vmem>>, vector<12x128xbf16>
    tpu.vector_store %arg7[%c0_7, %c384], %4 {strides = array<i32>} : memref<12x512xbf16, #tpu.memory_space<vmem>>, vector<12x128xbf16>,
    %c0_8 = arith.constant 0 : index
    %c0_9 = arith.constant 0 : index
    %c0_10 = arith.constant 0 : index
    %6 = vector.load %arg4[%c0_8, %c0_9, %c0_10] : memref<4x8x12xbf16, #tpu.memory_space<vmem>>, vector<1x8x12xbf16>
    %7 = vector.shape_cast %6 : vector<1x8x12xbf16> to vector<8x12xbf16>
    %c0_11 = arith.constant 0 : index
    %c0_12 = arith.constant 0 : index
    %8 = vector.load %arg7[%c0_11, %c0_12] : memref<12x512xbf16, #tpu.memory_space<vmem>>, vector<12x384xbf16>
    %cst = arith.constant dense<0.000000e+00> : vector<8x384xf32>
    %9 = tpu.matmul %7, %8, %cst {dimension_numbers = #tpu.dot_dimension_numbers<[1], [0], [0], [1], [0, 0, 1, 1], [], []>} : vector<8x12xbf16>, vector<12x384xbf16>, vector<8x384xf32> -> vector<8x384xf32>
    %c1 = arith.constant 1 : index
    %c0_13 = arith.constant 0 : index
    %c0_14 = arith.constant 0 : index
    %10 = vector.load %arg4[%c1, %c0_13, %c0_14] : memref<4x8x12xbf16, #tpu.memory_space<vmem>>, vector<1x8x12xbf16>
    %11 = vector.shape_cast %10 : vector<1x8x12xbf16> to vector<8x12xbf16>
    %c0_15 = arith.constant 0 : index
    %c1_16 = arith.constant 1 : index
    %12 = vector.load %arg7[%c0_15, %c1_16] : memref<12x512xbf16, #tpu.memory_space<vmem>>, vector<12x384xbf16>
    %cst_17 = arith.constant dense<0.000000e+00> : vector<8x384xf32>
    %13 = tpu.matmul %11, %12, %cst_17 {dimension_numbers = #tpu.dot_dimension_numbers<[1], [0], [0], [1], [0, 0, 1, 1], [], []>} : vector<8x12xbf16>, vector<12x384xbf16>, vector<8x384xf32> -> vector<8x384xf32>
    %14 = arith.addf %9, %13 : vector<8x384xf32>
    %c2 = arith.constant 2 : index
    %c0_18 = arith.constant 0 : index
    %c0_19 = arith.constant 0 : index
    %15 = vector.load %arg4[%c2, %c0_18, %c0_19] : memref<4x8x12xbf16, #tpu.memory_space<vmem>>, vector<1x8x12xbf16>
    %16 = vector.shape_cast %15 : vector<1x8x12xbf16> to vector<8x12xbf16>
    %c0_20 = arith.constant 0 : index
    %c17 = arith.constant 17 : index
    %17 = vector.load %arg7[%c0_20, %c17] : memref<12x512xbf16, #tpu.memory_space<vmem>>, vector<12x384xbf16>
    %cst_21 = arith.constant dense<0.000000e+00> : vector<8x384xf32>
    %18 = tpu.matmul %16, %17, %cst_21 {dimension_numbers = #tpu.dot_dimension_numbers<[1], [0], [0], [1], [0, 0, 1, 1], [], []>} : vector<8x12xbf16>, vector<12x384xbf16>, vector<8x384xf32> -> vector<8x384xf32>
    %19 = arith.addf %14, %18 : vector<8x384xf32>
    %c3 = arith.constant 3 : index
    %c0_22 = arith.constant 0 : index
    %c0_23 = arith.constant 0 : index
    %20 = vector.load %arg4[%c3, %c0_22, %c0_23] : memref<4x8x12xbf16, #tpu.memory_space<vmem>>, vector<1x8x12xbf16>
    %21 = vector.shape_cast %20 : vector<1x8x12xbf16> to vector<8x12xbf16>
    %c0_24 = arith.constant 0 : index
    %c18 = arith.constant 18 : index
    %22 = vector.load %arg7[%c0_24, %c18] : memref<12x512xbf16, #tpu.memory_space<vmem>>, vector<12x384xbf16>
    %cst_25 = arith.constant dense<0.000000e+00> : vector<8x384xf32>
    %23 = tpu.matmul %21, %22, %cst_25 {dimension_numbers = #tpu.dot_dimension_numbers<[1], [0], [0], [1], [0, 0, 1, 1], [], []>} : vector<8x12xbf16>, vector<12x384xbf16>, vector<8x384xf32> -> vector<8x384xf32>
    %24 = arith.addf %19, %23 : vector<8x384xf32>
    %c0_26 = arith.constant 0 : index
    %c0_27 = arith.constant 0 : index
    %25 = vector.load %arg5[%c0_26, %c0_27] : memref<8x1xf32, #tpu.memory_space<vmem>>, vector<8x1xf32>
    %26 = vector.broadcast %25 : vector<8x1xf32> to vector<8x384xf32>
    %27 = arith.addf %24, %26 : vector<8x384xf32>
    %cst_28 = arith.constant 0.000000e+00 : f32
    %28 = vector.broadcast %cst_28 : f32 to vector<8x384xf32>
    %29 = arith.cmpf oge, %27, %28 : vector<8x384xf32>
    %cst_29 = arith.constant 2.000000e-01 : f32
    %30 = vector.broadcast %cst_29 : f32 to vector<8x384xf32>
    %31 = arith.mulf %30, %27 : vector<8x384xf32>
    %32 = arith.select %29, %27, %31 : vector<8x384xi1>, vector<8x384xf32>
    %33 = arith.truncf %32 : vector<8x384xf32> to vector<8x384xbf16>
    %c0_30 = arith.constant 0 : index
    %c0_31 = arith.constant 0 : index
    %c0_32 = arith.constant 0 : index
    %34 = vector.load %arg6[%c0_30, %c0_31, %c0_32] : memref<1x8x384xbf16, #tpu.memory_space<vmem>>, vector<1x8x384xbf16>
    %35 = vector.shape_cast %34 : vector<1x8x384xbf16> to vector<8x384xbf16>
    %36 = vector.shape_cast %33 : vector<8x384xbf16> to vector<1x8x384xbf16>
    tpu.vector_store %arg6[%c0_30, %c0_31, %c0_32], %36 {strides = array<i32>} : memref<1x8x384xbf16, #tpu.memory_space<vmem>>, vector<1x8x384xbf16>,
    return
  }
  func.func @transform_0(%arg0: i32, %arg1: i32) -> (i32, i32, i32) {
    %c0_i32 = arith.constant 0 : i32
    %c0_i32_0 = arith.constant 0 : i32
    return %arg0, %c0_i32, %arg1 : i32, i32, i32
  }
  func.func @transform_1(%arg0: i32, %arg1: i32) -> (i32, i32, i32) {
    %c1_i32 = arith.constant 1 : i32
    %0 = arith.addi %arg1, %c1_i32 : i32
    %c3_i32 = arith.constant 3 : i32
    %1 = arith.muli %0, %c3_i32 : i32
    %c0_i32 = arith.constant 0 : i32
    %c0_i32_0 = arith.constant 0 : i32
    return %arg0, %c0_i32, %1 : i32, i32, i32
  }
  func.func @transform_2(%arg0: i32, %arg1: i32) -> (i32, i32, i32) {
    %c0_i32 = arith.constant 0 : i32
    %c0_i32_0 = arith.constant 0 : i32
    %c0_i32_1 = arith.constant 0 : i32
    %c0_i32_2 = arith.constant 0 : i32
    return %c0_i32, %c0_i32_0, %c0_i32_1 : i32, i32, i32
  }
  func.func @transform_3(%arg0: i32, %arg1: i32) -> (i32, i32) {
    %c0_i32 = arith.constant 0 : i32
    %c0_i32_0 = arith.constant 0 : i32
    %c0_i32_1 = arith.constant 0 : i32
    return %c0_i32, %c0_i32_0 : i32, i32
  }
  func.func @transform_4(%arg0: i32, %arg1: i32) -> (i32, i32, i32) {
    %c0_i32 = arith.constant 0 : i32
    %c0_i32_0 = arith.constant 0 : i32
    return %arg0, %c0_i32, %arg1 : i32, i32, i32
  }
}

module attributes {stable_mosaic.version = 11 : i64} {
  func.func @_conv_s2d_bn_kernel(%arg0: i32, %arg1: i32, %arg2: memref<1x32x128xbf16, #tpu.memory_space<vmem>>, %arg3: memref<1x32x128xbf16, #tpu.memory_space<vmem>>, %arg4: memref<4x16x32xbf16, #tpu.memory_space<vmem>>, %arg5: memref<1x128xf32, #tpu.memory_space<vmem>>, %arg6: memref<1x16x128xbf16, #tpu.memory_space<vmem>>, %arg7: memref<1x16x1xf32, #tpu.memory_space<vmem>>, %arg8: memref<1x16x1xf32, #tpu.memory_space<vmem>>, %arg9: memref<32x256xbf16, #tpu.memory_space<vmem>>) attributes {dimension_semantics = [#tpu.dimension_semantics<parallel>, #tpu.dimension_semantics<parallel>], iteration_bounds = array<i64: 2, 1>, scalar_prefetch = 0 : i64, scratch_operands = 1 : i64, tpu.core_type = #tpu.core_type<tc>, window_params = [{transform_indices = @transform_0, window_bounds = array<i64: 1, 32, 128>}, {transform_indices = @transform_1, window_bounds = array<i64: 1, 32, 128>}, {pipeline_mode = #tpu.pipeline_mode<synchronous>, transform_indices = @transform_2, window_bounds = array<i64: 4, 16, 32>}, {transform_indices = @transform_3, window_bounds = array<i64: 1, 128>}, {transform_indices = @transform_4, window_bounds = array<i64: 1, 16, 128>}, {transform_indices = @transform_5, window_bounds = array<i64: 1, 16, 1>}, {transform_indices = @transform_6, window_bounds = array<i64: 1, 16, 1>}]} {
    %c0 = arith.constant 0 : index
    %c0_0 = arith.constant 0 : index
    %c0_1 = arith.constant 0 : index
    %0 = vector.load %arg2[%c0, %c0_0, %c0_1] : memref<1x32x128xbf16, #tpu.memory_space<vmem>>, vector<1x32x128xbf16>
    %1 = vector.shape_cast %0 : vector<1x32x128xbf16> to vector<32x128xbf16>
    %c0_2 = arith.constant 0 : index
    %c0_3 = arith.constant 0 : index
    %2 = vector.load %arg9[%c0_2, %c0_3] : memref<32x256xbf16, #tpu.memory_space<vmem>>, vector<32x128xbf16>
    tpu.vector_store %arg9[%c0_2, %c0_3], %1 {strides = array<i32>} : memref<32x256xbf16, #tpu.memory_space<vmem>>, vector<32x128xbf16>,
    %c0_4 = arith.constant 0 : index
    %c0_5 = arith.constant 0 : index
    %c0_6 = arith.constant 0 : index
    %3 = vector.load %arg3[%c0_4, %c0_5, %c0_6] : memref<1x32x128xbf16, #tpu.memory_space<vmem>>, vector<1x32x128xbf16>
    %4 = vector.shape_cast %3 : vector<1x32x128xbf16> to vector<32x128xbf16>
    %c0_7 = arith.constant 0 : index
    %c128 = arith.constant 128 : index
    %5 = vector.load %arg9[%c0_7, %c128] : memref<32x256xbf16, #tpu.memory_space<vmem>>, vector<32x128xbf16>
    tpu.vector_store %arg9[%c0_7, %c128], %4 {strides = array<i32>} : memref<32x256xbf16, #tpu.memory_space<vmem>>, vector<32x128xbf16>,
    %c0_8 = arith.constant 0 : index
    %c0_9 = arith.constant 0 : index
    %c0_10 = arith.constant 0 : index
    %6 = vector.load %arg4[%c0_8, %c0_9, %c0_10] : memref<4x16x32xbf16, #tpu.memory_space<vmem>>, vector<1x16x32xbf16>
    %7 = vector.shape_cast %6 : vector<1x16x32xbf16> to vector<16x32xbf16>
    %c0_11 = arith.constant 0 : index
    %c0_12 = arith.constant 0 : index
    %8 = vector.load %arg9[%c0_11, %c0_12] : memref<32x256xbf16, #tpu.memory_space<vmem>>, vector<32x128xbf16>
    %cst = arith.constant dense<0.000000e+00> : vector<16x128xf32>
    %9 = tpu.matmul %7, %8, %cst {dimension_numbers = #tpu.dot_dimension_numbers<[1], [0], [0], [1], [0, 0, 1, 1], [], []>} : vector<16x32xbf16>, vector<32x128xbf16>, vector<16x128xf32> -> vector<16x128xf32>
    %c1 = arith.constant 1 : index
    %c0_13 = arith.constant 0 : index
    %c0_14 = arith.constant 0 : index
    %10 = vector.load %arg4[%c1, %c0_13, %c0_14] : memref<4x16x32xbf16, #tpu.memory_space<vmem>>, vector<1x16x32xbf16>
    %11 = vector.shape_cast %10 : vector<1x16x32xbf16> to vector<16x32xbf16>
    %c0_15 = arith.constant 0 : index
    %c1_16 = arith.constant 1 : index
    %12 = vector.load %arg9[%c0_15, %c1_16] : memref<32x256xbf16, #tpu.memory_space<vmem>>, vector<32x128xbf16>
    %cst_17 = arith.constant dense<0.000000e+00> : vector<16x128xf32>
    %13 = tpu.matmul %11, %12, %cst_17 {dimension_numbers = #tpu.dot_dimension_numbers<[1], [0], [0], [1], [0, 0, 1, 1], [], []>} : vector<16x32xbf16>, vector<32x128xbf16>, vector<16x128xf32> -> vector<16x128xf32>
    %14 = arith.addf %9, %13 : vector<16x128xf32>
    %c2 = arith.constant 2 : index
    %c0_18 = arith.constant 0 : index
    %c0_19 = arith.constant 0 : index
    %15 = vector.load %arg4[%c2, %c0_18, %c0_19] : memref<4x16x32xbf16, #tpu.memory_space<vmem>>, vector<1x16x32xbf16>
    %16 = vector.shape_cast %15 : vector<1x16x32xbf16> to vector<16x32xbf16>
    %c0_20 = arith.constant 0 : index
    %c9 = arith.constant 9 : index
    %17 = vector.load %arg9[%c0_20, %c9] : memref<32x256xbf16, #tpu.memory_space<vmem>>, vector<32x128xbf16>
    %cst_21 = arith.constant dense<0.000000e+00> : vector<16x128xf32>
    %18 = tpu.matmul %16, %17, %cst_21 {dimension_numbers = #tpu.dot_dimension_numbers<[1], [0], [0], [1], [0, 0, 1, 1], [], []>} : vector<16x32xbf16>, vector<32x128xbf16>, vector<16x128xf32> -> vector<16x128xf32>
    %19 = arith.addf %14, %18 : vector<16x128xf32>
    %c3 = arith.constant 3 : index
    %c0_22 = arith.constant 0 : index
    %c0_23 = arith.constant 0 : index
    %20 = vector.load %arg4[%c3, %c0_22, %c0_23] : memref<4x16x32xbf16, #tpu.memory_space<vmem>>, vector<1x16x32xbf16>
    %21 = vector.shape_cast %20 : vector<1x16x32xbf16> to vector<16x32xbf16>
    %c0_24 = arith.constant 0 : index
    %c10 = arith.constant 10 : index
    %22 = vector.load %arg9[%c0_24, %c10] : memref<32x256xbf16, #tpu.memory_space<vmem>>, vector<32x128xbf16>
    %cst_25 = arith.constant dense<0.000000e+00> : vector<16x128xf32>
    %23 = tpu.matmul %21, %22, %cst_25 {dimension_numbers = #tpu.dot_dimension_numbers<[1], [0], [0], [1], [0, 0, 1, 1], [], []>} : vector<16x32xbf16>, vector<32x128xbf16>, vector<16x128xf32> -> vector<16x128xf32>
    %24 = arith.addf %19, %23 : vector<16x128xf32>
    %25 = arith.truncf %24 : vector<16x128xf32> to vector<16x128xbf16>
    %c0_26 = arith.constant 0 : index
    %c0_27 = arith.constant 0 : index
    %c0_28 = arith.constant 0 : index
    %26 = vector.load %arg6[%c0_26, %c0_27, %c0_28] : memref<1x16x128xbf16, #tpu.memory_space<vmem>>, vector<1x16x128xbf16>
    %27 = vector.shape_cast %26 : vector<1x16x128xbf16> to vector<16x128xbf16>
    %28 = vector.shape_cast %25 : vector<16x128xbf16> to vector<1x16x128xbf16>
    tpu.vector_store %arg6[%c0_26, %c0_27, %c0_28], %28 {strides = array<i32>} : memref<1x16x128xbf16, #tpu.memory_space<vmem>>, vector<1x16x128xbf16>,
    %c0_29 = arith.constant 0 : index
    %c0_30 = arith.constant 0 : index
    %29 = vector.load %arg5[%c0_29, %c0_30] : memref<1x128xf32, #tpu.memory_space<vmem>>, vector<1x128xf32>
    %30 = vector.broadcast %29 : vector<1x128xf32> to vector<16x128xf32>
    %31 = arith.mulf %24, %30 : vector<16x128xf32>
    %cst_31 = arith.constant dense<0.000000e+00> : vector<16xf32>
    %32 = vector.multi_reduction <add>, %31, %cst_31 [1] : vector<16x128xf32> to vector<16xf32>
    %33 = vector.shape_cast %32 : vector<16xf32> to vector<16x1xf32>
    %c0_32 = arith.constant 0 : index
    %c0_33 = arith.constant 0 : index
    %c0_34 = arith.constant 0 : index
    %34 = vector.load %arg7[%c0_32, %c0_33, %c0_34] : memref<1x16x1xf32, #tpu.memory_space<vmem>>, vector<1x16x1xf32>
    %35 = vector.shape_cast %34 : vector<1x16x1xf32> to vector<16x1xf32>
    %36 = vector.shape_cast %33 : vector<16x1xf32> to vector<1x16x1xf32>
    tpu.vector_store %arg7[%c0_32, %c0_33, %c0_34], %36 {strides = array<i32>} : memref<1x16x1xf32, #tpu.memory_space<vmem>>, vector<1x16x1xf32>,
    %37 = arith.mulf %31, %24 : vector<16x128xf32>
    %cst_35 = arith.constant dense<0.000000e+00> : vector<16xf32>
    %38 = vector.multi_reduction <add>, %37, %cst_35 [1] : vector<16x128xf32> to vector<16xf32>
    %39 = vector.shape_cast %38 : vector<16xf32> to vector<16x1xf32>
    %c0_36 = arith.constant 0 : index
    %c0_37 = arith.constant 0 : index
    %c0_38 = arith.constant 0 : index
    %40 = vector.load %arg8[%c0_36, %c0_37, %c0_38] : memref<1x16x1xf32, #tpu.memory_space<vmem>>, vector<1x16x1xf32>
    %41 = vector.shape_cast %40 : vector<1x16x1xf32> to vector<16x1xf32>
    %42 = vector.shape_cast %39 : vector<16x1xf32> to vector<1x16x1xf32>
    tpu.vector_store %arg8[%c0_36, %c0_37, %c0_38], %42 {strides = array<i32>} : memref<1x16x1xf32, #tpu.memory_space<vmem>>, vector<1x16x1xf32>,
    return
  }
  func.func @transform_0(%arg0: i32, %arg1: i32) -> (i32, i32, i32) {
    %c0_i32 = arith.constant 0 : i32
    %c0_i32_0 = arith.constant 0 : i32
    return %arg0, %c0_i32, %arg1 : i32, i32, i32
  }
  func.func @transform_1(%arg0: i32, %arg1: i32) -> (i32, i32, i32) {
    %c1_i32 = arith.constant 1 : i32
    %0 = arith.addi %arg1, %c1_i32 : i32
    %c1_i32_0 = arith.constant 1 : i32
    %1 = arith.muli %0, %c1_i32_0 : i32
    %c0_i32 = arith.constant 0 : i32
    %c0_i32_1 = arith.constant 0 : i32
    return %arg0, %c0_i32, %1 : i32, i32, i32
  }
  func.func @transform_2(%arg0: i32, %arg1: i32) -> (i32, i32, i32) {
    %c0_i32 = arith.constant 0 : i32
    %c0_i32_0 = arith.constant 0 : i32
    %c0_i32_1 = arith.constant 0 : i32
    %c0_i32_2 = arith.constant 0 : i32
    return %c0_i32, %c0_i32_0, %c0_i32_1 : i32, i32, i32
  }
  func.func @transform_3(%arg0: i32, %arg1: i32) -> (i32, i32) {
    %c0_i32 = arith.constant 0 : i32
    %c0_i32_0 = arith.constant 0 : i32
    return %c0_i32, %arg1 : i32, i32
  }
  func.func @transform_4(%arg0: i32, %arg1: i32) -> (i32, i32, i32) {
    %c0_i32 = arith.constant 0 : i32
    %c0_i32_0 = arith.constant 0 : i32
    return %arg0, %c0_i32, %arg1 : i32, i32, i32
  }
  func.func @transform_5(%arg0: i32, %arg1: i32) -> (i32, i32, i32) {
    %c1_i32 = arith.constant 1 : i32
    %0 = arith.muli %arg0, %c1_i32 : i32
    %1 = arith.addi %0, %arg1 : i32
    %c0_i32 = arith.constant 0 : i32
    %c0_i32_0 = arith.constant 0 : i32
    %c0_i32_1 = arith.constant 0 : i32
    return %1, %c0_i32, %c0_i32_0 : i32, i32, i32
  }
  func.func @transform_6(%arg0: i32, %arg1: i32) -> (i32, i32, i32) {
    %c1_i32 = arith.constant 1 : i32
    %0 = arith.muli %arg0, %c1_i32 : i32
    %1 = arith.addi %0, %arg1 : i32
    %c0_i32 = arith.constant 0 : i32
    %c0_i32_0 = arith.constant 0 : i32
    %c0_i32_1 = arith.constant 0 : i32
    return %1, %c0_i32, %c0_i32_0 : i32, i32, i32
  }
}

module attributes {stable_mosaic.version = 11 : i64} {
  func.func @_conv_s2d_bn_kernel(%arg0: i32, %arg1: i32, %arg2: memref<1x64x128xbf16, #tpu.memory_space<vmem>>, %arg3: memref<1x64x128xbf16, #tpu.memory_space<vmem>>, %arg4: memref<4x32x64xbf16, #tpu.memory_space<vmem>>, %arg5: memref<1x128xf32, #tpu.memory_space<vmem>>, %arg6: memref<1x32x128xbf16, #tpu.memory_space<vmem>>, %arg7: memref<1x32x1xf32, #tpu.memory_space<vmem>>, %arg8: memref<1x32x1xf32, #tpu.memory_space<vmem>>, %arg9: memref<64x256xbf16, #tpu.memory_space<vmem>>) attributes {dimension_semantics = [#tpu.dimension_semantics<parallel>, #tpu.dimension_semantics<parallel>], iteration_bounds = array<i64: 2, 1>, scalar_prefetch = 0 : i64, scratch_operands = 1 : i64, tpu.core_type = #tpu.core_type<tc>, window_params = [{transform_indices = @transform_0, window_bounds = array<i64: 1, 64, 128>}, {transform_indices = @transform_1, window_bounds = array<i64: 1, 64, 128>}, {pipeline_mode = #tpu.pipeline_mode<synchronous>, transform_indices = @transform_2, window_bounds = array<i64: 4, 32, 64>}, {transform_indices = @transform_3, window_bounds = array<i64: 1, 128>}, {transform_indices = @transform_4, window_bounds = array<i64: 1, 32, 128>}, {transform_indices = @transform_5, window_bounds = array<i64: 1, 32, 1>}, {transform_indices = @transform_6, window_bounds = array<i64: 1, 32, 1>}]} {
    %c0 = arith.constant 0 : index
    %c0_0 = arith.constant 0 : index
    %c0_1 = arith.constant 0 : index
    %0 = vector.load %arg2[%c0, %c0_0, %c0_1] : memref<1x64x128xbf16, #tpu.memory_space<vmem>>, vector<1x64x128xbf16>
    %1 = vector.shape_cast %0 : vector<1x64x128xbf16> to vector<64x128xbf16>
    %c0_2 = arith.constant 0 : index
    %c0_3 = arith.constant 0 : index
    %2 = vector.load %arg9[%c0_2, %c0_3] : memref<64x256xbf16, #tpu.memory_space<vmem>>, vector<64x128xbf16>
    tpu.vector_store %arg9[%c0_2, %c0_3], %1 {strides = array<i32>} : memref<64x256xbf16, #tpu.memory_space<vmem>>, vector<64x128xbf16>,
    %c0_4 = arith.constant 0 : index
    %c0_5 = arith.constant 0 : index
    %c0_6 = arith.constant 0 : index
    %3 = vector.load %arg3[%c0_4, %c0_5, %c0_6] : memref<1x64x128xbf16, #tpu.memory_space<vmem>>, vector<1x64x128xbf16>
    %4 = vector.shape_cast %3 : vector<1x64x128xbf16> to vector<64x128xbf16>
    %c0_7 = arith.constant 0 : index
    %c128 = arith.constant 128 : index
    %5 = vector.load %arg9[%c0_7, %c128] : memref<64x256xbf16, #tpu.memory_space<vmem>>, vector<64x128xbf16>
    tpu.vector_store %arg9[%c0_7, %c128], %4 {strides = array<i32>} : memref<64x256xbf16, #tpu.memory_space<vmem>>, vector<64x128xbf16>,
    %c0_8 = arith.constant 0 : index
    %c0_9 = arith.constant 0 : index
    %c0_10 = arith.constant 0 : index
    %6 = vector.load %arg4[%c0_8, %c0_9, %c0_10] : memref<4x32x64xbf16, #tpu.memory_space<vmem>>, vector<1x32x64xbf16>
    %7 = vector.shape_cast %6 : vector<1x32x64xbf16> to vector<32x64xbf16>
    %c0_11 = arith.constant 0 : index
    %c0_12 = arith.constant 0 : index
    %8 = vector.load %arg9[%c0_11, %c0_12] : memref<64x256xbf16, #tpu.memory_space<vmem>>, vector<64x128xbf16>
    %cst = arith.constant dense<0.000000e+00> : vector<32x128xf32>
    %9 = tpu.matmul %7, %8, %cst {dimension_numbers = #tpu.dot_dimension_numbers<[1], [0], [0], [1], [0, 0, 1, 1], [], []>} : vector<32x64xbf16>, vector<64x128xbf16>, vector<32x128xf32> -> vector<32x128xf32>
    %c1 = arith.constant 1 : index
    %c0_13 = arith.constant 0 : index
    %c0_14 = arith.constant 0 : index
    %10 = vector.load %arg4[%c1, %c0_13, %c0_14] : memref<4x32x64xbf16, #tpu.memory_space<vmem>>, vector<1x32x64xbf16>
    %11 = vector.shape_cast %10 : vector<1x32x64xbf16> to vector<32x64xbf16>
    %c0_15 = arith.constant 0 : index
    %c1_16 = arith.constant 1 : index
    %12 = vector.load %arg9[%c0_15, %c1_16] : memref<64x256xbf16, #tpu.memory_space<vmem>>, vector<64x128xbf16>
    %cst_17 = arith.constant dense<0.000000e+00> : vector<32x128xf32>
    %13 = tpu.matmul %11, %12, %cst_17 {dimension_numbers = #tpu.dot_dimension_numbers<[1], [0], [0], [1], [0, 0, 1, 1], [], []>} : vector<32x64xbf16>, vector<64x128xbf16>, vector<32x128xf32> -> vector<32x128xf32>
    %14 = arith.addf %9, %13 : vector<32x128xf32>
    %c2 = arith.constant 2 : index
    %c0_18 = arith.constant 0 : index
    %c0_19 = arith.constant 0 : index
    %15 = vector.load %arg4[%c2, %c0_18, %c0_19] : memref<4x32x64xbf16, #tpu.memory_space<vmem>>, vector<1x32x64xbf16>
    %16 = vector.shape_cast %15 : vector<1x32x64xbf16> to vector<32x64xbf16>
    %c0_20 = arith.constant 0 : index
    %c5 = arith.constant 5 : index
    %17 = vector.load %arg9[%c0_20, %c5] : memref<64x256xbf16, #tpu.memory_space<vmem>>, vector<64x128xbf16>
    %cst_21 = arith.constant dense<0.000000e+00> : vector<32x128xf32>
    %18 = tpu.matmul %16, %17, %cst_21 {dimension_numbers = #tpu.dot_dimension_numbers<[1], [0], [0], [1], [0, 0, 1, 1], [], []>} : vector<32x64xbf16>, vector<64x128xbf16>, vector<32x128xf32> -> vector<32x128xf32>
    %19 = arith.addf %14, %18 : vector<32x128xf32>
    %c3 = arith.constant 3 : index
    %c0_22 = arith.constant 0 : index
    %c0_23 = arith.constant 0 : index
    %20 = vector.load %arg4[%c3, %c0_22, %c0_23] : memref<4x32x64xbf16, #tpu.memory_space<vmem>>, vector<1x32x64xbf16>
    %21 = vector.shape_cast %20 : vector<1x32x64xbf16> to vector<32x64xbf16>
    %c0_24 = arith.constant 0 : index
    %c6 = arith.constant 6 : index
    %22 = vector.load %arg9[%c0_24, %c6] : memref<64x256xbf16, #tpu.memory_space<vmem>>, vector<64x128xbf16>
    %cst_25 = arith.constant dense<0.000000e+00> : vector<32x128xf32>
    %23 = tpu.matmul %21, %22, %cst_25 {dimension_numbers = #tpu.dot_dimension_numbers<[1], [0], [0], [1], [0, 0, 1, 1], [], []>} : vector<32x64xbf16>, vector<64x128xbf16>, vector<32x128xf32> -> vector<32x128xf32>
    %24 = arith.addf %19, %23 : vector<32x128xf32>
    %25 = arith.truncf %24 : vector<32x128xf32> to vector<32x128xbf16>
    %c0_26 = arith.constant 0 : index
    %c0_27 = arith.constant 0 : index
    %c0_28 = arith.constant 0 : index
    %26 = vector.load %arg6[%c0_26, %c0_27, %c0_28] : memref<1x32x128xbf16, #tpu.memory_space<vmem>>, vector<1x32x128xbf16>
    %27 = vector.shape_cast %26 : vector<1x32x128xbf16> to vector<32x128xbf16>
    %28 = vector.shape_cast %25 : vector<32x128xbf16> to vector<1x32x128xbf16>
    tpu.vector_store %arg6[%c0_26, %c0_27, %c0_28], %28 {strides = array<i32>} : memref<1x32x128xbf16, #tpu.memory_space<vmem>>, vector<1x32x128xbf16>,
    %c0_29 = arith.constant 0 : index
    %c0_30 = arith.constant 0 : index
    %29 = vector.load %arg5[%c0_29, %c0_30] : memref<1x128xf32, #tpu.memory_space<vmem>>, vector<1x128xf32>
    %30 = vector.broadcast %29 : vector<1x128xf32> to vector<32x128xf32>
    %31 = arith.mulf %24, %30 : vector<32x128xf32>
    %cst_31 = arith.constant dense<0.000000e+00> : vector<32xf32>
    %32 = vector.multi_reduction <add>, %31, %cst_31 [1] : vector<32x128xf32> to vector<32xf32>
    %33 = vector.shape_cast %32 : vector<32xf32> to vector<32x1xf32>
    %c0_32 = arith.constant 0 : index
    %c0_33 = arith.constant 0 : index
    %c0_34 = arith.constant 0 : index
    %34 = vector.load %arg7[%c0_32, %c0_33, %c0_34] : memref<1x32x1xf32, #tpu.memory_space<vmem>>, vector<1x32x1xf32>
    %35 = vector.shape_cast %34 : vector<1x32x1xf32> to vector<32x1xf32>
    %36 = vector.shape_cast %33 : vector<32x1xf32> to vector<1x32x1xf32>
    tpu.vector_store %arg7[%c0_32, %c0_33, %c0_34], %36 {strides = array<i32>} : memref<1x32x1xf32, #tpu.memory_space<vmem>>, vector<1x32x1xf32>,
    %37 = arith.mulf %31, %24 : vector<32x128xf32>
    %cst_35 = arith.constant dense<0.000000e+00> : vector<32xf32>
    %38 = vector.multi_reduction <add>, %37, %cst_35 [1] : vector<32x128xf32> to vector<32xf32>
    %39 = vector.shape_cast %38 : vector<32xf32> to vector<32x1xf32>
    %c0_36 = arith.constant 0 : index
    %c0_37 = arith.constant 0 : index
    %c0_38 = arith.constant 0 : index
    %40 = vector.load %arg8[%c0_36, %c0_37, %c0_38] : memref<1x32x1xf32, #tpu.memory_space<vmem>>, vector<1x32x1xf32>
    %41 = vector.shape_cast %40 : vector<1x32x1xf32> to vector<32x1xf32>
    %42 = vector.shape_cast %39 : vector<32x1xf32> to vector<1x32x1xf32>
    tpu.vector_store %arg8[%c0_36, %c0_37, %c0_38], %42 {strides = array<i32>} : memref<1x32x1xf32, #tpu.memory_space<vmem>>, vector<1x32x1xf32>,
    return
  }
  func.func @transform_0(%arg0: i32, %arg1: i32) -> (i32, i32, i32) {
    %c0_i32 = arith.constant 0 : i32
    %c0_i32_0 = arith.constant 0 : i32
    return %arg0, %c0_i32, %arg1 : i32, i32, i32
  }
  func.func @transform_1(%arg0: i32, %arg1: i32) -> (i32, i32, i32) {
    %c1_i32 = arith.constant 1 : i32
    %0 = arith.addi %arg1, %c1_i32 : i32
    %c1_i32_0 = arith.constant 1 : i32
    %1 = arith.muli %0, %c1_i32_0 : i32
    %c0_i32 = arith.constant 0 : i32
    %c0_i32_1 = arith.constant 0 : i32
    return %arg0, %c0_i32, %1 : i32, i32, i32
  }
  func.func @transform_2(%arg0: i32, %arg1: i32) -> (i32, i32, i32) {
    %c0_i32 = arith.constant 0 : i32
    %c0_i32_0 = arith.constant 0 : i32
    %c0_i32_1 = arith.constant 0 : i32
    %c0_i32_2 = arith.constant 0 : i32
    return %c0_i32, %c0_i32_0, %c0_i32_1 : i32, i32, i32
  }
  func.func @transform_3(%arg0: i32, %arg1: i32) -> (i32, i32) {
    %c0_i32 = arith.constant 0 : i32
    %c0_i32_0 = arith.constant 0 : i32
    return %c0_i32, %arg1 : i32, i32
  }
  func.func @transform_4(%arg0: i32, %arg1: i32) -> (i32, i32, i32) {
    %c0_i32 = arith.constant 0 : i32
    %c0_i32_0 = arith.constant 0 : i32
    return %arg0, %c0_i32, %arg1 : i32, i32, i32
  }
  func.func @transform_5(%arg0: i32, %arg1: i32) -> (i32, i32, i32) {
    %c1_i32 = arith.constant 1 : i32
    %0 = arith.muli %arg0, %c1_i32 : i32
    %1 = arith.addi %0, %arg1 : i32
    %c0_i32 = arith.constant 0 : i32
    %c0_i32_0 = arith.constant 0 : i32
    %c0_i32_1 = arith.constant 0 : i32
    return %1, %c0_i32, %c0_i32_0 : i32, i32, i32
  }
  func.func @transform_6(%arg0: i32, %arg1: i32) -> (i32, i32, i32) {
    %c1_i32 = arith.constant 1 : i32
    %0 = arith.muli %arg0, %c1_i32 : i32
    %1 = arith.addi %0, %arg1 : i32
    %c0_i32 = arith.constant 0 : i32
    %c0_i32_0 = arith.constant 0 : i32
    %c0_i32_1 = arith.constant 0 : i32
    return %1, %c0_i32, %c0_i32_0 : i32, i32, i32
  }
}

module attributes {stable_mosaic.version = 11 : i64} {
  func.func @_gemm_bias_kernel(%arg0: i32, %arg1: memref<2x512xbf16, #tpu.memory_space<vmem>>, %arg2: memref<512x8xbf16, #tpu.memory_space<vmem>>, %arg3: memref<1x8xf32, #tpu.memory_space<vmem>>, %arg4: memref<2x8xf32, #tpu.memory_space<vmem>>) attributes {dimension_semantics = [#tpu.dimension_semantics<arbitrary>], iteration_bounds = array<i64: 1>, scalar_prefetch = 0 : i64, scratch_operands = 0 : i64, tpu.core_type = #tpu.core_type<tc>, window_params = [{pipeline_mode = #tpu.pipeline_mode<synchronous>, transform_indices = @transform_0, window_bounds = array<i64: 2, 512>}, {pipeline_mode = #tpu.pipeline_mode<synchronous>, transform_indices = @transform_1, window_bounds = array<i64: 512, 8>}, {pipeline_mode = #tpu.pipeline_mode<synchronous>, transform_indices = @transform_2, window_bounds = array<i64: 1, 8>}, {pipeline_mode = #tpu.pipeline_mode<synchronous>, transform_indices = @transform_3, window_bounds = array<i64: 2, 8>}]} {
    %c0 = arith.constant 0 : index
    %c0_0 = arith.constant 0 : index
    %0 = vector.load %arg1[%c0, %c0_0] : memref<2x512xbf16, #tpu.memory_space<vmem>>, vector<2x512xbf16>
    %c0_1 = arith.constant 0 : index
    %c0_2 = arith.constant 0 : index
    %1 = vector.load %arg2[%c0_1, %c0_2] : memref<512x8xbf16, #tpu.memory_space<vmem>>, vector<512x8xbf16>
    %cst = arith.constant dense<0.000000e+00> : vector<2x8xf32>
    %2 = tpu.matmul %0, %1, %cst {dimension_numbers = #tpu.dot_dimension_numbers<[1], [0], [0], [1], [0, 0, 1, 1], [], []>} : vector<2x512xbf16>, vector<512x8xbf16>, vector<2x8xf32> -> vector<2x8xf32>
    %c0_3 = arith.constant 0 : index
    %c0_4 = arith.constant 0 : index
    %3 = vector.load %arg3[%c0_3, %c0_4] : memref<1x8xf32, #tpu.memory_space<vmem>>, vector<1x8xf32>
    %4 = vector.broadcast %3 : vector<1x8xf32> to vector<2x8xf32>
    %5 = arith.addf %2, %4 : vector<2x8xf32>
    %c0_5 = arith.constant 0 : index
    %c0_6 = arith.constant 0 : index
    %6 = vector.load %arg4[%c0_5, %c0_6] : memref<2x8xf32, #tpu.memory_space<vmem>>, vector<2x8xf32>
    tpu.vector_store %arg4[%c0_5, %c0_6], %5 {strides = array<i32>} : memref<2x8xf32, #tpu.memory_space<vmem>>, vector<2x8xf32>,
    return
  }
  func.func @transform_0(%arg0: i32) -> (i32, i32) {
    %c0_i32 = arith.constant 0 : i32
    %c0_i32_0 = arith.constant 0 : i32
    %c0_i32_1 = arith.constant 0 : i32
    return %c0_i32, %c0_i32_0 : i32, i32
  }
  func.func @transform_1(%arg0: i32) -> (i32, i32) {
    %c0_i32 = arith.constant 0 : i32
    %c0_i32_0 = arith.constant 0 : i32
    %c0_i32_1 = arith.constant 0 : i32
    return %c0_i32, %c0_i32_0 : i32, i32
  }
  func.func @transform_2(%arg0: i32) -> (i32, i32) {
    %c0_i32 = arith.constant 0 : i32
    %c0_i32_0 = arith.constant 0 : i32
    %c0_i32_1 = arith.constant 0 : i32
    return %c0_i32, %c0_i32_0 : i32, i32
  }
  func.func @transform_3(%arg0: i32) -> (i32, i32) {
    %c0_i32 = arith.constant 0 : i32
    %c0_i32_0 = arith.constant 0 : i32
    %c0_i32_1 = arith.constant 0 : i32
    return %c0_i32, %c0_i32_0 : i32, i32
  }
}

</mosaic_0001>

<llo_original>
// kernel: cnn_module_forward.4
$region0: #{cnn_module_forward.4}
  #allocation0 [shape = 'u32[]', space=smem, size = 0x4, offset = 0x4, fixed_abs, tag = 'smem constant byte address 0x4 - core index']
  #allocation1 [shape = 'u32[144,128]{1,0:T(1,128)}', space=vmem, size = 0x12000, scoped, tag = 'internal scratch']
  #allocation2 [shape = 'bf16[12,512]{1,0:T(8,128)(2,1)}', space=vmem, size = 0x4000, scoped, tag = 'scratch operand']
  %s0 = inlined_call_operand.vmem [shape: bf16[2,12,512], index: 0, kind: input, shape index: {}, may-alias: {0,1}]
  %s1 = inlined_call_operand.vmem [shape: bf16[2,12,512], index: 1, kind: input, shape index: {}, may-alias: {0,1}]
  %s2 = inlined_call_operand.vmem [shape: bf16[4,8,12], index: 2, kind: input, shape index: {}]
  %s3 = inlined_call_operand.vmem [shape: f32[8,1], index: 3, kind: input, shape index: {}]
  %s4 = inlined_call_operand.vmem [shape: bf16[2,8,384], index: 4, kind: output, shape index: {}]
  %s5 = sld [smem:[#allocation0]]
  $region156: #{cnn_module_forward.4} parent=0
    _
  %s7 = ssub.s32 1, %s5
  %s8 = scalar_select 0, %s7, %s5
  $region1: #{cnn_module_forward.4} parent=0
    #allocation3 [shape = 'u8[24576]{0}', space=vmem, size = 0x6000, scoped, tag = 'input window, operand 0']
    #allocation4 [shape = 'u8[8192]{0}', space=vmem, size = 0x2000, scoped, tag = 'input window, operand 1']
    loop: start=0, step=1, limit=4
    $region2: #{cnn_module_forward.4} parent=1 // loop_pre_header
      _
    $region3: #{cnn_module_forward.4} parent=1 // loop_header
      %s10 = sphi 0, %s14
      %p11 = scmp.ge.s32.totalorder %s10, 4
      %s17 = sphi 0, %s29
      %s18 = sphi 0, %s25
      %s19 = sphi 0, %s17
      %s20 = sphi 0, %s18
      %s21 = sphi 0, %s19
      %s22 = sphi 0, %s20
      %s34 = sphi 0, %s36
      %s37 = sphi 0, %s34
      %s38 = sphi 0, %s37
      %s54 = sphi 0, %s38
      %s66 = sphi 0, %s68
      %s69 = sphi 0, %s66
      %s70 = sphi 0, %s69
      %s86 = sphi 0, %s70
      %s90 = sphi 0, %s90
      %s92 = sphi 0, %s90
      %s93 = sphi 0, %s92
      %s107 = sphi 0, %s93
      %s111 = sphi 0, %s111
      %s113 = sphi 0, %s111
      %s114 = sphi 0, %s113
      %s128 = sphi 0, %s114
      %s136 = sphi 0, %s138
      %s139 = sphi 0, %s136
      %s140 = sphi 0, %s139
      %s156 = sphi 0, %s140
    $region4: #{cnn_module_forward.4} parent=1 // loop_header_branch
      %13 = sbr.rel (%p11) target = $region8
    $region5: #{cnn_module_forward.4} parent=1 // loop_body
      %s15 = ssub.s32 %s10, 1
      %s16 = ssub.s32 %s10, 2
      %s23 = sadd.s32 1, %s18
      %p24 = scmp.ge.s32.totalorder %s23, 1
      %s25 = scalar_select %p24, 0, %s23
      %s26 = sadd.s32 1, %s17
      %s27 = scalar_select %p24, %s26, %s17
      %p28 = scmp.ge.s32.totalorder %s27, 2
      %s29 = scalar_select %p28, 0, %s27
      %s30 = ssub.s32 %s17, %s29
      %s31 = ssub.s32 %s18, %s25
      %s32 = sor.u32 %s30, %s31
      %p33 = scmp.eq.s32.totalorder %s32, 0
      %s35 = sadd.s32 %s34, 1
      %s36 = scalar_select %p33, %s34, %s35
      %p39 = pneg %p33
      %p40 = scmp.eq.s32.totalorder %s10, 1
      %p41 = por %p39, %p40
      %p42 = scmp.ne.s32.totalorder %s34, %s37
      %p43 = scmp.eq.s32.totalorder %s10, 0
      %p44 = por %p42, %p43
      %p45 = scmp.ne.s32.totalorder %s34, %s37
      %p46 = scmp.eq.s32.totalorder %s15, 1
      %p47 = por %p45, %p46
      %p48 = scmp.ne.s32.totalorder %s37, %s38
      %p49 = scmp.eq.s32.totalorder %s15, 0
      %p50 = por %p48, %p49
      %p51 = scmp.ne.s32.totalorder %s37, %s38
      %p52 = scmp.eq.s32.totalorder %s16, 1
      %p53 = por %p51, %p52
      %p55 = scmp.ne.s32.totalorder %s38, %s54
      %p56 = scmp.eq.s32.totalorder %s16, 0
      %p57 = por %p55, %p56
      %s58 = sadd.s32 %s18, 1
      %s59 = smul.u32 %s58, 3
      %s60 = sadd.s32 %s25, 1
      %s61 = smul.u32 %s60, 3
      %s62 = ssub.s32 %s17, %s29
      %s63 = ssub.s32 %s59, %s61
      %s64 = sor.u32 %s62, %s63
      %p65 = scmp.eq.s32.totalorder %s64, 0
      %s67 = sadd.s32 %s66, 1
      %s68 = scalar_select %p65, %s66, %s67
      %p71 = pneg %p65
      %p72 = scmp.eq.s32.totalorder %s10, 1
      %p73 = por %p71, %p72
      %p74 = scmp.ne.s32.totalorder %s66, %s69
      %p75 = scmp.eq.s32.totalorder %s10, 0
      %p76 = por %p74, %p75
      %p77 = scmp.ne.s32.totalorder %s66, %s69
      %p78 = scmp.eq.s32.totalorder %s15, 1
      %p79 = por %p77, %p78
      %p80 = scmp.ne.s32.totalorder %s69, %s70
      %p81 = scmp.eq.s32.totalorder %s15, 0
      %p82 = por %p80, %p81
      %p83 = scmp.ne.s32.totalorder %s69, %s70
      %p84 = scmp.eq.s32.totalorder %s16, 1
      %p85 = por %p83, %p84
      %p87 = scmp.ne.s32.totalorder %s70, %s86
      %p88 = scmp.eq.s32.totalorder %s16, 0
      %p89 = por %p87, %p88
      %s91 = sadd.s32 %s90, 1
      %p94 = scmp.eq.s32.totalorder %s10, 1
      %p95 = scmp.ne.s32.totalorder %s90, %s92
      %p96 = scmp.eq.s32.totalorder %s10, 0
      %p97 = por %p95, %p96
      %p98 = scmp.ne.s32.totalorder %s90, %s92
      %p99 = scmp.eq.s32.totalorder %s15, 1
      %p100 = por %p98, %p99
      %p101 = scmp.ne.s32.totalorder %s92, %s93
      %p102 = scmp.eq.s32.totalorder %s15, 0
      %p103 = por %p101, %p102
      %p104 = scmp.ne.s32.totalorder %s92, %s93
      %p105 = scmp.eq.s32.totalorder %s16, 1
      %p106 = por %p104, %p105
      %p108 = scmp.ne.s32.totalorder %s93, %s107
      %p109 = scmp.eq.s32.totalorder %s16, 0
      %p110 = por %p108, %p109
      %s112 = sadd.s32 %s111, 1
      %p115 = scmp.eq.s32.totalorder %s10, 1
      %p116 = scmp.ne.s32.totalorder %s111, %s113
      %p117 = scmp.eq.s32.totalorder %s10, 0
      %p118 = por %p116, %p117
      %p119 = scmp.ne.s32.totalorder %s111, %s113
      %p120 = scmp.eq.s32.totalorder %s15, 1
      %p121 = por %p119, %p120
      %p122 = scmp.ne.s32.totalorder %s113, %s114
      %p123 = scmp.eq.s32.totalorder %s15, 0
      %p124 = por %p122, %p123
      %p125 = scmp.ne.s32.totalorder %s113, %s114
      %p126 = scmp.eq.s32.totalorder %s16, 1
      %p127 = por %p125, %p126
      %p129 = scmp.ne.s32.totalorder %s114, %s128
      %p130 = scmp.eq.s32.totalorder %s16, 0
      %p131 = por %p129, %p130
      %s132 = ssub.s32 %s17, %s29
      %s133 = ssub.s32 %s18, %s25
      %s134 = sor.u32 %s132, %s133
      %p135 = scmp.eq.s32.totalorder %s134, 0
      %s137 = sadd.s32 %s136, 1
      %s138 = scalar_select %p135, %s136, %s137
      %p141 = pneg %p135
      %p142 = scmp.eq.s32.totalorder %s10, 1
      %p143 = por %p141, %p142
      %p144 = scmp.ne.s32.totalorder %s136, %s139
      %p145 = scmp.eq.s32.totalorder %s10, 0
      %p146 = por %p144, %p145
      %p147 = scmp.ne.s32.totalorder %s136, %s139
      %p148 = scmp.eq.s32.totalorder %s15, 1
      %p149 = por %p147, %p148
      %p150 = scmp.ne.s32.totalorder %s139, %s140
      %p151 = scmp.eq.s32.totalorder %s15, 0
      %p152 = por %p150, %p151
      %p153 = scmp.ne.s32.totalorder %s139, %s140
      %p154 = scmp.eq.s32.totalorder %s16, 1
      %p155 = por %p153, %p154
      %p157 = scmp.ne.s32.totalorder %s140, %s156
      %p158 = scmp.eq.s32.totalorder %s16, 0
      %p159 = por %p157, %p158
      %p160 = scmp.le.s32.totalorder 1, %s10
      %p161 = scmp.lt.s32.totalorder %s10, 3
      %p162 = pnand %p160, %p161
      %p163 = pneg %p162
      // Predicated region
      $region9: #{cnn_module_forward.4} parent=5 // pred_check
        _
      $region10: #{cnn_module_forward.4} parent=5 // pred_check_branch
        %165 = sbr.rel (%p162) target = $region12
      $region11: #{cnn_module_forward.4} parent=5 // pred_region
        %s166 = ssub.s32 %s10, 1
        // Predicated region
        $region13: #{cnn_module_forward.4} parent=11 // pred_check
          %p167 = pneg %p103
        $region14: #{cnn_module_forward.4} parent=11 // pred_check_branch
          %169 = sbr.rel (%p167) target = $region16
        $region15: #{cnn_module_forward.4} parent=11 // pred_region
          _
        $region16: #{cnn_module_forward.4} parent=11 // pred_fallthru
          _
        // Predicated region
        $region17: #{cnn_module_forward.4} parent=11 // pred_check
          %p170 = pneg %p124
        $region18: #{cnn_module_forward.4} parent=11 // pred_check_branch
          %172 = sbr.rel (%p170) target = $region20
        $region19: #{cnn_module_forward.4} parent=11 // pred_region
          _
        $region20: #{cnn_module_forward.4} parent=11 // pred_fallthru
          _
      $region12: #{cnn_module_forward.4} parent=5 // pred_fallthru
        _
      %p173 = scmp.lt.s32.totalorder %s10, 2
      // Predicated region
      $region21: #{cnn_module_forward.4} parent=5 // pred_check
        %p174 = pneg %p173
      $region22: #{cnn_module_forward.4} parent=5 // pred_check_branch
        %176 = sbr.rel (%p174) target = $region24
      $region23: #{cnn_module_forward.4} parent=5 // pred_region
        // Predicated region
        $region25: #{cnn_module_forward.4} parent=23 // pred_check
          %p177 = pneg %p44
        $region26: #{cnn_module_forward.4} parent=23 // pred_check_branch
          %179 = sbr.rel (%p177) target = $region28
        $region27: #{cnn_module_forward.4} parent=23 // pred_region
          %s180 = sand.u32 %s34, 1
          %s181 = sand.u32 %s34, 1
          %s182 = smul.addr %s181, 24
          %s183 = scalar_lea.vmem [#allocation3], %s182
          %s184 = smul.u32 3, %s18
          %s185 = ssub.s32 4, %s184
          %p186 = scmp.lt.s32.totalorder %s185, 3
          %s187 = scalar_select %p186, %s185, 3
          %s188 = smul.u32 128, %s187
          %p189 = scmp.ne.s32.totalorder 0, %s188
          %s190 = smul.addr %s17, 8
          %s191 = sadd.s32 %s184, %s190
          %s192 = smul.addr %s191, 4
          %s193 = scalar_lea.vmem %s0, %s192
          %s194 = smul.u32 %s187, 4
          // Predicated region
          $region29: #{cnn_module_forward.4} parent=27 // pred_check
            %p195 = pneg %p189
          $region30: #{cnn_module_forward.4} parent=27 // pred_check_branch
            %197 = sbr.rel (%p195) target = $region32
          $region31: #{cnn_module_forward.4} parent=27 // pred_region
            %p198 = scmp.lt.u32.totalorder %s194, 8
            %p199 = pneg %p198
            // Predicated region
            $region33: #{cnn_module_forward.4} parent=31 // pred_check
              _
            $region34: #{cnn_module_forward.4} parent=31 // pred_check_branch
              %201 = sbr.rel (%p198) target = $region36
            $region35: #{cnn_module_forward.4} parent=31 // pred_region
              %s218 = sand.u32 %s194, 7
              %p219 = scmp.eq.s32.totalorder %s218, 0
              // Predicated region
              $region48: #{cnn_module_forward.4} parent=35 // pred_check
                %p220 = pneg %p219
              $region49: #{cnn_module_forward.4} parent=35 // pred_check_branch
                %222 = sbr.rel (%p220) target = $region51
              $region50: #{cnn_module_forward.4} parent=35 // pred_region
                %s223 = sshrl.u32 %s194, 3
                %s224 = sshrl.u32 %s223, 5
                // While loop
                $region52: #{cnn_module_forward.4} parent=50 // loop_pre_header
                  _
                $region53: #{cnn_module_forward.4} parent=50 // loop_header
                  %s228 = sphi 0, %s230
                  %p229 = scmp.ge.s32.totalorder %s228, %s224
                  %s233 = sphi 0, %s366
                  %s234 = sphi %s193, %s369
                  %s235 = sphi %s183, %s370
                $region54: #{cnn_module_forward.4} parent=50 // loop_header_branch
                  %232 = sbr.rel (%p229) target = $region58
                $region55: #{cnn_module_forward.4} parent=50 // loop_body
                  %v236 = vld [vmem:[%s234] sm:$0xff]
                  %237 = vst [vmem:[%s235] sm:$0xff] %v236
                  %v238 = vld [vmem:[%s234 + $0x8] sm:$0xff]
                  %239 = vst [vmem:[%s235 + $0x8] sm:$0xff] %v238
                  %v240 = vld [vmem:[%s234 + $0x10] sm:$0xff]
                  %241 = vst [vmem:[%s235 + $0x10] sm:$0xff] %v240
                  %v242 = vld [vmem:[%s234 + $0x18] sm:$0xff]
                  %243 = vst [vmem:[%s235 + $0x18] sm:$0xff] %v242
                  %v244 = vld [vmem:[%s234 + $0x20] sm:$0xff]
                  %245 = vst [vmem:[%s235 + $0x20] sm:$0xff] %v244
                  %v246 = vld [vmem:[%s234 + $0x28] sm:$0xff]
                  %247 = vst [vmem:[%s235 + $0x28] sm:$0xff] %v246
                  %v248 = vld [vmem:[%s234 + $0x30] sm:$0xff]
                  %249 = vst [vmem:[%s235 + $0x30] sm:$0xff] %v248
                  %v250 = vld [vmem:[%s234 + $0x38] sm:$0xff]
                  %251 = vst [vmem:[%s235 + $0x38] sm:$0xff] %v250
                  %v252 = vld [vmem:[%s234 + $0x40] sm:$0xff]
                  %253 = vst [vmem:[%s235 + $0x40] sm:$0xff] %v252
                  %v254 = vld [vmem:[%s234 + $0x48] sm:$0xff]
                  %255 = vst [vmem:[%s235 + $0x48] sm:$0xff] %v254
                  %v256 = vld [vmem:[%s234 + $0x50] sm:$0xff]
                  %257 = vst [vmem:[%s235 + $0x50] sm:$0xff] %v256
                  %v258 = vld [vmem:[%s234 + $0x58] sm:$0xff]
                  %259 = vst [vmem:[%s235 + $0x58] sm:$0xff] %v258
                  %v260 = vld [vmem:[%s234 + $0x60] sm:$0xff]
                  %261 = vst [vmem:[%s235 + $0x60] sm:$0xff] %v260
                  %v262 = vld [vmem:[%s234 + $0x68] sm:$0xff]
                  %263 = vst [vmem:[%s235 + $0x68] sm:$0xff] %v262
                  %v264 = vld [vmem:[%s234 + $0x70] sm:$0xff]
                  %265 = vst [vmem:[%s235 + $0x70] sm:$0xff] %v264
                  %v266 = vld [vmem:[%s234 + $0x78] sm:$0xff]
                  %267 = vst [vmem:[%s235 + $0x78] sm:$0xff] %v266
                  %v268 = vld [vmem:[%s234 + $0x80] sm:$0xff]
                  %269 = vst [vmem:[%s235 + $0x80] sm:$0xff] %v268
                  %v270 = vld [vmem:[%s234 + $0x88] sm:$0xff]
                  %271 = vst [vmem:[%s235 + $0x88] sm:$0xff] %v270
                  %v272 = vld [vmem:[%s234 + $0x90] sm:$0xff]
                  %273 = vst [vmem:[%s235 + $0x90] sm:$0xff] %v272
                  %v274 = vld [vmem:[%s234 + $0x98] sm:$0xff]
                  %275 = vst [vmem:[%s235 + $0x98] sm:$0xff] %v274
                  %v276 = vld [vmem:[%s234 + $0xa0] sm:$0xff]
                  %277 = vst [vmem:[%s235 + $0xa0] sm:$0xff] %v276
                  %v278 = vld [vmem:[%s234 + $0xa8] sm:$0xff]
                  %279 = vst [vmem:[%s235 + $0xa8] sm:$0xff] %v278
                  %v280 = vld [vmem:[%s234 + $0xb0] sm:$0xff]
                  %281 = vst [vmem:[%s235 + $0xb0] sm:$0xff] %v280
                  %v282 = vld [vmem:[%s234 + $0xb8] sm:$0xff]
                  %283 = vst [vmem:[%s235 + $0xb8] sm:$0xff] %v282
                  %v284 = vld [vmem:[%s234 + $0xc0] sm:$0xff]
                  %285 = vst [vmem:[%s235 + $0xc0] sm:$0xff] %v284
                  %v286 = vld [vmem:[%s234 + $0xc8] sm:$0xff]
                  %287 = vst [vmem:[%s235 + $0xc8] sm:$0xff] %v286
                  %v288 = vld [vmem:[%s234 + $0xd0] sm:$0xff]
                  %289 = vst [vmem:[%s235 + $0xd0] sm:$0xff] %v288
                  %v290 = vld [vmem:[%s234 + $0xd8] sm:$0xff]
                  %291 = vst [vmem:[%s235 + $0xd8] sm:$0xff] %v290
                  %v292 = vld [vmem:[%s234 + $0xe0] sm:$0xff]
                  %293 = vst [vmem:[%s235 + $0xe0] sm:$0xff] %v292
                  %v294 = vld [vmem:[%s234 + $0xe8] sm:$0xff]
                  %295 = vst [vmem:[%s235 + $0xe8] sm:$0xff] %v294
                  %v296 = vld [vmem:[%s234 + $0xf0] sm:$0xff]
                  %297 = vst [vmem:[%s235 + $0xf0] sm:$0xff] %v296
                  %v298 = vld [vmem:[%s234 + $0xf8] sm:$0xff]
                  %299 = vst [vmem:[%s235 + $0xf8] sm:$0xff] %v298
                  %v300 = vld [vmem:[%s234 + $0x10] sm:$0xff]
                  %301 = vst [vmem:[%s235 + $0xc] sm:$0xff] %v300
                  %v302 = vld [vmem:[%s234 + $0x18] sm:$0xff]
                  %303 = vst [vmem:[%s235 + $0x14] sm:$0xff] %v302
                  %v304 = vld [vmem:[%s234 + $0x20] sm:$0xff]
                  %305 = vst [vmem:[%s235 + $0x1c] sm:$0xff] %v304
                  %v306 = vld [vmem:[%s234 + $0x28] sm:$0xff]
                  %307 = vst [vmem:[%s235 + $0x24] sm:$0xff] %v306
                  %v308 = vld [vmem:[%s234 + $0x30] sm:$0xff]
                  %309 = vst [vmem:[%s235 + $0x2c] sm:$0xff] %v308
                  %v310 = vld [vmem:[%s234 + $0x38] sm:$0xff]
                  %311 = vst [vmem:[%s235 + $0x34] sm:$0xff] %v310
                  %v312 = vld [vmem:[%s234 + $0x40] sm:$0xff]
                  %313 = vst [vmem:[%s235 + $0x3c] sm:$0xff] %v312
                  %v314 = vld [vmem:[%s234 + $0x48] sm:$0xff]
                  %315 = vst [vmem:[%s235 + $0x44] sm:$0xff] %v314
                  %v316 = vld [vmem:[%s234 + $0x50] sm:$0xff]
                  %317 = vst [vmem:[%s235 + $0x4c] sm:$0xff] %v316
                  %v318 = vld [vmem:[%s234 + $0x58] sm:$0xff]
                  %319 = vst [vmem:[%s235 + $0x54] sm:$0xff] %v318
                  %v320 = vld [vmem:[%s234 + $0x60] sm:$0xff]
                  %321 = vst [vmem:[%s235 + $0x5c] sm:$0xff] %v320
                  %v322 = vld [vmem:[%s234 + $0x68] sm:$0xff]
                  %323 = vst [vmem:[%s235 + $0x64] sm:$0xff] %v322
                  %v324 = vld [vmem:[%s234 + $0x70] sm:$0xff]
                  %325 = vst [vmem:[%s235 + $0x6c] sm:$0xff] %v324
                  %v326 = vld [vmem:[%s234 + $0x78] sm:$0xff]
                  %327 = vst [vmem:[%s235 + $0x74] sm:$0xff] %v326
                  %v328 = vld [vmem:[%s234 + $0x80] sm:$0xff]
                  %329 = vst [vmem:[%s235 + $0x7c] sm:$0xff] %v328
                  %v330 = vld [vmem:[%s234 + $0x88] sm:$0xff]
                  %331 = vst [vmem:[%s235 + $0x84] sm:$0xff] %v330
                  %v332 = vld [vmem:[%s234 + $0x90] sm:$0xff]
                  %333 = vst [vmem:[%s235 + $0x8c] sm:$0xff] %v332
                  %v334 = vld [vmem:[%s234 + $0x98] sm:$0xff]
                  %335 = vst [vmem:[%s235 + $0x94] sm:$0xff] %v334
                  %v336 = vld [vmem:[%s234 + $0xa0] sm:$0xff]
                  %337 = vst [vmem:[%s235 + $0x9c] sm:$0xff] %v336
                  %v338 = vld [vmem:[%s234 + $0xa8] sm:$0xff]
                  %339 = vst [vmem:[%s235 + $0xa4] sm:$0xff] %v338
                  %v340 = vld [vmem:[%s234 + $0xb0] sm:$0xff]
                  %341 = vst [vmem:[%s235 + $0xac] sm:$0xff] %v340
                  %v342 = vld [vmem:[%s234 + $0xb8] sm:$0xff]
                  %343 = vst [vmem:[%s235 + $0xb4] sm:$0xff] %v342
                  %v344 = vld [vmem:[%s234 + $0xc0] sm:$0xff]
                  %345 = vst [vmem:[%s235 + $0xbc] sm:$0xff] %v344
                  %v346 = vld [vmem:[%s234 + $0xc8] sm:$0xff]
                  %347 = vst [vmem:[%s235 + $0xc4] sm:$0xff] %v346
                  %v348 = vld [vmem:[%s234 + $0xd0] sm:$0xff]
                  %349 = vst [vmem:[%s235 + $0xcc] sm:$0xff] %v348
                  %v350 = vld [vmem:[%s234 + $0xd8] sm:$0xff]
                  %351 = vst [vmem:[%s235 + $0xd4] sm:$0xff] %v350
                  %v352 = vld [vmem:[%s234 + $0xe0] sm:$0xff]
                  %353 = vst [vmem:[%s235 + $0xdc] sm:$0xff] %v352
                  %v354 = vld [vmem:[%s234 + $0xe8] sm:$0xff]
                  %355 = vst [vmem:[%s235 + $0xe4] sm:$0xff] %v354
                  %v356 = vld [vmem:[%s234 + $0xf0] sm:$0xff]
                  %357 = vst [vmem:[%s235 + $0xec] sm:$0xff] %v356
                  %v358 = vld [vmem:[%s234 + $0xf8] sm:$0xff]
                  %359 = vst [vmem:[%s235 + $0xf4] sm:$0xff] %v358
                  %v360 = vld [vmem:[%s234 + $0x100] sm:$0xff]
                  %361 = vst [vmem:[%s235 + $0xfc] sm:$0xff] %v360
                  %v362 = vld [vmem:[%s234 + $0x108] sm:$0xff]
                  %363 = vst [vmem:[%s235 + $0x104] sm:$0xff] %v362
                  %s364 = sadd.s32 1, %s233
                  %p365 = scmp.ge.s32.totalorder %s364, %s224
                  %s366 = scalar_select %p365, 0, %s364
                  %s367 = smul.u32 %s366, 256
                  %s368 = smul.u32 %s366, 256
                  %s369 = scalar_lea.vmem %s193, %s367
                  %s370 = scalar_lea.vmem %s183, %s368 [#allocation3]
                $region56: #{cnn_module_forward.4} parent=50 // loop_footer
                  %s230 = sadd.s32 %s228, 1
                $region57: #{cnn_module_forward.4} parent=50 // loop_footer_branch
                  %227 = sbr.rel target = $region53
                $region58: #{cnn_module_forward.4} parent=50 // loop_exit
                  _
                %s371 = sshrl.u32 %s223, 5
                %s372 = sand.u32 %s223, 31
                %s373 = smul.u32 %s371, 32
                %s374 = smul.u32 128, %s373
                %s375 = sshra.s32 %s374, 4
                %s376 = scalar_lea.vmem %s193, %s375
                %s377 = smul.u32 128, %s373
                %s378 = sshra.s32 %s377, 4
                %s379 = scalar_lea.vmem %s183, %s378 [#allocation3]
                // While loop
                $region59: #{cnn_module_forward.4} parent=50 // loop_pre_header
                  _
                $region60: #{cnn_module_forward.4} parent=50 // loop_header
                  %s383 = sphi 0, %s385
                  %p384 = scmp.ge.s32.totalorder %s383, %s372
                  %s388 = sphi 0, %s397
                  %s389 = sphi %s376, %s400
                  %s390 = sphi %s379, %s401
                $region61: #{cnn_module_forward.4} parent=50 // loop_header_branch
                  %387 = sbr.rel (%p384) target = $region65
                $region62: #{cnn_module_forward.4} parent=50 // loop_body
                  %v391 = vld [vmem:[%s389] sm:$0xff]
                  %392 = vst [vmem:[%s390] sm:$0xff] %v391
                  %v393 = vld [vmem:[%s389 + $0x10] sm:$0xff]
                  %394 = vst [vmem:[%s390 + $0xc] sm:$0xff] %v393
                  %s395 = sadd.s32 1, %s388
                  %p396 = scmp.ge.s32.totalorder %s395, %s372
                  %s397 = scalar_select %p396, 0, %s395
                  %s398 = smul.u32 %s397, 8
                  %s399 = smul.u32 %s397, 8
                  %s400 = scalar_lea.vmem %s376, %s398
                  %s401 = scalar_lea.vmem %s379, %s399 [#allocation3]
                $region63: #{cnn_module_forward.4} parent=50 // loop_footer
                  %s385 = sadd.s32 %s383, 1
                $region64: #{cnn_module_forward.4} parent=50 // loop_footer_branch
                  %382 = sbr.rel target = $region60
                $region65: #{cnn_module_forward.4} parent=50 // loop_exit
                  _
              $region51: #{cnn_module_forward.4} parent=35 // pred_fallthru
                _
              %p402 = pneg %p219
              // Predicated region
              $region66: #{cnn_module_forward.4} parent=35 // pred_check
                _
              $region67: #{cnn_module_forward.4} parent=35 // pred_check_branch
                %404 = sbr.rel (%p219) target = $region69
              $region68: #{cnn_module_forward.4} parent=35 // pred_region
                %s405 = sand.u32 %s194, 7
                %s406 = ssub.s32 %s194, %s405
                %s407 = scalar_lea.vmem %s193, %s406
                %s408 = ssub.s32 %s194, %s405
                %s409 = scalar_lea.vmem %s183, %s408 [#allocation3]
                %s410 = sshrl.u32 %s194, 3
                %s411 = sshrl.u32 %s410, 5
                // While loop
                $region70: #{cnn_module_forward.4} parent=68 // loop_pre_header
                  _
                $region71: #{cnn_module_forward.4} parent=68 // loop_header
                  %s415 = sphi 0, %s417
                  %p416 = scmp.ge.s32.totalorder %s415, %s411
                  %s420 = sphi 0, %s553
                  %s421 = sphi %s193, %s556
                  %s422 = sphi %s183, %s557
                $region72: #{cnn_module_forward.4} parent=68 // loop_header_branch
                  %419 = sbr.rel (%p416) target = $region76
                $region73: #{cnn_module_forward.4} parent=68 // loop_body
                  %v423 = vld [vmem:[%s421] sm:$0xff]
                  %424 = vst [vmem:[%s422] sm:$0xff] %v423
                  %v425 = vld [vmem:[%s421 + $0x8] sm:$0xff]
                  %426 = vst [vmem:[%s422 + $0x8] sm:$0xff] %v425
                  %v427 = vld [vmem:[%s421 + $0x10] sm:$0xff]
                  %428 = vst [vmem:[%s422 + $0x10] sm:$0xff] %v427
                  %v429 = vld [vmem:[%s421 + $0x18] sm:$0xff]
                  %430 = vst [vmem:[%s422 + $0x18] sm:$0xff] %v429
                  %v431 = vld [vmem:[%s421 + $0x20] sm:$0xff]
                  %432 = vst [vmem:[%s422 + $0x20] sm:$0xff] %v431
                  %v433 = vld [vmem:[%s421 + $0x28] sm:$0xff]
                  %434 = vst [vmem:[%s422 + $0x28] sm:$0xff] %v433
                  %v435 = vld [vmem:[%s421 + $0x30] sm:$0xff]
                  %436 = vst [vmem:[%s422 + $0x30] sm:$0xff] %v435
                  %v437 = vld [vmem:[%s421 + $0x38] sm:$0xff]
                  %438 = vst [vmem:[%s422 + $0x38] sm:$0xff] %v437
                  %v439 = vld [vmem:[%s421 + $0x40] sm:$0xff]
                  %440 = vst [vmem:[%s422 + $0x40] sm:$0xff] %v439
                  %v441 = vld [vmem:[%s421 + $0x48] sm:$0xff]
                  %442 = vst [vmem:[%s422 + $0x48] sm:$0xff] %v441
                  %v443 = vld [vmem:[%s421 + $0x50] sm:$0xff]
                  %444 = vst [vmem:[%s422 + $0x50] sm:$0xff] %v443
                  %v445 = vld [vmem:[%s421 + $0x58] sm:$0xff]
                  %446 = vst [vmem:[%s422 + $0x58] sm:$0xff] %v445
                  %v447 = vld [vmem:[%s421 + $0x60] sm:$0xff]
                  %448 = vst [vmem:[%s422 + $0x60] sm:$0xff] %v447
                  %v449 = vld [vmem:[%s421 + $0x68] sm:$0xff]
                  %450 = vst [vmem:[%s422 + $0x68] sm:$0xff] %v449
                  %v451 = vld [vmem:[%s421 + $0x70] sm:$0xff]
                  %452 = vst [vmem:[%s422 + $0x70] sm:$0xff] %v451
                  %v453 = vld [vmem:[%s421 + $0x78] sm:$0xff]
                  %454 = vst [vmem:[%s422 + $0x78] sm:$0xff] %v453
                  %v455 = vld [vmem:[%s421 + $0x80] sm:$0xff]
                  %456 = vst [vmem:[%s422 + $0x80] sm:$0xff] %v455
                  %v457 = vld [vmem:[%s421 + $0x88] sm:$0xff]
                  %458 = vst [vmem:[%s422 + $0x88] sm:$0xff] %v457
                  %v459 = vld [vmem:[%s421 + $0x90] sm:$0xff]
                  %460 = vst [vmem:[%s422 + $0x90] sm:$0xff] %v459
                  %v461 = vld [vmem:[%s421 + $0x98] sm:$0xff]
                  %462 = vst [vmem:[%s422 + $0x98] sm:$0xff] %v461
                  %v463 = vld [vmem:[%s421 + $0xa0] sm:$0xff]
                  %464 = vst [vmem:[%s422 + $0xa0] sm:$0xff] %v463
                  %v465 = vld [vmem:[%s421 + $0xa8] sm:$0xff]
                  %466 = vst [vmem:[%s422 + $0xa8] sm:$0xff] %v465
                  %v467 = vld [vmem:[%s421 + $0xb0] sm:$0xff]
                  %468 = vst [vmem:[%s422 + $0xb0] sm:$0xff] %v467
                  %v469 = vld [vmem:[%s421 + $0xb8] sm:$0xff]
                  %470 = vst [vmem:[%s422 + $0xb8] sm:$0xff] %v469
                  %v471 = vld [vmem:[%s421 + $0xc0] sm:$0xff]
                  %472 = vst [vmem:[%s422 + $0xc0] sm:$0xff] %v471
                  %v473 = vld [vmem:[%s421 + $0xc8] sm:$0xff]
                  %474 = vst [vmem:[%s422 + $0xc8] sm:$0xff] %v473
                  %v475 = vld [vmem:[%s421 + $0xd0] sm:$0xff]
                  %476 = vst [vmem:[%s422 + $0xd0] sm:$0xff] %v475
                  %v477 = vld [vmem:[%s421 + $0xd8] sm:$0xff]
                  %478 = vst [vmem:[%s422 + $0xd8] sm:$0xff] %v477
                  %v479 = vld [vmem:[%s421 + $0xe0] sm:$0xff]
                  %480 = vst [vmem:[%s422 + $0xe0] sm:$0xff] %v479
                  %v481 = vld [vmem:[%s421 + $0xe8] sm:$0xff]
                  %482 = vst [vmem:[%s422 + $0xe8] sm:$0xff] %v481
                  %v483 = vld [vmem:[%s421 + $0xf0] sm:$0xff]
                  %484 = vst [vmem:[%s422 + $0xf0] sm:$0xff] %v483
                  %v485 = vld [vmem:[%s421 + $0xf8] sm:$0xff]
                  %486 = vst [vmem:[%s422 + $0xf8] sm:$0xff] %v485
                  %v487 = vld [vmem:[%s421 + $0x10] sm:$0xff]
                  %488 = vst [vmem:[%s422 + $0xc] sm:$0xff] %v487
                  %v489 = vld [vmem:[%s421 + $0x18] sm:$0xff]
                  %490 = vst [vmem:[%s422 + $0x14] sm:$0xff] %v489
                  %v491 = vld [vmem:[%s421 + $0x20] sm:$0xff]
                  %492 = vst [vmem:[%s422 + $0x1c] sm:$0xff] %v491
                  %v493 = vld [vmem:[%s421 + $0x28] sm:$0xff]
                  %494 = vst [vmem:[%s422 + $0x24] sm:$0xff] %v493
                  %v495 = vld [vmem:[%s421 + $0x30] sm:$0xff]
                  %496 = vst [vmem:[%s422 + $0x2c] sm:$0xff] %v495
                  %v497 = vld [vmem:[%s421 + $0x38] sm:$0xff]
                  %498 = vst [vmem:[%s422 + $0x34] sm:$0xff] %v497
                  %v499 = vld [vmem:[%s421 + $0x40] sm:$0xff]
                  %500 = vst [vmem:[%s422 + $0x3c] sm:$0xff] %v499
                  %v501 = vld [vmem:[%s421 + $0x48] sm:$0xff]
                  %502 = vst [vmem:[%s422 + $0x44] sm:$0xff] %v501
                  %v503 = vld [vmem:[%s421 + $0x50] sm:$0xff]
                  %504 = vst [vmem:[%s422 + $0x4c] sm:$0xff] %v503
                  %v505 = vld [vmem:[%s421 + $0x58] sm:$0xff]
                  %506 = vst [vmem:[%s422 + $0x54] sm:$0xff] %v505
                  %v507 = vld [vmem:[%s421 + $0x60] sm:$0xff]
                  %508 = vst [vmem:[%s422 + $0x5c] sm:$0xff] %v507
                  %v509 = vld [vmem:[%s421 + $0x68] sm:$0xff]
                  %510 = vst [vmem:[%s422 + $0x64] sm:$0xff] %v509
                  %v511 = vld [vmem:[%s421 + $0x70] sm:$0xff]
                  %512 = vst [vmem:[%s422 + $0x6c] sm:$0xff] %v511
                  %v513 = vld [vmem:[%s421 + $0x78] sm:$0xff]
                  %514 = vst [vmem:[%s422 + $0x74] sm:$0xff] %v513
                  %v515 = vld [vmem:[%s421 + $0x80] sm:$0xff]
                  %516 = vst [vmem:[%s422 + $0x7c] sm:$0xff] %v515
                  %v517 = vld [vmem:[%s421 + $0x88] sm:$0xff]
                  %518 = vst [vmem:[%s422 + $0x84] sm:$0xff] %v517
                  %v519 = vld [vmem:[%s421 + $0x90] sm:$0xff]
                  %520 = vst [vmem:[%s422 + $0x8c] sm:$0xff] %v519
                  %v521 = vld [vmem:[%s421 + $0x98] sm:$0xff]
                  %522 = vst [vmem:[%s422 + $0x94] sm:$0xff] %v521
                  %v523 = vld [vmem:[%s421 + $0xa0] sm:$0xff]
                  %524 = vst [vmem:[%s422 + $0x9c] sm:$0xff] %v523
                  %v525 = vld [vmem:[%s421 + $0xa8] sm:$0xff]
                  %526 = vst [vmem:[%s422 + $0xa4] sm:$0xff] %v525
                  %v527 = vld [vmem:[%s421 + $0xb0] sm:$0xff]
                  %528 = vst [vmem:[%s422 + $0xac] sm:$0xff] %v527
                  %v529 = vld [vmem:[%s421 + $0xb8] sm:$0xff]
                  %530 = vst [vmem:[%s422 + $0xb4] sm:$0xff] %v529
                  %v531 = vld [vmem:[%s421 + $0xc0] sm:$0xff]
                  %532 = vst [vmem:[%s422 + $0xbc] sm:$0xff] %v531
                  %v533 = vld [vmem:[%s421 + $0xc8] sm:$0xff]
                  %534 = vst [vmem:[%s422 + $0xc4] sm:$0xff] %v533
                  %v535 = vld [vmem:[%s421 + $0xd0] sm:$0xff]
                  %536 = vst [vmem:[%s422 + $0xcc] sm:$0xff] %v535
                  %v537 = vld [vmem:[%s421 + $0xd8] sm:$0xff]
                  %538 = vst [vmem:[%s422 + $0xd4] sm:$0xff] %v537
                  %v539 = vld [vmem:[%s421 + $0xe0] sm:$0xff]
                  %540 = vst [vmem:[%s422 + $0xdc] sm:$0xff] %v539
                  %v541 = vld [vmem:[%s421 + $0xe8] sm:$0xff]
                  %542 = vst [vmem:[%s422 + $0xe4] sm:$0xff] %v541
                  %v543 = vld [vmem:[%s421 + $0xf0] sm:$0xff]
                  %544 = vst [vmem:[%s422 + $0xec] sm:$0xff] %v543
                  %v545 = vld [vmem:[%s421 + $0xf8] sm:$0xff]
                  %546 = vst [vmem:[%s422 + $0xf4] sm:$0xff] %v545
                  %v547 = vld [vmem:[%s421 + $0x100] sm:$0xff]
                  %548 = vst [vmem:[%s422 + $0xfc] sm:$0xff] %v547
                  %v549 = vld [vmem:[%s421 + $0x108] sm:$0xff]
                  %550 = vst [vmem:[%s422 + $0x104] sm:$0xff] %v549
                  %s551 = sadd.s32 1, %s420
                  %p552 = scmp.ge.s32.totalorder %s551, %s411
                  %s553 = scalar_select %p552, 0, %s551
                  %s554 = smul.u32 %s553, 256
                  %s555 = smul.u32 %s553, 256
                  %s556 = scalar_lea.vmem %s193, %s554
                  %s557 = scalar_lea.vmem %s183, %s555 [#allocation3]
                $region74: #{cnn_module_forward.4} parent=68 // loop_footer
                  %s417 = sadd.s32 %s415, 1
                $region75: #{cnn_module_forward.4} parent=68 // loop_footer_branch
                  %414 = sbr.rel target = $region71
                $region76: #{cnn_module_forward.4} parent=68 // loop_exit
                  _
                %s558 = sshrl.u32 %s410, 5
                %s559 = sand.u32 %s410, 31
                %s560 = smul.u32 %s558, 32
                %s561 = smul.u32 128, %s560
                %s562 = sshra.s32 %s561, 4
                %s563 = scalar_lea.vmem %s193, %s562
                %s564 = smul.u32 128, %s560
                %s565 = sshra.s32 %s564, 4
                %s566 = scalar_lea.vmem %s183, %s565 [#allocation3]
                // While loop
                $region77: #{cnn_module_forward.4} parent=68 // loop_pre_header
                  _
                $region78: #{cnn_module_forward.4} parent=68 // loop_header
                  %s570 = sphi 0, %s572
                  %p571 = scmp.ge.s32.totalorder %s570, %s559
                  %s575 = sphi 0, %s584
                  %s576 = sphi %s563, %s587
                  %s577 = sphi %s566, %s588
                $region79: #{cnn_module_forward.4} parent=68 // loop_header_branch
                  %574 = sbr.rel (%p571) target = $region83
                $region80: #{cnn_module_forward.4} parent=68 // loop_body
                  %v578 = vld [vmem:[%s576] sm:$0xff]
                  %579 = vst [vmem:[%s577] sm:$0xff] %v578
                  %v580 = vld [vmem:[%s576 + $0x10] sm:$0xff]
                  %581 = vst [vmem:[%s577 + $0xc] sm:$0xff] %v580
                  %s582 = sadd.s32 1, %s575
                  %p583 = scmp.ge.s32.totalorder %s582, %s559
                  %s584 = scalar_select %p583, 0, %s582
                  %s585 = smul.u32 %s584, 8
                  %s586 = smul.u32 %s584, 8
                  %s587 = scalar_lea.vmem %s563, %s585
                  %s588 = scalar_lea.vmem %s566, %s586 [#allocation3]
                $region81: #{cnn_module_forward.4} parent=68 // loop_footer
                  %s572 = sadd.s32 %s570, 1
                $region82: #{cnn_module_forward.4} parent=68 // loop_footer_branch
                  %569 = sbr.rel target = $region78
                $region83: #{cnn_module_forward.4} parent=68 // loop_exit
                  _
                %s589 = sshllo.u32 0, %s405
                loop: start=0, step=1, limit=1
                $region84: #{cnn_module_forward.4} parent=68 // loop_pre_header
                  _
                $region85: #{cnn_module_forward.4} parent=68 // loop_header
                  %s591 = sphi 0, %s595
                  %p592 = scmp.ge.s32.totalorder %s591, 1
                  %s596 = sphi %s407, %s407
                  %s597 = sphi %s409, %s409
                $region86: #{cnn_module_forward.4} parent=68 // loop_header_branch
                  %594 = sbr.rel (%p592) target = $region90
                $region87: #{cnn_module_forward.4} parent=68 // loop_body
                  %v598 = vld [vmem:[%s596] sm:%s589]
                  %599 = vst [vmem:[%s597] sm:%s589] %v598
                  %v600 = vld [vmem:[%s596 + $0x10] sm:%s589]
                  %601 = vst [vmem:[%s597 + $0xc] sm:%s589] %v600
                $region88: #{cnn_module_forward.4} parent=68 // loop_footer
                  %s595 = sadd.s32 1, %s591
                $region89: #{cnn_module_forward.4} parent=68 // loop_footer_branch
                  %590 = sbr.rel target = $region85
                $region90: #{cnn_module_forward.4} parent=68 // loop_exit
                  _
              $region69: #{cnn_module_forward.4} parent=35 // pred_fallthru
                _
            $region36: #{cnn_module_forward.4} parent=31 // pred_fallthru
              _
            // Predicated region
            $region37: #{cnn_module_forward.4} parent=31 // pred_check
              %p202 = pneg %p198
            $region38: #{cnn_module_forward.4} parent=31 // pred_check_branch
              %204 = sbr.rel (%p202) target = $region40
            $region39: #{cnn_module_forward.4} parent=31 // pred_region
              %s205 = sshllo.u32 0, %s194
              loop: start=0, step=1, limit=1
              $region41: #{cnn_module_forward.4} parent=39 // loop_pre_header
                _
              $region42: #{cnn_module_forward.4} parent=39 // loop_header
                %s207 = sphi 0, %s211
                %p208 = scmp.ge.s32.totalorder %s207, 1
                %s212 = sphi %s193, %s193
                %s213 = sphi %s183, %s183
              $region43: #{cnn_module_forward.4} parent=39 // loop_header_branch
                %210 = sbr.rel (%p208) target = $region47
              $region44: #{cnn_module_forward.4} parent=39 // loop_body
                %v214 = vld [vmem:[%s212] sm:%s205]
                %215 = vst [vmem:[%s213] sm:%s205] %v214
                %v216 = vld [vmem:[%s212 + $0x10] sm:%s205]
                %217 = vst [vmem:[%s213 + $0xc] sm:%s205] %v216
              $region45: #{cnn_module_forward.4} parent=39 // loop_footer
                %s211 = sadd.s32 1, %s207
              $region46: #{cnn_module_forward.4} parent=39 // loop_footer_branch
                %206 = sbr.rel target = $region42
              $region47: #{cnn_module_forward.4} parent=39 // loop_exit
                _
            $region40: #{cnn_module_forward.4} parent=31 // pred_fallthru
              _
          $region32: #{cnn_module_forward.4} parent=27 // pred_fallthru
            _
          %602 = vnop
        $region28: #{cnn_module_forward.4} parent=23 // pred_fallthru
          _
        // Predicated region
        $region91: #{cnn_module_forward.4} parent=23 // pred_check
          %p603 = pneg %p76
        $region92: #{cnn_module_forward.4} parent=23 // pred_check_branch
          %605 = sbr.rel (%p603) target = $region94
        $region93: #{cnn_module_forward.4} parent=23 // pred_region
          %s606 = sand.u32 %s66, 1
          %s607 = sand.u32 %s66, 1
          %s608 = smul.addr %s607, 8
          %s609 = scalar_lea.vmem [#allocation4], %s608
          %s610 = sadd.s32 %s18, 1
          %s611 = smul.u32 %s610, 3
          %s612 = smul.addr %s17, 8
          %s613 = sadd.s32 %s611, %s612
          %s614 = smul.addr %s613, 4
          %s615 = scalar_lea.vmem %s1, %s614
          // Predicated region
          $region95: #{cnn_module_forward.4} parent=93 // pred_check
            _
          $region96: #{cnn_module_forward.4} parent=93 // pred_check_branch
            %617 = sbr.rel (0) target = $region98
          $region97: #{cnn_module_forward.4} parent=93 // pred_region
            // Predicated region
            $region99: #{cnn_module_forward.4} parent=97 // pred_check
              _
            $region100: #{cnn_module_forward.4} parent=97 // pred_check_branch
              %619 = sbr.rel target = $region102
            $region101: #{cnn_module_forward.4} parent=97 // pred_region
              // Predicated region
              $region114: #{cnn_module_forward.4} parent=101 // pred_check
                _
              $region115: #{cnn_module_forward.4} parent=101 // pred_check_branch
                %636 = sbr.rel (0) target = $region117
              $region116: #{cnn_module_forward.4} parent=101 // pred_region
                loop: start=0, step=1, limit=1
                $region118: #{cnn_module_forward.4} parent=116 // loop_pre_header
                  _
                $region119: #{cnn_module_forward.4} parent=116 // loop_header
                  %s638 = sphi 0, %s642
                  %p639 = scmp.ge.s32.totalorder %s638, 1
                  %s643 = sphi %s615, %s615
                  %s644 = sphi %s609, %s609
                $region120: #{cnn_module_forward.4} parent=116 // loop_header_branch
                  %641 = sbr.rel (%p639) target = $region124
                $region121: #{cnn_module_forward.4} parent=116 // loop_body
                  _
                $region122: #{cnn_module_forward.4} parent=116 // loop_footer
                  %s642 = sadd.s32 1, %s638
                $region123: #{cnn_module_forward.4} parent=116 // loop_footer_branch
                  %637 = sbr.rel target = $region119
                $region124: #{cnn_module_forward.4} parent=116 // loop_exit
                  _
                loop: start=0, step=1, limit=1
                $region125: #{cnn_module_forward.4} parent=116 // loop_pre_header
                  _
                $region126: #{cnn_module_forward.4} parent=116 // loop_header
                  %s647 = sphi 0, %s651
                  %p648 = scmp.ge.s32.totalorder %s647, 1
                  %s652 = sphi %s615, %s615
                  %s653 = sphi %s609, %s609
                $region127: #{cnn_module_forward.4} parent=116 // loop_header_branch
                  %650 = sbr.rel (%p648) target = $region131
                $region128: #{cnn_module_forward.4} parent=116 // loop_body
                  %v654 = vld [vmem:[%s652] sm:$0xf]
                  %655 = vst [vmem:[%s653] sm:$0xf] %v654
                  %v656 = vld [vmem:[%s652 + $0x10] sm:$0xf]
                  %657 = vst [vmem:[%s653 + $0x4] sm:$0xf] %v656
                $region129: #{cnn_module_forward.4} parent=116 // loop_footer
                  %s651 = sadd.s32 1, %s647
                $region130: #{cnn_module_forward.4} parent=116 // loop_footer_branch
                  %646 = sbr.rel target = $region126
                $region131: #{cnn_module_forward.4} parent=116 // loop_exit
                  _
              $region117: #{cnn_module_forward.4} parent=101 // pred_fallthru
                _
            $region102: #{cnn_module_forward.4} parent=97 // pred_fallthru
              _
            // Predicated region
            $region103: #{cnn_module_forward.4} parent=97 // pred_check
              _
            $region104: #{cnn_module_forward.4} parent=97 // pred_check_branch
              %621 = sbr.rel (0) target = $region106
            $region105: #{cnn_module_forward.4} parent=97 // pred_region
              loop: start=0, step=1, limit=1
              $region107: #{cnn_module_forward.4} parent=105 // loop_pre_header
                _
              $region108: #{cnn_module_forward.4} parent=105 // loop_header
                %s624 = sphi 0, %s628
                %p625 = scmp.ge.s32.totalorder %s624, 1
                %s629 = sphi %s615, %s615
                %s630 = sphi %s609, %s609
              $region109: #{cnn_module_forward.4} parent=105 // loop_header_branch
                %627 = sbr.rel (%p625) target = $region113
              $region110: #{cnn_module_forward.4} parent=105 // loop_body
                %v631 = vld [vmem:[%s629] sm:$0xf]
                %632 = vst [vmem:[%s630] sm:$0xf] %v631
                %v633 = vld [vmem:[%s629 + $0x10] sm:$0xf]
                %634 = vst [vmem:[%s630 + $0x4] sm:$0xf] %v633
              $region111: #{cnn_module_forward.4} parent=105 // loop_footer
                %s628 = sadd.s32 1, %s624
              $region112: #{cnn_module_forward.4} parent=105 // loop_footer_branch
                %623 = sbr.rel target = $region108
              $region113: #{cnn_module_forward.4} parent=105 // loop_exit
                _
            $region106: #{cnn_module_forward.4} parent=97 // pred_fallthru
              _
          $region98: #{cnn_module_forward.4} parent=93 // pred_fallthru
            _
          %658 = vnop
        $region94: #{cnn_module_forward.4} parent=23 // pred_fallthru
          _
      $region24: #{cnn_module_forward.4} parent=5 // pred_fallthru
        _
      %p659 = scmp.le.s32.totalorder 1, %s10
      %p660 = scmp.lt.s32.totalorder %s10, 3
      %p661 = pnand %p659, %p660
      %p662 = pneg %p661
      // Predicated region
      $region132: #{cnn_module_forward.4} parent=5 // pred_check
        _
      $region133: #{cnn_module_forward.4} parent=5 // pred_check_branch
        %664 = sbr.rel (%p661) target = $region135
      $region134: #{cnn_module_forward.4} parent=5 // pred_region
        %s665 = ssub.s32 %s10, 1
        %s666 = sand.u32 %s37, 1
        %s667 = sand.u32 %s37, 1
        %s668 = smul.addr %s667, 24
        %s669 = scalar_lea.vmem [#allocation3], %s668
        // Predicated region
        $region136: #{cnn_module_forward.4} parent=134 // pred_check
          %p670 = pneg %p50
        $region137: #{cnn_module_forward.4} parent=134 // pred_check_branch
          %672 = sbr.rel (%p670) target = $region139
        $region138: #{cnn_module_forward.4} parent=134 // pred_region
          _
        $region139: #{cnn_module_forward.4} parent=134 // pred_fallthru
          _
        %s673 = sand.u32 %s69, 1
        %s674 = sand.u32 %s69, 1
        %s675 = smul.addr %s674, 8
        %s676 = scalar_lea.vmem [#allocation4], %s675
        // Predicated region
        $region140: #{cnn_module_forward.4} parent=134 // pred_check
          %p677 = pneg %p82
        $region141: #{cnn_module_forward.4} parent=134 // pred_check_branch
          %679 = sbr.rel (%p677) target = $region143
        $region142: #{cnn_module_forward.4} parent=134 // pred_region
          _
        $region143: #{cnn_module_forward.4} parent=134 // pred_fallthru
          _
        %s680 = sand.u32 %s37, 1
        %s681 = sand.u32 %s37, 1
        %s682 = smul.addr %s681, 24
        %s683 = scalar_lea.vmem [#allocation3], %s682
        %p684 = pneg %p50
        %p685 = pneg %p47
        %s686 = sand.u32 %s69, 1
        %s687 = sand.u32 %s69, 1
        %s688 = smul.addr %s687, 8
        %s689 = scalar_lea.vmem [#allocation4], %s688
        %p690 = pneg %p82
        %p691 = pneg %p79
        %p692 = pneg %p103
        %p693 = pneg %p100
        %p694 = pneg %p124
        %p695 = pneg %p121
        %p696 = pneg %p152
        %p697 = pneg %p149
        %s698 = smul.u32 3, %s20
        %p699 = scmp.lt.s32.totalorder %s19, 1
        %s700 = scalar_select %p699, %s19, 1
        %p701 = scmp.lt.s32.totalorder %s698, 2
        %s702 = scalar_select %p701, %s698, 2
        %s703 = smul.addr %s700, 3
        %s704 = sadd.s32 %s702, %s703
        %s705 = smul.addr %s704, 4
        %s706 = scalar_lea.vmem %s4, %s705
        %s707 = smul.u32 3, %s20
        %s708 = ssub.s32 4, %s707
        %p709 = scmp.lt.s32.totalorder %s708, 3
        %s710 = scalar_select %p709, %s708, 3
        %s711 = smul.u32 128, %s710
        %s712 = sadd.s32 %s20, 1
        %s713 = smul.u32 %s712, 3
        %s714 = smul.u32 3, %s20
        %p715 = scmp.lt.s32.totalorder %s19, 1
        %s716 = scalar_select %p715, %s19, 1
        %p717 = scmp.lt.s32.totalorder %s714, 2
        %s718 = scalar_select %p717, %s714, 2
        %s719 = smul.addr %s716, 3
        %s720 = sadd.s32 %s718, %s719
        %s721 = smul.addr %s720, 4
        %s722 = scalar_lea.vmem %s4, %s721
        %s723 = smul.u32 3, %s20
        %v725 = vld [vmem:[%s669] sm:$0xff]
        %v726 = vld [vmem:[%s669 + $0x8] sm:$0xf]
        %v727 = vld [vmem:[%s669 + $0xc] sm:$0x33]
        %v728 = vld [vmem:[%s669 + $0x14] sm:$0x3]
        %729 = vst [vmem:[#allocation2] sm:$0xff] %v725
        %730 = vst [vmem:[#allocation2 + $0x8] sm:$0xf] %v726
        %731 = vst [vmem:[#allocation2 + $0x10] sm:$0x33] %v727
        %732 = vst [vmem:[#allocation2 + $0x18] sm:$0x3] %v728
        %v733 = vld [vmem:[%s676] sm:$0xf]
        %v734 = vld [vmem:[%s676 + $0x4] sm:$0x3]
        %735 = vst [vmem:[#allocation2 + $0xc] sm:$0xf] %v733
        %736 = vst [vmem:[#allocation2 + $0x1c] sm:$0x3] %v734
        %v737 = vld [vmem:[%s2] sm:$0xf]
        %v738 = vld [vmem:[#allocation2] sm:$0xff]
        %v739 = vld [vmem:[#allocation2 + $0x8] sm:$0xf]
        %v740 = vld [vmem:[#allocation2 + $0x10] sm:$0x33]
        %v741 = vld [vmem:[#allocation2 + $0x18] sm:$0x3]
        %s742 = scalar_lea.vmem %s2, 4
        %v743 = vld [vmem:[%s742] sm:$0xf]
        %v744 = vld [vmem:[#allocation2 + $0x8] sm:$0xff]
        %v745 = vld [vmem:[#allocation2 + $0x18] sm:$0x33]
        %v750 = vunpack.c.l.b16 %v738
        %v751 = vunpack.c.h.b16 %v738
        %v752 = vunpack.c.l.b16 %v744
        %v753 = vunpack.c.h.b16 %v744
        %v754 = vunpack.c.l.b16 %v740
        %v755 = vunpack.c.h.b16 %v740
        %v756 = vunpack.c.l.b16 %v745
        %v757 = vunpack.c.h.b16 %v745
        %v758 = vpack.c.b16 %v754, %v750
        %v759 = vpack.c.b16 %v755, %v751
        %v760 = vpack.c.b16 %v756, %v752
        %v761 = vpack.c.b16 %v757, %v753
        %762 = vrot.lane.b32.xlu0 %v758, 127
        %v763 = vpop.permute.xlu0 %762
        %764 = vrot.lane.b32.xlu0 %v759, 127
        %v765 = vpop.permute.xlu0 %764
        %766 = vrot.lane.b32.xlu0 %v760, 127
        %v767 = vpop.permute.xlu0 %766
        %768 = vrot.lane.b32.xlu0 %v761, 127
        %v769 = vpop.permute.xlu0 %768
        %vm770 = vcmask 1039360
        %v771 = vsel %vm770, %v763, %v765
        %v772 = vsel %vm770, %v765, %v767
        %v773 = vsel %vm770, %v767, %v769
        %vm774 = vcmask 97280
        %v776 = vsel %vm774, %v743, 0
        %vm778 = vcmask 1045504
        %v780 = vsel %vm778, %v771, 0
        %v783 = vsel %vm778, %v772, 0
        %v786 = vsel %vm778, %v773, 0
        %788 = vmatprep.subr.bf16.mxu0 %v783
        %789 = vmatpush1.bf16.msra.mxu0 %v780
        %790 = vmatprep.subr.bf16.mxu0 0
        %791 = vmatpush1.bf16.msra.mxu0 0
        %792 = vmatprep.subr.bf16.mxu0 0
        %793 = vmatpush1.bf16.msra.mxu0 0
        %794 = vmatprep.subr.bf16.mxu0 0
        %795 = vmatpush1.bf16.msra.mxu0 0
        %796 = vmatprep.subr.bf16.mxu0 0
        %797 = vmatpush1.bf16.msra.mxu0 0
        %798 = vmatprep.subr.bf16.mxu0 0
        %799 = vmatpush1.bf16.msra.mxu0 0
        %800 = vmatprep.subr.bf16.mxu0 0
        %801 = vmatpush1.bf16.msra.mxu0 0
        %802 = vmatprep.subr.bf16.mxu0 0
        %803 = vmatpush1.bf16.msra.mxu0 0
        %804 = vmatprep.subr.bf16.mxu0 0
        %805 = vmatpush1.bf16.msra.mxu0 0
        %806 = vmatprep.subr.bf16.mxu0 0
        %807 = vmatpush1.bf16.msra.mxu0 0
        %808 = vmatprep.subr.bf16.mxu0 0
        %809 = vmatpush1.bf16.msra.mxu0 0
        %810 = vmatprep.subr.bf16.mxu0 0
        %811 = vmatpush1.bf16.msra.mxu0 0
        %812 = vmatprep.subr.bf16.mxu0 0
        %813 = vmatpush1.bf16.msra.mxu0 0
        %814 = vmatprep.subr.bf16.mxu0 0
        %815 = vmatpush1.bf16.msra.mxu0 0
        %816 = vmatprep.subr.bf16.mxu0 0
        %817 = vmatpush1.bf16.msra.mxu0 0
        %818 = vmatprep.subr.bf16.mxu0 0
        %819 = vmatpush1.bf16.msra.mxu0 0
        %820 = vmatprep.mubr.bf16.mxu0 0
        %821 = vmatmul.mubr.bf16.gmra.mrb[0].mxu0 %v776
        %v822 = vpop.f32.mrb[0].mxu0
        %v823 = vadd.f32 0.0, %v822
        %v824 = vpop.f32.mrb[0].mxu0
        %v825 = vadd.f32 0.0, %v824
        %v826 = vpop.f32.mrb[0].mxu0
        %v827 = vpop.f32.mrb[0].mxu0
        %828 = vdwg.mxu0
        %829 = vmatprep.subr.bf16.mxu0 0
        %830 = vmatpush1.bf16.msra.mxu0 %v786
        %831 = vmatprep.subr.bf16.mxu0 0
        %832 = vmatpush1.bf16.msra.mxu0 0
        %833 = vmatprep.subr.bf16.mxu0 0
        %834 = vmatpush1.bf16.msra.mxu0 0
        %835 = vmatprep.subr.bf16.mxu0 0
        %836 = vmatpush1.bf16.msra.mxu0 0
        %837 = vmatprep.subr.bf16.mxu0 0
        %838 = vmatpush1.bf16.msra.mxu0 0
        %839 = vmatprep.subr.bf16.mxu0 0
        %840 = vmatpush1.bf16.msra.mxu0 0
        %841 = vmatprep.subr.bf16.mxu0 0
        %842 = vmatpush1.bf16.msra.mxu0 0
        %843 = vmatprep.subr.bf16.mxu0 0
        %844 = vmatpush1.bf16.msra.mxu0 0
        %845 = vmatprep.subr.bf16.mxu0 0
        %846 = vmatpush1.bf16.msra.mxu0 0
        %847 = vmatprep.subr.bf16.mxu0 0
        %848 = vmatpush1.bf16.msra.mxu0 0
        %849 = vmatprep.subr.bf16.mxu0 0
        %850 = vmatpush1.bf16.msra.mxu0 0
        %851 = vmatprep.subr.bf16.mxu0 0
        %852 = vmatpush1.bf16.msra.mxu0 0
        %853 = vmatprep.subr.bf16.mxu0 0
        %854 = vmatpush1.bf16.msra.mxu0 0
        %855 = vmatprep.subr.bf16.mxu0 0
        %856 = vmatpush1.bf16.msra.mxu0 0
        %857 = vmatprep.subr.bf16.mxu0 0
        %858 = vmatpush1.bf16.msra.mxu0 0
        %859 = vmatprep.subr.bf16.mxu0 0
        %860 = vmatpush1.bf16.msra.mxu0 0
        %861 = vmatprep.mubr.bf16.mxu0 0
        %862 = vmatmul.mubr.bf16.gmra.mrb[0].mxu0 %v776
        %v863 = vpop.f32.mrb[0].mxu0
        %v864 = vadd.f32 0.0, %v863
        %v865 = vpop.f32.mrb[0].mxu0
        %v866 = vpop.f32.mrb[0].mxu0
        %v867 = vpop.f32.mrb[0].mxu0
        %868 = vdwg.mxu0
        %v871 = vunpack.c.l.b16 %v739
        %v872 = vunpack.c.l.b16 %v741
        %v873 = vpack.c.b16 %v872, %v871
        %v875 = vsel %vm774, %v737, 0
        %v878 = vsel %vm778, %v758, 0
        %v881 = vsel %vm778, %v759, 0
        %v884 = vsel %vm778, %v873, 0
        %886 = vmatprep.subr.bf16.mxu0 %v881
        %887 = vmatpush1.bf16.msra.mxu0 %v878
        %888 = vmatprep.subr.bf16.mxu0 0
        %889 = vmatpush1.bf16.msra.mxu0 0
        %890 = vmatprep.subr.bf16.mxu0 0
        %891 = vmatpush1.bf16.msra.mxu0 0
        %892 = vmatprep.subr.bf16.mxu0 0
        %893 = vmatpush1.bf16.msra.mxu0 0
        %894 = vmatprep.subr.bf16.mxu0 0
        %895 = vmatpush1.bf16.msra.mxu0 0
        %896 = vmatprep.subr.bf16.mxu0 0
        %897 = vmatpush1.bf16.msra.mxu0 0
        %898 = vmatprep.subr.bf16.mxu0 0
        %899 = vmatpush1.bf16.msra.mxu0 0
        %900 = vmatprep.subr.bf16.mxu0 0
        %901 = vmatpush1.bf16.msra.mxu0 0
        %902 = vmatprep.subr.bf16.mxu0 0
        %903 = vmatpush1.bf16.msra.mxu0 0
        %904 = vmatprep.subr.bf16.mxu0 0
        %905 = vmatpush1.bf16.msra.mxu0 0
        %906 = vmatprep.subr.bf16.mxu0 0
        %907 = vmatpush1.bf16.msra.mxu0 0
        %908 = vmatprep.subr.bf16.mxu0 0
        %909 = vmatpush1.bf16.msra.mxu0 0
        %910 = vmatprep.subr.bf16.mxu0 0
        %911 = vmatpush1.bf16.msra.mxu0 0
        %912 = vmatprep.subr.bf16.mxu0 0
        %913 = vmatpush1.bf16.msra.mxu0 0
        %914 = vmatprep.subr.bf16.mxu0 0
        %915 = vmatpush1.bf16.msra.mxu0 0
        %916 = vmatprep.subr.bf16.mxu0 0
        %917 = vmatpush1.bf16.msra.mxu0 0
        %918 = vmatprep.mubr.bf16.mxu0 0
        %919 = vmatmul.mubr.bf16.gmra.mrb[0].mxu0 %v875
        %v920 = vpop.f32.mrb[0].mxu0
        %v921 = vadd.f32 %v823, %v920
        %v922 = vpop.f32.mrb[0].mxu0
        %v923 = vadd.f32 %v825, %v922
        %v924 = vpop.f32.mrb[0].mxu0
        %v925 = vpop.f32.mrb[0].mxu0
        %926 = vdwg.mxu0
        %927 = vmatprep.subr.bf16.mxu0 0
        %928 = vmatpush1.bf16.msra.mxu0 %v884
        %929 = vmatprep.subr.bf16.mxu0 0
        %930 = vmatpush1.bf16.msra.mxu0 0
        %931 = vmatprep.subr.bf16.mxu0 0
        %932 = vmatpush1.bf16.msra.mxu0 0
        %933 = vmatprep.subr.bf16.mxu0 0
        %934 = vmatpush1.bf16.msra.mxu0 0
        %935 = vmatprep.subr.bf16.mxu0 0
        %936 = vmatpush1.bf16.msra.mxu0 0
        %937 = vmatprep.subr.bf16.mxu0 0
        %938 = vmatpush1.bf16.msra.mxu0 0
        %939 = vmatprep.subr.bf16.mxu0 0
        %940 = vmatpush1.bf16.msra.mxu0 0
        %941 = vmatprep.subr.bf16.mxu0 0
        %942 = vmatpush1.bf16.msra.mxu0 0
        %943 = vmatprep.subr.bf16.mxu0 0
        %944 = vmatpush1.bf16.msra.mxu0 0
        %945 = vmatprep.subr.bf16.mxu0 0
        %946 = vmatpush1.bf16.msra.mxu0 0
        %947 = vmatprep.subr.bf16.mxu0 0
        %948 = vmatpush1.bf16.msra.mxu0 0
        %949 = vmatprep.subr.bf16.mxu0 0
        %950 = vmatpush1.bf16.msra.mxu0 0
        %951 = vmatprep.subr.bf16.mxu0 0
        %952 = vmatpush1.bf16.msra.mxu0 0
        %953 = vmatprep.subr.bf16.mxu0 0
        %954 = vmatpush1.bf16.msra.mxu0 0
        %955 = vmatprep.subr.bf16.mxu0 0
        %956 = vmatpush1.bf16.msra.mxu0 0
        %957 = vmatprep.subr.bf16.mxu0 0
        %958 = vmatpush1.bf16.msra.mxu0 0
        %959 = vmatprep.mubr.bf16.mxu0 0
        %960 = vmatmul.mubr.bf16.gmra.mrb[0].mxu0 %v875
        %v961 = vpop.f32.mrb[0].mxu0
        %v962 = vadd.f32 %v864, %v961
        %v963 = vpop.f32.mrb[0].mxu0
        %v964 = vpop.f32.mrb[0].mxu0
        %v965 = vpop.f32.mrb[0].mxu0
        %966 = vdwg.mxu0
        %s967 = scalar_lea.vmem %s2, 8
        %v968 = vld [vmem:[%s967] sm:$0xf]
        %969 = vrot.lane.b32.xlu0 %v758, 111
        %v970 = vpop.permute.xlu0 %969
        %971 = vrot.lane.b32.xlu0 %v759, 111
        %v972 = vpop.permute.xlu0 %971
        %973 = vrot.lane.b32.xlu0 %v760, 111
        %v974 = vpop.permute.xlu0 %973
        %975 = vrot.lane.b32.xlu0 %v761, 111
        %v976 = vpop.permute.xlu0 %975
        %vm977 = vcmask 908288
        %v978 = vsel %vm977, %v970, %v972
        %v979 = vsel %vm977, %v972, %v974
        %v980 = vsel %vm977, %v974, %v976
        %v982 = vsel %vm774, %v968, 0
        %v985 = vsel %vm778, %v978, 0
        %v988 = vsel %vm778, %v979, 0
        %v991 = vsel %vm778, %v980, 0
        %993 = vmatprep.subr.bf16.mxu0 %v988
        %994 = vmatpush1.bf16.msra.mxu0 %v985
        %995 = vmatprep.subr.bf16.mxu0 0
        %996 = vmatpush1.bf16.msra.mxu0 0
        %997 = vmatprep.subr.bf16.mxu0 0
        %998 = vmatpush1.bf16.msra.mxu0 0
        %999 = vmatprep.subr.bf16.mxu0 0
        %1000 = vmatpush1.bf16.msra.mxu0 0
        %1001 = vmatprep.subr.bf16.mxu0 0
        %1002 = vmatpush1.bf16.msra.mxu0 0
        %1003 = vmatprep.subr.bf16.mxu0 0
        %1004 = vmatpush1.bf16.msra.mxu0 0
        %1005 = vmatprep.subr.bf16.mxu0 0
        %1006 = vmatpush1.bf16.msra.mxu0 0
        %1007 = vmatprep.subr.bf16.mxu0 0
        %1008 = vmatpush1.bf16.msra.mxu0 0
        %1009 = vmatprep.subr.bf16.mxu0 0
        %1010 = vmatpush1.bf16.msra.mxu0 0
        %1011 = vmatprep.subr.bf16.mxu0 0
        %1012 = vmatpush1.bf16.msra.mxu0 0
        %1013 = vmatprep.subr.bf16.mxu0 0
        %1014 = vmatpush1.bf16.msra.mxu0 0
        %1015 = vmatprep.subr.bf16.mxu0 0
        %1016 = vmatpush1.bf16.msra.mxu0 0
        %1017 = vmatprep.subr.bf16.mxu0 0
        %1018 = vmatpush1.bf16.msra.mxu0 0
        %1019 = vmatprep.subr.bf16.mxu0 0
        %1020 = vmatpush1.bf16.msra.mxu0 0
        %1021 = vmatprep.subr.bf16.mxu0 0
        %1022 = vmatpush1.bf16.msra.mxu0 0
        %1023 = vmatprep.subr.bf16.mxu0 0
        %1024 = vmatpush1.bf16.msra.mxu0 0
        %1025 = vmatprep.mubr.bf16.mxu0 0
        %1026 = vmatmul.mubr.bf16.gmra.mrb[0].mxu0 %v982
        %v1027 = vpop.f32.mrb[0].mxu0
        %v1028 = vadd.f32 0.0, %v1027
        %v1029 = vpop.f32.mrb[0].mxu0
        %v1030 = vadd.f32 0.0, %v1029
        %v1031 = vpop.f32.mrb[0].mxu0
        %v1032 = vpop.f32.mrb[0].mxu0
        %1033 = vdwg.mxu0
        %1034 = vmatprep.subr.bf16.mxu0 0
        %1035 = vmatpush1.bf16.msra.mxu0 %v991
        %1036 = vmatprep.subr.bf16.mxu0 0
        %1037 = vmatpush1.bf16.msra.mxu0 0
        %1038 = vmatprep.subr.bf16.mxu0 0
        %1039 = vmatpush1.bf16.msra.mxu0 0
        %1040 = vmatprep.subr.bf16.mxu0 0
        %1041 = vmatpush1.bf16.msra.mxu0 0
        %1042 = vmatprep.subr.bf16.mxu0 0
        %1043 = vmatpush1.bf16.msra.mxu0 0
        %1044 = vmatprep.subr.bf16.mxu0 0
        %1045 = vmatpush1.bf16.msra.mxu0 0
        %1046 = vmatprep.subr.bf16.mxu0 0
        %1047 = vmatpush1.bf16.msra.mxu0 0
        %1048 = vmatprep.subr.bf16.mxu0 0
        %1049 = vmatpush1.bf16.msra.mxu0 0
        %1050 = vmatprep.subr.bf16.mxu0 0
        %1051 = vmatpush1.bf16.msra.mxu0 0
        %1052 = vmatprep.subr.bf16.mxu0 0
        %1053 = vmatpush1.bf16.msra.mxu0 0
        %1054 = vmatprep.subr.bf16.mxu0 0
        %1055 = vmatpush1.bf16.msra.mxu0 0
        %1056 = vmatprep.subr.bf16.mxu0 0
        %1057 = vmatpush1.bf16.msra.mxu0 0
        %1058 = vmatprep.subr.bf16.mxu0 0
        %1059 = vmatpush1.bf16.msra.mxu0 0
        %1060 = vmatprep.subr.bf16.mxu0 0
        %1061 = vmatpush1.bf16.msra.mxu0 0
        %1062 = vmatprep.subr.bf16.mxu0 0
        %1063 = vmatpush1.bf16.msra.mxu0 0
        %1064 = vmatprep.subr.bf16.mxu0 0
        %1065 = vmatpush1.bf16.msra.mxu0 0
        %1066 = vmatprep.mubr.bf16.mxu0 0
        %1067 = vmatmul.mubr.bf16.gmra.mrb[0].mxu0 %v982
        %v1068 = vpop.f32.mrb[0].mxu0
        %v1069 = vadd.f32 0.0, %v1068
        %v1070 = vpop.f32.mrb[0].mxu0
        %v1071 = vpop.f32.mrb[0].mxu0
        %v1072 = vpop.f32.mrb[0].mxu0
        %1073 = vdwg.mxu0
        %v1074 = vadd.f32 %v921, %v1028
        %v1075 = vadd.f32 %v923, %v1030
        %v1076 = vadd.f32 %v962, %v1069
        %s1077 = scalar_lea.vmem %s2, 12
        %v1078 = vld [vmem:[%s1077] sm:$0xf]
        %1079 = vrot.lane.b32.xlu0 %v758, 110
        %v1080 = vpop.permute.xlu0 %1079
        %1081 = vrot.lane.b32.xlu0 %v759, 110
        %v1082 = vpop.permute.xlu0 %1081
        %1083 = vrot.lane.b32.xlu0 %v760, 110
        %v1084 = vpop.permute.xlu0 %1083
        %1085 = vrot.lane.b32.xlu0 %v761, 110
        %v1086 = vpop.permute.xlu0 %1085
        %vm1087 = vcmask 900096
        %v1088 = vsel %vm1087, %v1080, %v1082
        %v1089 = vsel %vm1087, %v1082, %v1084
        %v1090 = vsel %vm1087, %v1084, %v1086
        %v1092 = vsel %vm774, %v1078, 0
        %v1095 = vsel %vm778, %v1088, 0
        %v1098 = vsel %vm778, %v1089, 0
        %v1101 = vsel %vm778, %v1090, 0
        %1103 = vmatprep.subr.bf16.mxu0 %v1098
        %1104 = vmatpush1.bf16.msra.mxu0 %v1095
        %1105 = vmatprep.subr.bf16.mxu0 0
        %1106 = vmatpush1.bf16.msra.mxu0 0
        %1107 = vmatprep.subr.bf16.mxu0 0
        %1108 = vmatpush1.bf16.msra.mxu0 0
        %1109 = vmatprep.subr.bf16.mxu0 0
        %1110 = vmatpush1.bf16.msra.mxu0 0
        %1111 = vmatprep.subr.bf16.mxu0 0
        %1112 = vmatpush1.bf16.msra.mxu0 0
        %1113 = vmatprep.subr.bf16.mxu0 0
        %1114 = vmatpush1.bf16.msra.mxu0 0
        %1115 = vmatprep.subr.bf16.mxu0 0
        %1116 = vmatpush1.bf16.msra.mxu0 0
        %1117 = vmatprep.subr.bf16.mxu0 0
        %1118 = vmatpush1.bf16.msra.mxu0 0
        %1119 = vmatprep.subr.bf16.mxu0 0
        %1120 = vmatpush1.bf16.msra.mxu0 0
        %1121 = vmatprep.subr.bf16.mxu0 0
        %1122 = vmatpush1.bf16.msra.mxu0 0
        %1123 = vmatprep.subr.bf16.mxu0 0
        %1124 = vmatpush1.bf16.msra.mxu0 0
        %1125 = vmatprep.subr.bf16.mxu0 0
        %1126 = vmatpush1.bf16.msra.mxu0 0
        %1127 = vmatprep.subr.bf16.mxu0 0
        %1128 = vmatpush1.bf16.msra.mxu0 0
        %1129 = vmatprep.subr.bf16.mxu0 0
        %1130 = vmatpush1.bf16.msra.mxu0 0
        %1131 = vmatprep.subr.bf16.mxu0 0
        %1132 = vmatpush1.bf16.msra.mxu0 0
        %1133 = vmatprep.subr.bf16.mxu0 0
        %1134 = vmatpush1.bf16.msra.mxu0 0
        %1135 = vmatprep.mubr.bf16.mxu0 0
        %1136 = vmatmul.mubr.bf16.gmra.mrb[0].mxu0 %v1092
        %v1137 = vpop.f32.mrb[0].mxu0
        %v1138 = vadd.f32 0.0, %v1137
        %v1139 = vpop.f32.mrb[0].mxu0
        %v1140 = vadd.f32 0.0, %v1139
        %v1141 = vpop.f32.mrb[0].mxu0
        %v1142 = vpop.f32.mrb[0].mxu0
        %1143 = vdwg.mxu0
        %1144 = vmatprep.subr.bf16.mxu0 0
        %1145 = vmatpush1.bf16.msra.mxu0 %v1101
        %1146 = vmatprep.subr.bf16.mxu0 0
        %1147 = vmatpush1.bf16.msra.mxu0 0
        %1148 = vmatprep.subr.bf16.mxu0 0
        %1149 = vmatpush1.bf16.msra.mxu0 0
        %1150 = vmatprep.subr.bf16.mxu0 0
        %1151 = vmatpush1.bf16.msra.mxu0 0
        %1152 = vmatprep.subr.bf16.mxu0 0
        %1153 = vmatpush1.bf16.msra.mxu0 0
        %1154 = vmatprep.subr.bf16.mxu0 0
        %1155 = vmatpush1.bf16.msra.mxu0 0
        %1156 = vmatprep.subr.bf16.mxu0 0
        %1157 = vmatpush1.bf16.msra.mxu0 0
        %1158 = vmatprep.subr.bf16.mxu0 0
        %1159 = vmatpush1.bf16.msra.mxu0 0
        %1160 = vmatprep.subr.bf16.mxu0 0
        %1161 = vmatpush1.bf16.msra.mxu0 0
        %1162 = vmatprep.subr.bf16.mxu0 0
        %1163 = vmatpush1.bf16.msra.mxu0 0
        %1164 = vmatprep.subr.bf16.mxu0 0
        %1165 = vmatpush1.bf16.msra.mxu0 0
        %1166 = vmatprep.subr.bf16.mxu0 0
        %1167 = vmatpush1.bf16.msra.mxu0 0
        %1168 = vmatprep.subr.bf16.mxu0 0
        %1169 = vmatpush1.bf16.msra.mxu0 0
        %1170 = vmatprep.subr.bf16.mxu0 0
        %1171 = vmatpush1.bf16.msra.mxu0 0
        %1172 = vmatprep.subr.bf16.mxu0 0
        %1173 = vmatpush1.bf16.msra.mxu0 0
        %1174 = vmatprep.subr.bf16.mxu0 0
        %1175 = vmatpush1.bf16.msra.mxu0 0
        %1176 = vmatprep.mubr.bf16.mxu0 0
        %1177 = vmatmul.mubr.bf16.gmra.mrb[0].mxu0 %v1092
        %v1178 = vpop.f32.mrb[0].mxu0
        %v1179 = vadd.f32 0.0, %v1178
        %v1180 = vpop.f32.mrb[0].mxu0
        %v1181 = vpop.f32.mrb[0].mxu0
        %v1182 = vpop.f32.mrb[0].mxu0
        %1183 = vdwg.mxu0
        %v1184 = vadd.f32 %v1074, %v1138
        %v1185 = vadd.f32 %v1075, %v1140
        %v1186 = vadd.f32 %v1076, %v1179
        %v1187 = vld [vmem:[%s3] sm:$0xff]
        %1189 = vset.pattern.permute.xlu0 0
        %1190 = vperm.xlu0 %1189, %v1187
        %v1191 = vpop.permute.xlu0 %1190
        %v1193 = vadd.f32 %v1184, %v1191
        %v1194 = vadd.f32 %v1185, %v1191
        %v1195 = vadd.f32 %v1186, %v1191
        %vm1196 = vcmp.ge.f32.partialorder %v1193, 0.0
        %vm1197 = vcmp.ge.f32.partialorder %v1194, 0.0
        %vm1198 = vcmp.ge.f32.partialorder %v1195, 0.0
        %v1199 = vmul.f32 %v1193, 0.2
        %v1200 = vmul.f32 %v1194, 0.2
        %v1201 = vmul.f32 %v1195, 0.2
        %v1202 = vsel %vm1196, %v1193, %v1199
        %v1203 = vsel %vm1197, %v1194, %v1200
        %v1204 = vsel %vm1198, %v1195, %v1201
        %v1205 = vpack.c.bf16 %v1202, %v1202
        %v1206 = vpack.c.bf16 %v1203, %v1203
        %v1207 = vpack.c.bf16 %v1204, %v1204
        %v1211 = vunpack.c.l.b16 %v1205
        %v1212 = vunpack.c.l.b16 %v1206
        %v1213 = vunpack.c.l.b16 %v1207
        %v1214 = vpack.c.b16 %v1212, %v1211
        %v1215 = vpack.c.b16 %v1213, %v1213
        %1218 = vst [vmem:[%s722] sm:$0xff] %v1214
        %1219 = vst [vmem:[%s722 + $0x8] sm:$0xf] %v1215
        %s1220 = smul.u32 3, %s20
        %p1221 = scmp.lt.s32.totalorder %s19, 1
        %s1222 = scalar_select %p1221, %s19, 1
        %p1223 = scmp.lt.s32.totalorder %s1220, 2
        %s1224 = scalar_select %p1223, %s1220, 2
        %s1225 = smul.addr %s1222, 3
        %s1226 = sadd.s32 %s1224, %s1225
        %s1227 = smul.addr %s1226, 4
        %s1228 = scalar_lea.vmem %s4, %s1227
        // Predicated region
        $region144: #{cnn_module_forward.4} parent=134 // pred_check
          %p1229 = pneg %p149
        $region145: #{cnn_module_forward.4} parent=134 // pred_check_branch
          %1231 = sbr.rel (%p1229) target = $region147
        $region146: #{cnn_module_forward.4} parent=134 // pred_region
          %s1232 = smul.u32 3, %s20
        $region147: #{cnn_module_forward.4} parent=134 // pred_fallthru
          _
      $region135: #{cnn_module_forward.4} parent=5 // pred_fallthru
        _
      %p1233 = scmp.le.s32.totalorder 2, %s10
      // Predicated region
      $region148: #{cnn_module_forward.4} parent=5 // pred_check
        %p1234 = pneg %p1233
      $region149: #{cnn_module_forward.4} parent=5 // pred_check_branch
        %1236 = sbr.rel (%p1234) target = $region151
      $region150: #{cnn_module_forward.4} parent=5 // pred_region
        %s1237 = ssub.s32 %s10, 2
        // Predicated region
        $region152: #{cnn_module_forward.4} parent=150 // pred_check
          %p1238 = pneg %p155
        $region153: #{cnn_module_forward.4} parent=150 // pred_check_branch
          %1240 = sbr.rel (%p1238) target = $region155
        $region154: #{cnn_module_forward.4} parent=150 // pred_region
          %s1241 = smul.u32 3, %s22
          %p1242 = scmp.lt.s32.totalorder %s21, 1
          %s1243 = scalar_select %p1242, %s21, 1
          %p1244 = scmp.lt.s32.totalorder %s1241, 2
          %s1245 = scalar_select %p1244, %s1241, 2
          %s1246 = smul.addr %s1243, 3
          %s1247 = sadd.s32 %s1245, %s1246
          %s1248 = smul.addr %s1247, 4
          %s1249 = scalar_lea.vmem %s4, %s1248
        $region155: #{cnn_module_forward.4} parent=150 // pred_fallthru
          _
      $region151: #{cnn_module_forward.4} parent=5 // pred_fallthru
        _
    $region6: #{cnn_module_forward.4} parent=1 // loop_footer
      %s14 = sadd.s32 1, %s10
    $region7: #{cnn_module_forward.4} parent=1 // loop_footer_branch
      %9 = sbr.rel target = $region3
    $region8: #{cnn_module_forward.4} parent=1 // loop_exit
      _

// kernel: cnn_module_forward.5
$region0: #{cnn_module_forward.5}
  #allocation0 [shape = 'u32[]', space=smem, size = 0x4, offset = 0x4, fixed_abs, tag = 'smem constant byte address 0x4 - core index']
  #allocation1 [shape = 'u32[144,128]{1,0:T(1,128)}', space=vmem, size = 0x12000, scoped, tag = 'internal scratch']
  #allocation2 [shape = 'bf16[32,256]{1,0:T(16,128)(2,1)}', space=vmem, size = 0x4000, scoped, tag = 'scratch operand']
  %s0 = inlined_call_operand.vmem [shape: bf16[2,32,256], index: 0, kind: input, shape index: {}, may-alias: {0,1}]
  %s1 = inlined_call_operand.vmem [shape: bf16[2,32,256], index: 1, kind: input, shape index: {}, may-alias: {0,1}]
  %s2 = inlined_call_operand.vmem [shape: bf16[4,16,32], index: 2, kind: input, shape index: {}]
  %s3 = inlined_call_operand.vmem [shape: f32[1,128], index: 3, kind: input, shape index: {}]
  %s4 = inlined_call_operand.vmem [shape: bf16[2,16,128], index: 4, kind: output, shape index: {0}]
  %s5 = inlined_call_operand.vmem [shape: f32[2,16,1], index: 5, kind: output, shape index: {1}]
  %s6 = inlined_call_operand.vmem [shape: f32[2,16,1], index: 6, kind: output, shape index: {2}]
  %7 = xla_tuple %s4, %s5, %s6
  %s8 = sld [smem:[#allocation0]]
  $region147: #{cnn_module_forward.5} parent=0
    _
  %s10 = ssub.s32 1, %s8
  %s11 = scalar_select 0, %s10, %s8
  $region1: #{cnn_module_forward.5} parent=0
    #allocation3 [shape = 'u8[16384]{0}', space=vmem, size = 0x4000, scoped, tag = 'input window, operand 0']
    #allocation4 [shape = 'u8[16384]{0}', space=vmem, size = 0x4000, scoped, tag = 'input window, operand 1']
    loop: start=0, step=1, limit=4
    $region2: #{cnn_module_forward.5} parent=1 // loop_pre_header
      _
    $region3: #{cnn_module_forward.5} parent=1 // loop_header
      %s13 = sphi 0, %s17
      %p14 = scmp.ge.s32.totalorder %s13, 4
      %s20 = sphi 0, %s32
      %s21 = sphi 0, %s28
      %s22 = sphi 0, %s20
      %s23 = sphi 0, %s21
      %s24 = sphi 0, %s22
      %s25 = sphi 0, %s23
      %s37 = sphi 0, %s39
      %s40 = sphi 0, %s37
      %s41 = sphi 0, %s40
      %s57 = sphi 0, %s41
      %s67 = sphi 0, %s69
      %s70 = sphi 0, %s67
      %s71 = sphi 0, %s70
      %s87 = sphi 0, %s71
      %s91 = sphi 0, %s91
      %s93 = sphi 0, %s91
      %s94 = sphi 0, %s93
      %s108 = sphi 0, %s94
      %s114 = sphi 0, %s116
      %s117 = sphi 0, %s114
      %s118 = sphi 0, %s117
      %s134 = sphi 0, %s118
      %s142 = sphi 0, %s144
      %s145 = sphi 0, %s142
      %s146 = sphi 0, %s145
      %s162 = sphi 0, %s146
      %s170 = sphi 0, %s172
      %s173 = sphi 0, %s170
      %s174 = sphi 0, %s173
      %s190 = sphi 0, %s174
      %s198 = sphi 0, %s200
      %s201 = sphi 0, %s198
      %s202 = sphi 0, %s201
      %s218 = sphi 0, %s202
    $region4: #{cnn_module_forward.5} parent=1 // loop_header_branch
      %16 = sbr.rel (%p14) target = $region8
    $region5: #{cnn_module_forward.5} parent=1 // loop_body
      %s18 = ssub.s32 %s13, 1
      %s19 = ssub.s32 %s13, 2
      %s26 = sadd.s32 1, %s21
      %p27 = scmp.ge.s32.totalorder %s26, 1
      %s28 = scalar_select %p27, 0, %s26
      %s29 = sadd.s32 1, %s20
      %s30 = scalar_select %p27, %s29, %s20
      %p31 = scmp.ge.s32.totalorder %s30, 2
      %s32 = scalar_select %p31, 0, %s30
      %s33 = ssub.s32 %s20, %s32
      %s34 = ssub.s32 %s21, %s28
      %s35 = sor.u32 %s33, %s34
      %p36 = scmp.eq.s32.totalorder %s35, 0
      %s38 = sadd.s32 %s37, 1
      %s39 = scalar_select %p36, %s37, %s38
      %p42 = pneg %p36
      %p43 = scmp.eq.s32.totalorder %s13, 1
      %p44 = por %p42, %p43
      %p45 = scmp.ne.s32.totalorder %s37, %s40
      %p46 = scmp.eq.s32.totalorder %s13, 0
      %p47 = por %p45, %p46
      %p48 = scmp.ne.s32.totalorder %s37, %s40
      %p49 = scmp.eq.s32.totalorder %s18, 1
      %p50 = por %p48, %p49
      %p51 = scmp.ne.s32.totalorder %s40, %s41
      %p52 = scmp.eq.s32.totalorder %s18, 0
      %p53 = por %p51, %p52
      %p54 = scmp.ne.s32.totalorder %s40, %s41
      %p55 = scmp.eq.s32.totalorder %s19, 1
      %p56 = por %p54, %p55
      %p58 = scmp.ne.s32.totalorder %s41, %s57
      %p59 = scmp.eq.s32.totalorder %s19, 0
      %p60 = por %p58, %p59
      %s61 = sadd.s32 %s21, 1
      %s62 = sadd.s32 %s28, 1
      %s63 = ssub.s32 %s20, %s32
      %s64 = ssub.s32 %s61, %s62
      %s65 = sor.u32 %s63, %s64
      %p66 = scmp.eq.s32.totalorder %s65, 0
      %s68 = sadd.s32 %s67, 1
      %s69 = scalar_select %p66, %s67, %s68
      %p72 = pneg %p66
      %p73 = scmp.eq.s32.totalorder %s13, 1
      %p74 = por %p72, %p73
      %p75 = scmp.ne.s32.totalorder %s67, %s70
      %p76 = scmp.eq.s32.totalorder %s13, 0
      %p77 = por %p75, %p76
      %p78 = scmp.ne.s32.totalorder %s67, %s70
      %p79 = scmp.eq.s32.totalorder %s18, 1
      %p80 = por %p78, %p79
      %p81 = scmp.ne.s32.totalorder %s70, %s71
      %p82 = scmp.eq.s32.totalorder %s18, 0
      %p83 = por %p81, %p82
      %p84 = scmp.ne.s32.totalorder %s70, %s71
      %p85 = scmp.eq.s32.totalorder %s19, 1
      %p86 = por %p84, %p85
      %p88 = scmp.ne.s32.totalorder %s71, %s87
      %p89 = scmp.eq.s32.totalorder %s19, 0
      %p90 = por %p88, %p89
      %s92 = sadd.s32 %s91, 1
      %p95 = scmp.eq.s32.totalorder %s13, 1
      %p96 = scmp.ne.s32.totalorder %s91, %s93
      %p97 = scmp.eq.s32.totalorder %s13, 0
      %p98 = por %p96, %p97
      %p99 = scmp.ne.s32.totalorder %s91, %s93
      %p100 = scmp.eq.s32.totalorder %s18, 1
      %p101 = por %p99, %p100
      %p102 = scmp.ne.s32.totalorder %s93, %s94
      %p103 = scmp.eq.s32.totalorder %s18, 0
      %p104 = por %p102, %p103
      %p105 = scmp.ne.s32.totalorder %s93, %s94
      %p106 = scmp.eq.s32.totalorder %s19, 1
      %p107 = por %p105, %p106
      %p109 = scmp.ne.s32.totalorder %s94, %s108
      %p110 = scmp.eq.s32.totalorder %s19, 0
      %p111 = por %p109, %p110
      %s112 = ssub.s32 %s21, %s28
      %p113 = scmp.eq.s32.totalorder %s112, 0
      %s115 = sadd.s32 %s114, 1
      %s116 = scalar_select %p113, %s114, %s115
      %p119 = pneg %p113
      %p120 = scmp.eq.s32.totalorder %s13, 1
      %p121 = por %p119, %p120
      %p122 = scmp.ne.s32.totalorder %s114, %s117
      %p123 = scmp.eq.s32.totalorder %s13, 0
      %p124 = por %p122, %p123
      %p125 = scmp.ne.s32.totalorder %s114, %s117
      %p126 = scmp.eq.s32.totalorder %s18, 1
      %p127 = por %p125, %p126
      %p128 = scmp.ne.s32.totalorder %s117, %s118
      %p129 = scmp.eq.s32.totalorder %s18, 0
      %p130 = por %p128, %p129
      %p131 = scmp.ne.s32.totalorder %s117, %s118
      %p132 = scmp.eq.s32.totalorder %s19, 1
      %p133 = por %p131, %p132
      %p135 = scmp.ne.s32.totalorder %s118, %s134
      %p136 = scmp.eq.s32.totalorder %s19, 0
      %p137 = por %p135, %p136
      %s138 = ssub.s32 %s20, %s32
      %s139 = ssub.s32 %s21, %s28
      %s140 = sor.u32 %s138, %s139
      %p141 = scmp.eq.s32.totalorder %s140, 0
      %s143 = sadd.s32 %s142, 1
      %s144 = scalar_select %p141, %s142, %s143
      %p147 = pneg %p141
      %p148 = scmp.eq.s32.totalorder %s13, 1
      %p149 = por %p147, %p148
      %p150 = scmp.ne.s32.totalorder %s142, %s145
      %p151 = scmp.eq.s32.totalorder %s13, 0
      %p152 = por %p150, %p151
      %p153 = scmp.ne.s32.totalorder %s142, %s145
      %p154 = scmp.eq.s32.totalorder %s18, 1
      %p155 = por %p153, %p154
      %p156 = scmp.ne.s32.totalorder %s145, %s146
      %p157 = scmp.eq.s32.totalorder %s18, 0
      %p158 = por %p156, %p157
      %p159 = scmp.ne.s32.totalorder %s145, %s146
      %p160 = scmp.eq.s32.totalorder %s19, 1
      %p161 = por %p159, %p160
      %p163 = scmp.ne.s32.totalorder %s146, %s162
      %p164 = scmp.eq.s32.totalorder %s19, 0
      %p165 = por %p163, %p164
      %s166 = sadd.s32 %s20, %s21
      %s167 = sadd.s32 %s32, %s28
      %s168 = ssub.s32 %s166, %s167
      %p169 = scmp.eq.s32.totalorder %s168, 0
      %s171 = sadd.s32 %s170, 1
      %s172 = scalar_select %p169, %s170, %s171
      %p175 = pneg %p169
      %p176 = scmp.eq.s32.totalorder %s13, 1
      %p177 = por %p175, %p176
      %p178 = scmp.ne.s32.totalorder %s170, %s173
      %p179 = scmp.eq.s32.totalorder %s13, 0
      %p180 = por %p178, %p179
      %p181 = scmp.ne.s32.totalorder %s170, %s173
      %p182 = scmp.eq.s32.totalorder %s18, 1
      %p183 = por %p181, %p182
      %p184 = scmp.ne.s32.totalorder %s173, %s174
      %p185 = scmp.eq.s32.totalorder %s18, 0
      %p186 = por %p184, %p185
      %p187 = scmp.ne.s32.totalorder %s173, %s174
      %p188 = scmp.eq.s32.totalorder %s19, 1
      %p189 = por %p187, %p188
      %p191 = scmp.ne.s32.totalorder %s174, %s190
      %p192 = scmp.eq.s32.totalorder %s19, 0
      %p193 = por %p191, %p192
      %s194 = sadd.s32 %s20, %s21
      %s195 = sadd.s32 %s32, %s28
      %s196 = ssub.s32 %s194, %s195
      %p197 = scmp.eq.s32.totalorder %s196, 0
      %s199 = sadd.s32 %s198, 1
      %s200 = scalar_select %p197, %s198, %s199
      %p203 = pneg %p197
      %p204 = scmp.eq.s32.totalorder %s13, 1
      %p205 = por %p203, %p204
      %p206 = scmp.ne.s32.totalorder %s198, %s201
      %p207 = scmp.eq.s32.totalorder %s13, 0
      %p208 = por %p206, %p207
      %p209 = scmp.ne.s32.totalorder %s198, %s201
      %p210 = scmp.eq.s32.totalorder %s18, 1
      %p211 = por %p209, %p210
      %p212 = scmp.ne.s32.totalorder %s201, %s202
      %p213 = scmp.eq.s32.totalorder %s18, 0
      %p214 = por %p212, %p213
      %p215 = scmp.ne.s32.totalorder %s201, %s202
      %p216 = scmp.eq.s32.totalorder %s19, 1
      %p217 = por %p215, %p216
      %p219 = scmp.ne.s32.totalorder %s202, %s218
      %p220 = scmp.eq.s32.totalorder %s19, 0
      %p221 = por %p219, %p220
      %p222 = scmp.le.s32.totalorder 1, %s13
      %p223 = scmp.lt.s32.totalorder %s13, 3
      %p224 = pnand %p222, %p223
      %p225 = pneg %p224
      // Predicated region
      $region9: #{cnn_module_forward.5} parent=5 // pred_check
        _
      $region10: #{cnn_module_forward.5} parent=5 // pred_check_branch
        %227 = sbr.rel (%p224) target = $region12
      $region11: #{cnn_module_forward.5} parent=5 // pred_region
        %s228 = ssub.s32 %s13, 1
        // Predicated region
        $region13: #{cnn_module_forward.5} parent=11 // pred_check
          %p229 = pneg %p104
        $region14: #{cnn_module_forward.5} parent=11 // pred_check_branch
          %231 = sbr.rel (%p229) target = $region16
        $region15: #{cnn_module_forward.5} parent=11 // pred_region
          _
        $region16: #{cnn_module_forward.5} parent=11 // pred_fallthru
          _
        // Predicated region
        $region17: #{cnn_module_forward.5} parent=11 // pred_check
          %p232 = pneg %p130
        $region18: #{cnn_module_forward.5} parent=11 // pred_check_branch
          %234 = sbr.rel (%p232) target = $region20
        $region19: #{cnn_module_forward.5} parent=11 // pred_region
          %p235 = scmp.lt.s32.totalorder %s23, 0
          %s236 = scalar_select %p235, %s23, 0
          %s237 = scalar_lea.vmem %s3, %s236
        $region20: #{cnn_module_forward.5} parent=11 // pred_fallthru
          _
      $region12: #{cnn_module_forward.5} parent=5 // pred_fallthru
        _
      %p238 = scmp.lt.s32.totalorder %s13, 2
      // Predicated region
      $region21: #{cnn_module_forward.5} parent=5 // pred_check
        %p239 = pneg %p238
      $region22: #{cnn_module_forward.5} parent=5 // pred_check_branch
        %241 = sbr.rel (%p239) target = $region24
      $region23: #{cnn_module_forward.5} parent=5 // pred_region
        // Predicated region
        $region25: #{cnn_module_forward.5} parent=23 // pred_check
          %p242 = pneg %p47
        $region26: #{cnn_module_forward.5} parent=23 // pred_check_branch
          %244 = sbr.rel (%p242) target = $region28
        $region27: #{cnn_module_forward.5} parent=23 // pred_region
          %s245 = sand.u32 %s37, 1
          %s246 = sand.u32 %s37, 1
          %s247 = smul.addr %s246, 16
          %s248 = scalar_lea.vmem [#allocation3], %s247
          %s249 = smul.addr %s20, 8
          %s250 = sadd.s32 %s21, %s249
          %s251 = smul.addr %s250, 4
          %s252 = scalar_lea.vmem %s0, %s251
          // Predicated region
          $region29: #{cnn_module_forward.5} parent=27 // pred_check
            _
          $region30: #{cnn_module_forward.5} parent=27 // pred_check_branch
            %254 = sbr.rel (0) target = $region32
          $region31: #{cnn_module_forward.5} parent=27 // pred_region
            // Predicated region
            $region33: #{cnn_module_forward.5} parent=31 // pred_check
              _
            $region34: #{cnn_module_forward.5} parent=31 // pred_check_branch
              %256 = sbr.rel target = $region36
            $region35: #{cnn_module_forward.5} parent=31 // pred_region
              // Predicated region
              $region48: #{cnn_module_forward.5} parent=35 // pred_check
                _
              $region49: #{cnn_module_forward.5} parent=35 // pred_check_branch
                %277 = sbr.rel (0) target = $region51
              $region50: #{cnn_module_forward.5} parent=35 // pred_region
                loop: start=0, step=1, limit=1
                $region52: #{cnn_module_forward.5} parent=50 // loop_pre_header
                  _
                $region53: #{cnn_module_forward.5} parent=50 // loop_header
                  %s279 = sphi 0, %s283
                  %p280 = scmp.ge.s32.totalorder %s279, 1
                  %s284 = sphi %s252, %s252
                  %s285 = sphi %s248, %s248
                $region54: #{cnn_module_forward.5} parent=50 // loop_header_branch
                  %282 = sbr.rel (%p280) target = $region58
                $region55: #{cnn_module_forward.5} parent=50 // loop_body
                  _
                $region56: #{cnn_module_forward.5} parent=50 // loop_footer
                  %s283 = sadd.s32 1, %s279
                $region57: #{cnn_module_forward.5} parent=50 // loop_footer_branch
                  %278 = sbr.rel target = $region53
                $region58: #{cnn_module_forward.5} parent=50 // loop_exit
                  _
                loop: start=0, step=1, limit=1
                $region59: #{cnn_module_forward.5} parent=50 // loop_pre_header
                  _
                $region60: #{cnn_module_forward.5} parent=50 // loop_header
                  %s288 = sphi 0, %s292
                  %p289 = scmp.ge.s32.totalorder %s288, 1
                  %s293 = sphi %s252, %s252
                  %s294 = sphi %s248, %s248
                $region61: #{cnn_module_forward.5} parent=50 // loop_header_branch
                  %291 = sbr.rel (%p289) target = $region65
                $region62: #{cnn_module_forward.5} parent=50 // loop_body
                  %v295 = vld [vmem:[%s293] sm:$0xf]
                  %296 = vst [vmem:[%s294] sm:$0xf] %v295
                  %v297 = vld [vmem:[%s293 + $0x8] sm:$0xf]
                  %298 = vst [vmem:[%s294 + $0x4] sm:$0xf] %v297
                  %v299 = vld [vmem:[%s293 + $0x10] sm:$0xf]
                  %300 = vst [vmem:[%s294 + $0x8] sm:$0xf] %v299
                  %v301 = vld [vmem:[%s293 + $0x18] sm:$0xf]
                  %302 = vst [vmem:[%s294 + $0xc] sm:$0xf] %v301
                $region63: #{cnn_module_forward.5} parent=50 // loop_footer
                  %s292 = sadd.s32 1, %s288
                $region64: #{cnn_module_forward.5} parent=50 // loop_footer_branch
                  %287 = sbr.rel target = $region60
                $region65: #{cnn_module_forward.5} parent=50 // loop_exit
                  _
              $region51: #{cnn_module_forward.5} parent=35 // pred_fallthru
                _
            $region36: #{cnn_module_forward.5} parent=31 // pred_fallthru
              _
            // Predicated region
            $region37: #{cnn_module_forward.5} parent=31 // pred_check
              _
            $region38: #{cnn_module_forward.5} parent=31 // pred_check_branch
              %258 = sbr.rel (0) target = $region40
            $region39: #{cnn_module_forward.5} parent=31 // pred_region
              loop: start=0, step=1, limit=1
              $region41: #{cnn_module_forward.5} parent=39 // loop_pre_header
                _
              $region42: #{cnn_module_forward.5} parent=39 // loop_header
                %s261 = sphi 0, %s265
                %p262 = scmp.ge.s32.totalorder %s261, 1
                %s266 = sphi %s252, %s252
                %s267 = sphi %s248, %s248
              $region43: #{cnn_module_forward.5} parent=39 // loop_header_branch
                %264 = sbr.rel (%p262) target = $region47
              $region44: #{cnn_module_forward.5} parent=39 // loop_body
                %v268 = vld [vmem:[%s266] sm:$0xf]
                %269 = vst [vmem:[%s267] sm:$0xf] %v268
                %v270 = vld [vmem:[%s266 + $0x8] sm:$0xf]
                %271 = vst [vmem:[%s267 + $0x4] sm:$0xf] %v270
                %v272 = vld [vmem:[%s266 + $0x10] sm:$0xf]
                %273 = vst [vmem:[%s267 + $0x8] sm:$0xf] %v272
                %v274 = vld [vmem:[%s266 + $0x18] sm:$0xf]
                %275 = vst [vmem:[%s267 + $0xc] sm:$0xf] %v274
              $region45: #{cnn_module_forward.5} parent=39 // loop_footer
                %s265 = sadd.s32 1, %s261
              $region46: #{cnn_module_forward.5} parent=39 // loop_footer_branch
                %260 = sbr.rel target = $region42
              $region47: #{cnn_module_forward.5} parent=39 // loop_exit
                _
            $region40: #{cnn_module_forward.5} parent=31 // pred_fallthru
              _
          $region32: #{cnn_module_forward.5} parent=27 // pred_fallthru
            _
          %303 = vnop
        $region28: #{cnn_module_forward.5} parent=23 // pred_fallthru
          _
        // Predicated region
        $region66: #{cnn_module_forward.5} parent=23 // pred_check
          %p304 = pneg %p77
        $region67: #{cnn_module_forward.5} parent=23 // pred_check_branch
          %306 = sbr.rel (%p304) target = $region69
        $region68: #{cnn_module_forward.5} parent=23 // pred_region
          %s307 = sand.u32 %s67, 1
          %s308 = sand.u32 %s67, 1
          %s309 = smul.addr %s308, 16
          %s310 = scalar_lea.vmem [#allocation4], %s309
          %s311 = sadd.s32 %s21, 1
          %s312 = smul.addr %s20, 8
          %s313 = sadd.s32 %s311, %s312
          %s314 = smul.addr %s313, 4
          %s315 = scalar_lea.vmem %s1, %s314
          // Predicated region
          $region70: #{cnn_module_forward.5} parent=68 // pred_check
            _
          $region71: #{cnn_module_forward.5} parent=68 // pred_check_branch
            %317 = sbr.rel (0) target = $region73
          $region72: #{cnn_module_forward.5} parent=68 // pred_region
            // Predicated region
            $region74: #{cnn_module_forward.5} parent=72 // pred_check
              _
            $region75: #{cnn_module_forward.5} parent=72 // pred_check_branch
              %319 = sbr.rel target = $region77
            $region76: #{cnn_module_forward.5} parent=72 // pred_region
              // Predicated region
              $region89: #{cnn_module_forward.5} parent=76 // pred_check
                _
              $region90: #{cnn_module_forward.5} parent=76 // pred_check_branch
                %340 = sbr.rel (0) target = $region92
              $region91: #{cnn_module_forward.5} parent=76 // pred_region
                loop: start=0, step=1, limit=1
                $region93: #{cnn_module_forward.5} parent=91 // loop_pre_header
                  _
                $region94: #{cnn_module_forward.5} parent=91 // loop_header
                  %s342 = sphi 0, %s346
                  %p343 = scmp.ge.s32.totalorder %s342, 1
                  %s347 = sphi %s315, %s315
                  %s348 = sphi %s310, %s310
                $region95: #{cnn_module_forward.5} parent=91 // loop_header_branch
                  %345 = sbr.rel (%p343) target = $region99
                $region96: #{cnn_module_forward.5} parent=91 // loop_body
                  _
                $region97: #{cnn_module_forward.5} parent=91 // loop_footer
                  %s346 = sadd.s32 1, %s342
                $region98: #{cnn_module_forward.5} parent=91 // loop_footer_branch
                  %341 = sbr.rel target = $region94
                $region99: #{cnn_module_forward.5} parent=91 // loop_exit
                  _
                loop: start=0, step=1, limit=1
                $region100: #{cnn_module_forward.5} parent=91 // loop_pre_header
                  _
                $region101: #{cnn_module_forward.5} parent=91 // loop_header
                  %s351 = sphi 0, %s355
                  %p352 = scmp.ge.s32.totalorder %s351, 1
                  %s356 = sphi %s315, %s315
                  %s357 = sphi %s310, %s310
                $region102: #{cnn_module_forward.5} parent=91 // loop_header_branch
                  %354 = sbr.rel (%p352) target = $region106
                $region103: #{cnn_module_forward.5} parent=91 // loop_body
                  %v358 = vld [vmem:[%s356] sm:$0xf]
                  %359 = vst [vmem:[%s357] sm:$0xf] %v358
                  %v360 = vld [vmem:[%s356 + $0x8] sm:$0xf]
                  %361 = vst [vmem:[%s357 + $0x4] sm:$0xf] %v360
                  %v362 = vld [vmem:[%s356 + $0x10] sm:$0xf]
                  %363 = vst [vmem:[%s357 + $0x8] sm:$0xf] %v362
                  %v364 = vld [vmem:[%s356 + $0x18] sm:$0xf]
                  %365 = vst [vmem:[%s357 + $0xc] sm:$0xf] %v364
                $region104: #{cnn_module_forward.5} parent=91 // loop_footer
                  %s355 = sadd.s32 1, %s351
                $region105: #{cnn_module_forward.5} parent=91 // loop_footer_branch
                  %350 = sbr.rel target = $region101
                $region106: #{cnn_module_forward.5} parent=91 // loop_exit
                  _
              $region92: #{cnn_module_forward.5} parent=76 // pred_fallthru
                _
            $region77: #{cnn_module_forward.5} parent=72 // pred_fallthru
              _
            // Predicated region
            $region78: #{cnn_module_forward.5} parent=72 // pred_check
              _
            $region79: #{cnn_module_forward.5} parent=72 // pred_check_branch
              %321 = sbr.rel (0) target = $region81
            $region80: #{cnn_module_forward.5} parent=72 // pred_region
              loop: start=0, step=1, limit=1
              $region82: #{cnn_module_forward.5} parent=80 // loop_pre_header
                _
              $region83: #{cnn_module_forward.5} parent=80 // loop_header
                %s324 = sphi 0, %s328
                %p325 = scmp.ge.s32.totalorder %s324, 1
                %s329 = sphi %s315, %s315
                %s330 = sphi %s310, %s310
              $region84: #{cnn_module_forward.5} parent=80 // loop_header_branch
                %327 = sbr.rel (%p325) target = $region88
              $region85: #{cnn_module_forward.5} parent=80 // loop_body
                %v331 = vld [vmem:[%s329] sm:$0xf]
                %332 = vst [vmem:[%s330] sm:$0xf] %v331
                %v333 = vld [vmem:[%s329 + $0x8] sm:$0xf]
                %334 = vst [vmem:[%s330 + $0x4] sm:$0xf] %v333
                %v335 = vld [vmem:[%s329 + $0x10] sm:$0xf]
                %336 = vst [vmem:[%s330 + $0x8] sm:$0xf] %v335
                %v337 = vld [vmem:[%s329 + $0x18] sm:$0xf]
                %338 = vst [vmem:[%s330 + $0xc] sm:$0xf] %v337
              $region86: #{cnn_module_forward.5} parent=80 // loop_footer
                %s328 = sadd.s32 1, %s324
              $region87: #{cnn_module_forward.5} parent=80 // loop_footer_branch
                %323 = sbr.rel target = $region83
              $region88: #{cnn_module_forward.5} parent=80 // loop_exit
                _
            $region81: #{cnn_module_forward.5} parent=72 // pred_fallthru
              _
          $region73: #{cnn_module_forward.5} parent=68 // pred_fallthru
            _
          %366 = vnop
        $region69: #{cnn_module_forward.5} parent=23 // pred_fallthru
          _
      $region24: #{cnn_module_forward.5} parent=5 // pred_fallthru
        _
      %p367 = scmp.le.s32.totalorder 1, %s13
      %p368 = scmp.lt.s32.totalorder %s13, 3
      %p369 = pnand %p367, %p368
      %p370 = pneg %p369
      // Predicated region
      $region107: #{cnn_module_forward.5} parent=5 // pred_check
        _
      $region108: #{cnn_module_forward.5} parent=5 // pred_check_branch
        %372 = sbr.rel (%p369) target = $region110
      $region109: #{cnn_module_forward.5} parent=5 // pred_region
        %s373 = ssub.s32 %s13, 1
        %s374 = sand.u32 %s40, 1
        %s375 = sand.u32 %s40, 1
        %s376 = smul.addr %s375, 16
        %s377 = scalar_lea.vmem [#allocation3], %s376
        // Predicated region
        $region111: #{cnn_module_forward.5} parent=109 // pred_check
          %p378 = pneg %p53
        $region112: #{cnn_module_forward.5} parent=109 // pred_check_branch
          %380 = sbr.rel (%p378) target = $region114
        $region113: #{cnn_module_forward.5} parent=109 // pred_region
          _
        $region114: #{cnn_module_forward.5} parent=109 // pred_fallthru
          _
        %s381 = sand.u32 %s70, 1
        %s382 = sand.u32 %s70, 1
        %s383 = smul.addr %s382, 16
        %s384 = scalar_lea.vmem [#allocation4], %s383
        // Predicated region
        $region115: #{cnn_module_forward.5} parent=109 // pred_check
          %p385 = pneg %p83
        $region116: #{cnn_module_forward.5} parent=109 // pred_check_branch
          %387 = sbr.rel (%p385) target = $region118
        $region117: #{cnn_module_forward.5} parent=109 // pred_region
          _
        $region118: #{cnn_module_forward.5} parent=109 // pred_fallthru
          _
        %s388 = sand.u32 %s40, 1
        %s389 = sand.u32 %s40, 1
        %s390 = smul.addr %s389, 16
        %s391 = scalar_lea.vmem [#allocation3], %s390
        %p392 = pneg %p53
        %p393 = pneg %p50
        %s394 = sand.u32 %s70, 1
        %s395 = sand.u32 %s70, 1
        %s396 = smul.addr %s395, 16
        %s397 = scalar_lea.vmem [#allocation4], %s396
        %p398 = pneg %p83
        %p399 = pneg %p80
        %p400 = pneg %p104
        %p401 = pneg %p101
        %p402 = scmp.lt.s32.totalorder %s23, 0
        %s403 = scalar_select %p402, %s23, 0
        %s404 = scalar_lea.vmem %s3, %s403
        %p405 = pneg %p130
        %p406 = pneg %p127
        %p407 = pneg %p158
        %p408 = pneg %p155
        %p409 = scmp.lt.s32.totalorder %s22, 1
        %s410 = scalar_select %p409, %s22, 1
        %p411 = scmp.lt.s32.totalorder %s23, 0
        %s412 = scalar_select %p411, %s23, 0
        %s413 = smul.addr %s410, 2
        %s414 = sadd.s32 %s412, %s413
        %s415 = smul.addr %s414, 4
        %s416 = scalar_lea.vmem %s4, %s415
        %p417 = pneg %p186
        %p418 = pneg %p183
        %s419 = sadd.s32 %s22, %s23
        %p420 = scmp.lt.s32.totalorder %s419, 1
        %s421 = scalar_select %p420, %s419, 1
        %s422 = smul.addr %s421, 2
        %s423 = smul.addr %s422, 8
        %s424 = scalar_lea.vmem %s5, %s423
        %p425 = pneg %p214
        %p426 = pneg %p211
        %s427 = sadd.s32 %s22, %s23
        %p428 = scmp.lt.s32.totalorder %s427, 1
        %s429 = scalar_select %p428, %s427, 1
        %s430 = smul.addr %s429, 2
        %s431 = smul.addr %s430, 8
        %s432 = scalar_lea.vmem %s6, %s431
        %s433 = sadd.s32 %s23, 1
        %p434 = scmp.lt.s32.totalorder %s23, 0
        %s435 = scalar_select %p434, %s23, 0
        %s436 = scalar_lea.vmem %s3, %s435
        %p437 = scmp.lt.s32.totalorder %s22, 1
        %s438 = scalar_select %p437, %s22, 1
        %p439 = scmp.lt.s32.totalorder %s23, 0
        %s440 = scalar_select %p439, %s23, 0
        %s441 = smul.addr %s438, 2
        %s442 = sadd.s32 %s440, %s441
        %s443 = smul.addr %s442, 4
        %s444 = scalar_lea.vmem %s4, %s443
        %s445 = sadd.s32 %s22, %s23
        %p446 = scmp.lt.s32.totalorder %s445, 1
        %s447 = scalar_select %p446, %s445, 1
        %s448 = smul.addr %s447, 2
        %s449 = smul.addr %s448, 8
        %s450 = scalar_lea.vmem %s5, %s449
        %s451 = sadd.s32 %s22, %s23
        %s452 = sadd.s32 %s22, %s23
        %p453 = scmp.lt.s32.totalorder %s452, 1
        %s454 = scalar_select %p453, %s452, 1
        %s455 = smul.addr %s454, 2
        %s456 = smul.addr %s455, 8
        %s457 = scalar_lea.vmem %s6, %s456
        %s458 = sadd.s32 %s22, %s23
        %v460 = vld [vmem:[%s377] sm:$0xf]
        %v461 = vld [vmem:[%s377 + $0x4] sm:$0xf]
        %v462 = vld [vmem:[%s377 + $0x8] sm:$0xf]
        %v463 = vld [vmem:[%s377 + $0xc] sm:$0xf]
        %v468 = vunpack.c.l.b16 %v460
        %v469 = vunpack.c.l.b16 %v461
        %v470 = vunpack.c.l.b16 %v462
        %v471 = vunpack.c.l.b16 %v463
        %v472 = vpack.c.b16 %v469, %v468
        %v473 = vpack.c.b16 %v471, %v470
        %476 = vst [vmem:[#allocation2] sm:$0xff] %v472
        %477 = vst [vmem:[#allocation2 + $0x10] sm:$0xff] %v473
        %v478 = vld [vmem:[%s384] sm:$0xf]
        %v479 = vld [vmem:[%s384 + $0x4] sm:$0xf]
        %v480 = vld [vmem:[%s384 + $0x8] sm:$0xf]
        %v481 = vld [vmem:[%s384 + $0xc] sm:$0xf]
        %v486 = vunpack.c.l.b16 %v478
        %v487 = vunpack.c.l.b16 %v479
        %v488 = vunpack.c.l.b16 %v480
        %v489 = vunpack.c.l.b16 %v481
        %v490 = vpack.c.b16 %v487, %v486
        %v491 = vpack.c.b16 %v489, %v488
        %494 = vst [vmem:[#allocation2 + $0x8] sm:$0xff] %v490
        %495 = vst [vmem:[#allocation2 + $0x18] sm:$0xff] %v491
        %v496 = vld [vmem:[%s2] sm:$0xf]
        %v497 = vld [vmem:[%s2 + $0x4] sm:$0xf]
        %v498 = vld [vmem:[#allocation2] sm:$0xff]
        %v499 = vld [vmem:[#allocation2 + $0x10] sm:$0xff]
        %s500 = scalar_lea.vmem %s2, 8
        %v501 = vld [vmem:[%s500] sm:$0xf]
        %v502 = vld [vmem:[%s500 + $0x4] sm:$0xf]
        %v503 = vld [vmem:[#allocation2] sm:$0xff]
        %v504 = vld [vmem:[#allocation2 + $0x8] sm:$0xff]
        %v505 = vld [vmem:[#allocation2 + $0x10] sm:$0xff]
        %v506 = vld [vmem:[#allocation2 + $0x18] sm:$0xff]
        %v509 = vunpack.c.l.b16 %v501
        %v510 = vunpack.c.l.b16 %v502
        %v511 = vpack.c.b16 %v510, %v509
        %516 = vrot.lane.b32.xlu0 %v503, 127
        %v517 = vpop.permute.xlu0 %516
        %518 = vrot.lane.b32.xlu0 %v504, 127
        %v519 = vpop.permute.xlu0 %518
        %520 = vrot.lane.b32.xlu0 %v505, 127
        %v521 = vpop.permute.xlu0 %520
        %522 = vrot.lane.b32.xlu0 %v506, 127
        %v523 = vpop.permute.xlu0 %522
        %vm524 = vcmask 1039360
        %v525 = vsel %vm524, %v517, %v519
        %v526 = vsel %vm524, %v521, %v523
        %vm529 = vcmask 261120
        %v531 = vsel %vm529, %v511, 0
        %533 = vmatprep.subr.bf16.mxu0 0
        %534 = vmatpush1.bf16.msra.mxu0 %v525
        %535 = vmatprep.subr.bf16.mxu0 0
        %536 = vmatpush1.bf16.msra.mxu0 %v526
        %537 = vmatprep.subr.bf16.mxu0 0
        %538 = vmatpush1.bf16.msra.mxu0 0
        %539 = vmatprep.subr.bf16.mxu0 0
        %540 = vmatpush1.bf16.msra.mxu0 0
        %541 = vmatprep.subr.bf16.mxu0 0
        %542 = vmatpush1.bf16.msra.mxu0 0
        %543 = vmatprep.subr.bf16.mxu0 0
        %544 = vmatpush1.bf16.msra.mxu0 0
        %545 = vmatprep.subr.bf16.mxu0 0
        %546 = vmatpush1.bf16.msra.mxu0 0
        %547 = vmatprep.subr.bf16.mxu0 0
        %548 = vmatpush1.bf16.msra.mxu0 0
        %549 = vmatprep.subr.bf16.mxu0 0
        %550 = vmatpush1.bf16.msra.mxu0 0
        %551 = vmatprep.subr.bf16.mxu0 0
        %552 = vmatpush1.bf16.msra.mxu0 0
        %553 = vmatprep.subr.bf16.mxu0 0
        %554 = vmatpush1.bf16.msra.mxu0 0
        %555 = vmatprep.subr.bf16.mxu0 0
        %556 = vmatpush1.bf16.msra.mxu0 0
        %557 = vmatprep.subr.bf16.mxu0 0
        %558 = vmatpush1.bf16.msra.mxu0 0
        %559 = vmatprep.subr.bf16.mxu0 0
        %560 = vmatpush1.bf16.msra.mxu0 0
        %561 = vmatprep.subr.bf16.mxu0 0
        %562 = vmatpush1.bf16.msra.mxu0 0
        %563 = vmatprep.subr.bf16.mxu0 0
        %564 = vmatpush1.bf16.msra.mxu0 0
        %565 = vmatprep.mubr.bf16.mxu0 0
        %566 = vmatmul.mubr.bf16.gmra.mrb[0].mxu0 %v531
        %v567 = vpop.f32.mrb[0].mxu0
        %v568 = vadd.f32 0.0, %v567
        %v569 = vpop.f32.mrb[0].mxu0
        %v570 = vpop.f32.mrb[0].mxu0
        %v571 = vadd.f32 0.0, %v570
        %v572 = vpop.f32.mrb[0].mxu0
        %573 = vdwg.mxu0
        %v576 = vunpack.c.l.b16 %v496
        %v577 = vunpack.c.l.b16 %v497
        %v578 = vpack.c.b16 %v577, %v576
        %v580 = vsel %vm529, %v578, 0
        %582 = vmatprep.subr.bf16.mxu0 0
        %583 = vmatpush1.bf16.msra.mxu0 %v498
        %584 = vmatprep.subr.bf16.mxu0 0
        %585 = vmatpush1.bf16.msra.mxu0 %v499
        %586 = vmatprep.subr.bf16.mxu0 0
        %587 = vmatpush1.bf16.msra.mxu0 0
        %588 = vmatprep.subr.bf16.mxu0 0
        %589 = vmatpush1.bf16.msra.mxu0 0
        %590 = vmatprep.subr.bf16.mxu0 0
        %591 = vmatpush1.bf16.msra.mxu0 0
        %592 = vmatprep.subr.bf16.mxu0 0
        %593 = vmatpush1.bf16.msra.mxu0 0
        %594 = vmatprep.subr.bf16.mxu0 0
        %595 = vmatpush1.bf16.msra.mxu0 0
        %596 = vmatprep.subr.bf16.mxu0 0
        %597 = vmatpush1.bf16.msra.mxu0 0
        %598 = vmatprep.subr.bf16.mxu0 0
        %599 = vmatpush1.bf16.msra.mxu0 0
        %600 = vmatprep.subr.bf16.mxu0 0
        %601 = vmatpush1.bf16.msra.mxu0 0
        %602 = vmatprep.subr.bf16.mxu0 0
        %603 = vmatpush1.bf16.msra.mxu0 0
        %604 = vmatprep.subr.bf16.mxu0 0
        %605 = vmatpush1.bf16.msra.mxu0 0
        %606 = vmatprep.subr.bf16.mxu0 0
        %607 = vmatpush1.bf16.msra.mxu0 0
        %608 = vmatprep.subr.bf16.mxu0 0
        %609 = vmatpush1.bf16.msra.mxu0 0
        %610 = vmatprep.subr.bf16.mxu0 0
        %611 = vmatpush1.bf16.msra.mxu0 0
        %612 = vmatprep.subr.bf16.mxu0 0
        %613 = vmatpush1.bf16.msra.mxu0 0
        %614 = vmatprep.mubr.bf16.mxu0 0
        %615 = vmatmul.mubr.bf16.gmra.mrb[0].mxu0 %v580
        %v616 = vpop.f32.mrb[0].mxu0
        %v617 = vadd.f32 %v568, %v616
        %v618 = vpop.f32.mrb[0].mxu0
        %v619 = vpop.f32.mrb[0].mxu0
        %v620 = vadd.f32 %v571, %v619
        %v621 = vpop.f32.mrb[0].mxu0
        %622 = vdwg.mxu0
        %s623 = scalar_lea.vmem %s2, 16
        %v624 = vld [vmem:[%s623] sm:$0xf]
        %v625 = vld [vmem:[%s623 + $0x4] sm:$0xf]
        %v628 = vunpack.c.l.b16 %v624
        %v629 = vunpack.c.l.b16 %v625
        %v630 = vpack.c.b16 %v629, %v628
        %631 = vrot.lane.b32.xlu0 %v503, 119
        %v632 = vpop.permute.xlu0 %631
        %633 = vrot.lane.b32.xlu0 %v504, 119
        %v634 = vpop.permute.xlu0 %633
        %635 = vrot.lane.b32.xlu0 %v505, 119
        %v636 = vpop.permute.xlu0 %635
        %637 = vrot.lane.b32.xlu0 %v506, 119
        %v638 = vpop.permute.xlu0 %637
        %vm639 = vcmask 973824
        %v640 = vsel %vm639, %v632, %v634
        %v641 = vsel %vm639, %v636, %v638
        %v645 = vsel %vm529, %v630, 0
        %647 = vmatprep.subr.bf16.mxu0 0
        %648 = vmatpush1.bf16.msra.mxu0 %v640
        %649 = vmatprep.subr.bf16.mxu0 0
        %650 = vmatpush1.bf16.msra.mxu0 %v641
        %651 = vmatprep.subr.bf16.mxu0 0
        %652 = vmatpush1.bf16.msra.mxu0 0
        %653 = vmatprep.subr.bf16.mxu0 0
        %654 = vmatpush1.bf16.msra.mxu0 0
        %655 = vmatprep.subr.bf16.mxu0 0
        %656 = vmatpush1.bf16.msra.mxu0 0
        %657 = vmatprep.subr.bf16.mxu0 0
        %658 = vmatpush1.bf16.msra.mxu0 0
        %659 = vmatprep.subr.bf16.mxu0 0
        %660 = vmatpush1.bf16.msra.mxu0 0
        %661 = vmatprep.subr.bf16.mxu0 0
        %662 = vmatpush1.bf16.msra.mxu0 0
        %663 = vmatprep.subr.bf16.mxu0 0
        %664 = vmatpush1.bf16.msra.mxu0 0
        %665 = vmatprep.subr.bf16.mxu0 0
        %666 = vmatpush1.bf16.msra.mxu0 0
        %667 = vmatprep.subr.bf16.mxu0 0
        %668 = vmatpush1.bf16.msra.mxu0 0
        %669 = vmatprep.subr.bf16.mxu0 0
        %670 = vmatpush1.bf16.msra.mxu0 0
        %671 = vmatprep.subr.bf16.mxu0 0
        %672 = vmatpush1.bf16.msra.mxu0 0
        %673 = vmatprep.subr.bf16.mxu0 0
        %674 = vmatpush1.bf16.msra.mxu0 0
        %675 = vmatprep.subr.bf16.mxu0 0
        %676 = vmatpush1.bf16.msra.mxu0 0
        %677 = vmatprep.subr.bf16.mxu0 0
        %678 = vmatpush1.bf16.msra.mxu0 0
        %679 = vmatprep.mubr.bf16.mxu0 0
        %680 = vmatmul.mubr.bf16.gmra.mrb[0].mxu0 %v645
        %v681 = vpop.f32.mrb[0].mxu0
        %v682 = vadd.f32 0.0, %v681
        %v683 = vpop.f32.mrb[0].mxu0
        %v684 = vpop.f32.mrb[0].mxu0
        %v685 = vadd.f32 0.0, %v684
        %v686 = vpop.f32.mrb[0].mxu0
        %687 = vdwg.mxu0
        %v688 = vadd.f32 %v617, %v682
        %v689 = vadd.f32 %v620, %v685
        %s690 = scalar_lea.vmem %s2, 24
        %v691 = vld [vmem:[%s690] sm:$0xf]
        %v692 = vld [vmem:[%s690 + $0x4] sm:$0xf]
        %v695 = vunpack.c.l.b16 %v691
        %v696 = vunpack.c.l.b16 %v692
        %v697 = vpack.c.b16 %v696, %v695
        %698 = vrot.lane.b32.xlu0 %v503, 118
        %v699 = vpop.permute.xlu0 %698
        %700 = vrot.lane.b32.xlu0 %v504, 118
        %v701 = vpop.permute.xlu0 %700
        %702 = vrot.lane.b32.xlu0 %v505, 118
        %v703 = vpop.permute.xlu0 %702
        %704 = vrot.lane.b32.xlu0 %v506, 118
        %v705 = vpop.permute.xlu0 %704
        %vm706 = vcmask 965632
        %v707 = vsel %vm706, %v699, %v701
        %v708 = vsel %vm706, %v703, %v705
        %v712 = vsel %vm529, %v697, 0
        %714 = vmatprep.subr.bf16.mxu0 0
        %715 = vmatpush1.bf16.msra.mxu0 %v707
        %716 = vmatprep.subr.bf16.mxu0 0
        %717 = vmatpush1.bf16.msra.mxu0 %v708
        %718 = vmatprep.subr.bf16.mxu0 0
        %719 = vmatpush1.bf16.msra.mxu0 0
        %720 = vmatprep.subr.bf16.mxu0 0
        %721 = vmatpush1.bf16.msra.mxu0 0
        %722 = vmatprep.subr.bf16.mxu0 0
        %723 = vmatpush1.bf16.msra.mxu0 0
        %724 = vmatprep.subr.bf16.mxu0 0
        %725 = vmatpush1.bf16.msra.mxu0 0
        %726 = vmatprep.subr.bf16.mxu0 0
        %727 = vmatpush1.bf16.msra.mxu0 0
        %728 = vmatprep.subr.bf16.mxu0 0
        %729 = vmatpush1.bf16.msra.mxu0 0
        %730 = vmatprep.subr.bf16.mxu0 0
        %731 = vmatpush1.bf16.msra.mxu0 0
        %732 = vmatprep.subr.bf16.mxu0 0
        %733 = vmatpush1.bf16.msra.mxu0 0
        %734 = vmatprep.subr.bf16.mxu0 0
        %735 = vmatpush1.bf16.msra.mxu0 0
        %736 = vmatprep.subr.bf16.mxu0 0
        %737 = vmatpush1.bf16.msra.mxu0 0
        %738 = vmatprep.subr.bf16.mxu0 0
        %739 = vmatpush1.bf16.msra.mxu0 0
        %740 = vmatprep.subr.bf16.mxu0 0
        %741 = vmatpush1.bf16.msra.mxu0 0
        %742 = vmatprep.subr.bf16.mxu0 0
        %743 = vmatpush1.bf16.msra.mxu0 0
        %744 = vmatprep.subr.bf16.mxu0 0
        %745 = vmatpush1.bf16.msra.mxu0 0
        %746 = vmatprep.mubr.bf16.mxu0 0
        %747 = vmatmul.mubr.bf16.gmra.mrb[0].mxu0 %v712
        %v748 = vpop.f32.mrb[0].mxu0
        %v749 = vadd.f32 0.0, %v748
        %v750 = vpop.f32.mrb[0].mxu0
        %v751 = vpop.f32.mrb[0].mxu0
        %v752 = vadd.f32 0.0, %v751
        %v753 = vpop.f32.mrb[0].mxu0
        %754 = vdwg.mxu0
        %v755 = vadd.f32 %v688, %v749
        %v756 = vadd.f32 %v689, %v752
        %v757 = vpack.c.bf16 %v756, %v755
        %v759 = vunpack.c.l.b16 %v757
        %v760 = vunpack.c.h.b16 %v757
        %v761 = vpack.c.b16 %v759, %v759
        %v762 = vpack.c.b16 %v760, %v760
        %765 = vst [vmem:[%s444] sm:$0xf] %v761
        %766 = vst [vmem:[%s444 + $0x4] sm:$0xf] %v762
        %v767 = vld [vmem:[%s436] sm:$0x1]
        %v769 = vlaneseq
        %v770 = vshrl.u32 %v769, 7
        %v771 = vsub.s32 0, %v770
        %v772 = vrot.slane %v767, %v771
        %v774 = vmul.f32 %v755, %v772
        %v775 = vmul.f32 %v756, %v772
        %776 = vadd.xlane.f32.xlu0 %v774
        %v777 = vpop.xlane.xlu0 %776
        %778 = vadd.xlane.f32.xlu0 %v775
        %v779 = vpop.xlane.xlu0 %778
        %vm780 = vcmask 7168
        %781 = vst.msk [vmem:[%s450] sm:$0xff] %vm780, %v777
        %782 = vst.msk [vmem:[%s450 + $0x8] sm:$0xff] %vm780, %v779
        %v783 = vmul.f32 %v774, %v755
        %v784 = vmul.f32 %v775, %v756
        %785 = vadd.xlane.f32.xlu0 %v783
        %v786 = vpop.xlane.xlu0 %785
        %787 = vadd.xlane.f32.xlu0 %v784
        %v788 = vpop.xlane.xlu0 %787
        %789 = vst.msk [vmem:[%s457] sm:$0xff] %vm780, %v786
        %790 = vst.msk [vmem:[%s457 + $0x8] sm:$0xff] %vm780, %v788
        %p791 = scmp.lt.s32.totalorder %s22, 1
        %s792 = scalar_select %p791, %s22, 1
        %p793 = scmp.lt.s32.totalorder %s23, 0
        %s794 = scalar_select %p793, %s23, 0
        %s795 = smul.addr %s792, 2
        %s796 = sadd.s32 %s794, %s795
        %s797 = smul.addr %s796, 4
        %s798 = scalar_lea.vmem %s4, %s797
        %s799 = sadd.s32 %s22, %s23
        %p800 = scmp.lt.s32.totalorder %s799, 1
        %s801 = scalar_select %p800, %s799, 1
        %s802 = smul.addr %s801, 2
        %s803 = smul.addr %s802, 8
        %s804 = scalar_lea.vmem %s5, %s803
        %s805 = sadd.s32 %s22, %s23
        %p806 = scmp.lt.s32.totalorder %s805, 1
        %s807 = scalar_select %p806, %s805, 1
        %s808 = smul.addr %s807, 2
        %s809 = smul.addr %s808, 8
        %s810 = scalar_lea.vmem %s6, %s809
        // Predicated region
        $region119: #{cnn_module_forward.5} parent=109 // pred_check
          %p811 = pneg %p155
        $region120: #{cnn_module_forward.5} parent=109 // pred_check_branch
          %813 = sbr.rel (%p811) target = $region122
        $region121: #{cnn_module_forward.5} parent=109 // pred_region
          _
        $region122: #{cnn_module_forward.5} parent=109 // pred_fallthru
          _
        // Predicated region
        $region123: #{cnn_module_forward.5} parent=109 // pred_check
          %p814 = pneg %p183
        $region124: #{cnn_module_forward.5} parent=109 // pred_check_branch
          %816 = sbr.rel (%p814) target = $region126
        $region125: #{cnn_module_forward.5} parent=109 // pred_region
          %s817 = sadd.s32 %s22, %s23
        $region126: #{cnn_module_forward.5} parent=109 // pred_fallthru
          _
        // Predicated region
        $region127: #{cnn_module_forward.5} parent=109 // pred_check
          %p818 = pneg %p211
        $region128: #{cnn_module_forward.5} parent=109 // pred_check_branch
          %820 = sbr.rel (%p818) target = $region130
        $region129: #{cnn_module_forward.5} parent=109 // pred_region
          %s821 = sadd.s32 %s22, %s23
        $region130: #{cnn_module_forward.5} parent=109 // pred_fallthru
          _
      $region110: #{cnn_module_forward.5} parent=5 // pred_fallthru
        _
      %p822 = scmp.le.s32.totalorder 2, %s13
      // Predicated region
      $region131: #{cnn_module_forward.5} parent=5 // pred_check
        %p823 = pneg %p822
      $region132: #{cnn_module_forward.5} parent=5 // pred_check_branch
        %825 = sbr.rel (%p823) target = $region134
      $region133: #{cnn_module_forward.5} parent=5 // pred_region
        %s826 = ssub.s32 %s13, 2
        // Predicated region
        $region135: #{cnn_module_forward.5} parent=133 // pred_check
          %p827 = pneg %p161
        $region136: #{cnn_module_forward.5} parent=133 // pred_check_branch
          %829 = sbr.rel (%p827) target = $region138
        $region137: #{cnn_module_forward.5} parent=133 // pred_region
          %p830 = scmp.lt.s32.totalorder %s24, 1
          %s831 = scalar_select %p830, %s24, 1
          %p832 = scmp.lt.s32.totalorder %s25, 0
          %s833 = scalar_select %p832, %s25, 0
          %s834 = smul.addr %s831, 2
          %s835 = sadd.s32 %s833, %s834
          %s836 = smul.addr %s835, 4
          %s837 = scalar_lea.vmem %s4, %s836
        $region138: #{cnn_module_forward.5} parent=133 // pred_fallthru
          _
        // Predicated region
        $region139: #{cnn_module_forward.5} parent=133 // pred_check
          %p838 = pneg %p189
        $region140: #{cnn_module_forward.5} parent=133 // pred_check_branch
          %840 = sbr.rel (%p838) target = $region142
        $region141: #{cnn_module_forward.5} parent=133 // pred_region
          %s841 = sadd.s32 %s24, %s25
          %p842 = scmp.lt.s32.totalorder %s841, 1
          %s843 = scalar_select %p842, %s841, 1
          %s844 = smul.addr %s843, 2
          %s845 = smul.addr %s844, 8
          %s846 = scalar_lea.vmem %s5, %s845
        $region142: #{cnn_module_forward.5} parent=133 // pred_fallthru
          _
        // Predicated region
        $region143: #{cnn_module_forward.5} parent=133 // pred_check
          %p847 = pneg %p217
        $region144: #{cnn_module_forward.5} parent=133 // pred_check_branch
          %849 = sbr.rel (%p847) target = $region146
        $region145: #{cnn_module_forward.5} parent=133 // pred_region
          %s850 = sadd.s32 %s24, %s25
          %p851 = scmp.lt.s32.totalorder %s850, 1
          %s852 = scalar_select %p851, %s850, 1
          %s853 = smul.addr %s852, 2
          %s854 = smul.addr %s853, 8
          %s855 = scalar_lea.vmem %s6, %s854
        $region146: #{cnn_module_forward.5} parent=133 // pred_fallthru
          _
      $region134: #{cnn_module_forward.5} parent=5 // pred_fallthru
        _
    $region6: #{cnn_module_forward.5} parent=1 // loop_footer
      %s17 = sadd.s32 1, %s13
    $region7: #{cnn_module_forward.5} parent=1 // loop_footer_branch
      %12 = sbr.rel target = $region3
    $region8: #{cnn_module_forward.5} parent=1 // loop_exit
      _

// kernel: cnn_module_forward.6
$region0: #{cnn_module_forward.6}
  #allocation0 [shape = 'u32[]', space=smem, size = 0x4, offset = 0x4, fixed_abs, tag = 'smem constant byte address 0x4 - core index']
  #allocation1 [shape = 'u32[144,128]{1,0:T(1,128)}', space=vmem, size = 0x12000, scoped, tag = 'internal scratch']
  #allocation2 [shape = 'bf16[64,256]{1,0:T(16,128)(2,1)}', space=vmem, size = 0x8000, scoped, tag = 'scratch operand']
  %s0 = inlined_call_operand.vmem [shape: bf16[2,64,256], index: 0, kind: input, shape index: {}, may-alias: {0,1}]
  %s1 = inlined_call_operand.vmem [shape: bf16[2,64,256], index: 1, kind: input, shape index: {}, may-alias: {0,1}]
  %s2 = inlined_call_operand.vmem [shape: bf16[4,32,64], index: 2, kind: input, shape index: {}]
  %s3 = inlined_call_operand.vmem [shape: f32[1,128], index: 3, kind: input, shape index: {}]
  %s4 = inlined_call_operand.vmem [shape: bf16[2,32,128], index: 4, kind: output, shape index: {0}]
  %s5 = inlined_call_operand.vmem [shape: f32[2,32,1], index: 5, kind: output, shape index: {1}]
  %s6 = inlined_call_operand.vmem [shape: f32[2,32,1], index: 6, kind: output, shape index: {2}]
  %7 = xla_tuple %s4, %s5, %s6
  %s8 = sld [smem:[#allocation0]]
  $region147: #{cnn_module_forward.6} parent=0
    _
  %s10 = ssub.s32 1, %s8
  %s11 = scalar_select 0, %s10, %s8
  $region1: #{cnn_module_forward.6} parent=0
    #allocation3 [shape = 'u8[32768]{0}', space=vmem, size = 0x8000, scoped, tag = 'input window, operand 0']
    #allocation4 [shape = 'u8[32768]{0}', space=vmem, size = 0x8000, scoped, tag = 'input window, operand 1']
    loop: start=0, step=1, limit=4
    $region2: #{cnn_module_forward.6} parent=1 // loop_pre_header
      _
    $region3: #{cnn_module_forward.6} parent=1 // loop_header
      %s13 = sphi 0, %s17
      %p14 = scmp.ge.s32.totalorder %s13, 4
      %s20 = sphi 0, %s32
      %s21 = sphi 0, %s28
      %s22 = sphi 0, %s20
      %s23 = sphi 0, %s21
      %s24 = sphi 0, %s22
      %s25 = sphi 0, %s23
      %s37 = sphi 0, %s39
      %s40 = sphi 0, %s37
      %s41 = sphi 0, %s40
      %s57 = sphi 0, %s41
      %s67 = sphi 0, %s69
      %s70 = sphi 0, %s67
      %s71 = sphi 0, %s70
      %s87 = sphi 0, %s71
      %s91 = sphi 0, %s91
      %s93 = sphi 0, %s91
      %s94 = sphi 0, %s93
      %s108 = sphi 0, %s94
      %s114 = sphi 0, %s116
      %s117 = sphi 0, %s114
      %s118 = sphi 0, %s117
      %s134 = sphi 0, %s118
      %s142 = sphi 0, %s144
      %s145 = sphi 0, %s142
      %s146 = sphi 0, %s145
      %s162 = sphi 0, %s146
      %s170 = sphi 0, %s172
      %s173 = sphi 0, %s170
      %s174 = sphi 0, %s173
      %s190 = sphi 0, %s174
      %s198 = sphi 0, %s200
      %s201 = sphi 0, %s198
      %s202 = sphi 0, %s201
      %s218 = sphi 0, %s202
    $region4: #{cnn_module_forward.6} parent=1 // loop_header_branch
      %16 = sbr.rel (%p14) target = $region8
    $region5: #{cnn_module_forward.6} parent=1 // loop_body
      %s18 = ssub.s32 %s13, 1
      %s19 = ssub.s32 %s13, 2
      %s26 = sadd.s32 1, %s21
      %p27 = scmp.ge.s32.totalorder %s26, 1
      %s28 = scalar_select %p27, 0, %s26
      %s29 = sadd.s32 1, %s20
      %s30 = scalar_select %p27, %s29, %s20
      %p31 = scmp.ge.s32.totalorder %s30, 2
      %s32 = scalar_select %p31, 0, %s30
      %s33 = ssub.s32 %s20, %s32
      %s34 = ssub.s32 %s21, %s28
      %s35 = sor.u32 %s33, %s34
      %p36 = scmp.eq.s32.totalorder %s35, 0
      %s38 = sadd.s32 %s37, 1
      %s39 = scalar_select %p36, %s37, %s38
      %p42 = pneg %p36
      %p43 = scmp.eq.s32.totalorder %s13, 1
      %p44 = por %p42, %p43
      %p45 = scmp.ne.s32.totalorder %s37, %s40
      %p46 = scmp.eq.s32.totalorder %s13, 0
      %p47 = por %p45, %p46
      %p48 = scmp.ne.s32.totalorder %s37, %s40
      %p49 = scmp.eq.s32.totalorder %s18, 1
      %p50 = por %p48, %p49
      %p51 = scmp.ne.s32.totalorder %s40, %s41
      %p52 = scmp.eq.s32.totalorder %s18, 0
      %p53 = por %p51, %p52
      %p54 = scmp.ne.s32.totalorder %s40, %s41
      %p55 = scmp.eq.s32.totalorder %s19, 1
      %p56 = por %p54, %p55
      %p58 = scmp.ne.s32.totalorder %s41, %s57
      %p59 = scmp.eq.s32.totalorder %s19, 0
      %p60 = por %p58, %p59
      %s61 = sadd.s32 %s21, 1
      %s62 = sadd.s32 %s28, 1
      %s63 = ssub.s32 %s20, %s32
      %s64 = ssub.s32 %s61, %s62
      %s65 = sor.u32 %s63, %s64
      %p66 = scmp.eq.s32.totalorder %s65, 0
      %s68 = sadd.s32 %s67, 1
      %s69 = scalar_select %p66, %s67, %s68
      %p72 = pneg %p66
      %p73 = scmp.eq.s32.totalorder %s13, 1
      %p74 = por %p72, %p73
      %p75 = scmp.ne.s32.totalorder %s67, %s70
      %p76 = scmp.eq.s32.totalorder %s13, 0
      %p77 = por %p75, %p76
      %p78 = scmp.ne.s32.totalorder %s67, %s70
      %p79 = scmp.eq.s32.totalorder %s18, 1
      %p80 = por %p78, %p79
      %p81 = scmp.ne.s32.totalorder %s70, %s71
      %p82 = scmp.eq.s32.totalorder %s18, 0
      %p83 = por %p81, %p82
      %p84 = scmp.ne.s32.totalorder %s70, %s71
      %p85 = scmp.eq.s32.totalorder %s19, 1
      %p86 = por %p84, %p85
      %p88 = scmp.ne.s32.totalorder %s71, %s87
      %p89 = scmp.eq.s32.totalorder %s19, 0
      %p90 = por %p88, %p89
      %s92 = sadd.s32 %s91, 1
      %p95 = scmp.eq.s32.totalorder %s13, 1
      %p96 = scmp.ne.s32.totalorder %s91, %s93
      %p97 = scmp.eq.s32.totalorder %s13, 0
      %p98 = por %p96, %p97
      %p99 = scmp.ne.s32.totalorder %s91, %s93
      %p100 = scmp.eq.s32.totalorder %s18, 1
      %p101 = por %p99, %p100
      %p102 = scmp.ne.s32.totalorder %s93, %s94
      %p103 = scmp.eq.s32.totalorder %s18, 0
      %p104 = por %p102, %p103
      %p105 = scmp.ne.s32.totalorder %s93, %s94
      %p106 = scmp.eq.s32.totalorder %s19, 1
      %p107 = por %p105, %p106
      %p109 = scmp.ne.s32.totalorder %s94, %s108
      %p110 = scmp.eq.s32.totalorder %s19, 0
      %p111 = por %p109, %p110
      %s112 = ssub.s32 %s21, %s28
      %p113 = scmp.eq.s32.totalorder %s112, 0
      %s115 = sadd.s32 %s114, 1
      %s116 = scalar_select %p113, %s114, %s115
      %p119 = pneg %p113
      %p120 = scmp.eq.s32.totalorder %s13, 1
      %p121 = por %p119, %p120
      %p122 = scmp.ne.s32.totalorder %s114, %s117
      %p123 = scmp.eq.s32.totalorder %s13, 0
      %p124 = por %p122, %p123
      %p125 = scmp.ne.s32.totalorder %s114, %s117
      %p126 = scmp.eq.s32.totalorder %s18, 1
      %p127 = por %p125, %p126
      %p128 = scmp.ne.s32.totalorder %s117, %s118
      %p129 = scmp.eq.s32.totalorder %s18, 0
      %p130 = por %p128, %p129
      %p131 = scmp.ne.s32.totalorder %s117, %s118
      %p132 = scmp.eq.s32.totalorder %s19, 1
      %p133 = por %p131, %p132
      %p135 = scmp.ne.s32.totalorder %s118, %s134
      %p136 = scmp.eq.s32.totalorder %s19, 0
      %p137 = por %p135, %p136
      %s138 = ssub.s32 %s20, %s32
      %s139 = ssub.s32 %s21, %s28
      %s140 = sor.u32 %s138, %s139
      %p141 = scmp.eq.s32.totalorder %s140, 0
      %s143 = sadd.s32 %s142, 1
      %s144 = scalar_select %p141, %s142, %s143
      %p147 = pneg %p141
      %p148 = scmp.eq.s32.totalorder %s13, 1
      %p149 = por %p147, %p148
      %p150 = scmp.ne.s32.totalorder %s142, %s145
      %p151 = scmp.eq.s32.totalorder %s13, 0
      %p152 = por %p150, %p151
      %p153 = scmp.ne.s32.totalorder %s142, %s145
      %p154 = scmp.eq.s32.totalorder %s18, 1
      %p155 = por %p153, %p154
      %p156 = scmp.ne.s32.totalorder %s145, %s146
      %p157 = scmp.eq.s32.totalorder %s18, 0
      %p158 = por %p156, %p157
      %p159 = scmp.ne.s32.totalorder %s145, %s146
      %p160 = scmp.eq.s32.totalorder %s19, 1
      %p161 = por %p159, %p160
      %p163 = scmp.ne.s32.totalorder %s146, %s162
      %p164 = scmp.eq.s32.totalorder %s19, 0
      %p165 = por %p163, %p164
      %s166 = sadd.s32 %s20, %s21
      %s167 = sadd.s32 %s32, %s28
      %s168 = ssub.s32 %s166, %s167
      %p169 = scmp.eq.s32.totalorder %s168, 0
      %s171 = sadd.s32 %s170, 1
      %s172 = scalar_select %p169, %s170, %s171
      %p175 = pneg %p169
      %p176 = scmp.eq.s32.totalorder %s13, 1
      %p177 = por %p175, %p176
      %p178 = scmp.ne.s32.totalorder %s170, %s173
      %p179 = scmp.eq.s32.totalorder %s13, 0
      %p180 = por %p178, %p179
      %p181 = scmp.ne.s32.totalorder %s170, %s173
      %p182 = scmp.eq.s32.totalorder %s18, 1
      %p183 = por %p181, %p182
      %p184 = scmp.ne.s32.totalorder %s173, %s174
      %p185 = scmp.eq.s32.totalorder %s18, 0
      %p186 = por %p184, %p185
      %p187 = scmp.ne.s32.totalorder %s173, %s174
      %p188 = scmp.eq.s32.totalorder %s19, 1
      %p189 = por %p187, %p188
      %p191 = scmp.ne.s32.totalorder %s174, %s190
      %p192 = scmp.eq.s32.totalorder %s19, 0
      %p193 = por %p191, %p192
      %s194 = sadd.s32 %s20, %s21
      %s195 = sadd.s32 %s32, %s28
      %s196 = ssub.s32 %s194, %s195
      %p197 = scmp.eq.s32.totalorder %s196, 0
      %s199 = sadd.s32 %s198, 1
      %s200 = scalar_select %p197, %s198, %s199
      %p203 = pneg %p197
      %p204 = scmp.eq.s32.totalorder %s13, 1
      %p205 = por %p203, %p204
      %p206 = scmp.ne.s32.totalorder %s198, %s201
      %p207 = scmp.eq.s32.totalorder %s13, 0
      %p208 = por %p206, %p207
      %p209 = scmp.ne.s32.totalorder %s198, %s201
      %p210 = scmp.eq.s32.totalorder %s18, 1
      %p211 = por %p209, %p210
      %p212 = scmp.ne.s32.totalorder %s201, %s202
      %p213 = scmp.eq.s32.totalorder %s18, 0
      %p214 = por %p212, %p213
      %p215 = scmp.ne.s32.totalorder %s201, %s202
      %p216 = scmp.eq.s32.totalorder %s19, 1
      %p217 = por %p215, %p216
      %p219 = scmp.ne.s32.totalorder %s202, %s218
      %p220 = scmp.eq.s32.totalorder %s19, 0
      %p221 = por %p219, %p220
      %p222 = scmp.le.s32.totalorder 1, %s13
      %p223 = scmp.lt.s32.totalorder %s13, 3
      %p224 = pnand %p222, %p223
      %p225 = pneg %p224
      // Predicated region
      $region9: #{cnn_module_forward.6} parent=5 // pred_check
        _
      $region10: #{cnn_module_forward.6} parent=5 // pred_check_branch
        %227 = sbr.rel (%p224) target = $region12
      $region11: #{cnn_module_forward.6} parent=5 // pred_region
        %s228 = ssub.s32 %s13, 1
        // Predicated region
        $region13: #{cnn_module_forward.6} parent=11 // pred_check
          %p229 = pneg %p104
        $region14: #{cnn_module_forward.6} parent=11 // pred_check_branch
          %231 = sbr.rel (%p229) target = $region16
        $region15: #{cnn_module_forward.6} parent=11 // pred_region
          _
        $region16: #{cnn_module_forward.6} parent=11 // pred_fallthru
          _
        // Predicated region
        $region17: #{cnn_module_forward.6} parent=11 // pred_check
          %p232 = pneg %p130
        $region18: #{cnn_module_forward.6} parent=11 // pred_check_branch
          %234 = sbr.rel (%p232) target = $region20
        $region19: #{cnn_module_forward.6} parent=11 // pred_region
          %p235 = scmp.lt.s32.totalorder %s23, 0
          %s236 = scalar_select %p235, %s23, 0
          %s237 = scalar_lea.vmem %s3, %s236
        $region20: #{cnn_module_forward.6} parent=11 // pred_fallthru
          _
      $region12: #{cnn_module_forward.6} parent=5 // pred_fallthru
        _
      %p238 = scmp.lt.s32.totalorder %s13, 2
      // Predicated region
      $region21: #{cnn_module_forward.6} parent=5 // pred_check
        %p239 = pneg %p238
      $region22: #{cnn_module_forward.6} parent=5 // pred_check_branch
        %241 = sbr.rel (%p239) target = $region24
      $region23: #{cnn_module_forward.6} parent=5 // pred_region
        // Predicated region
        $region25: #{cnn_module_forward.6} parent=23 // pred_check
          %p242 = pneg %p47
        $region26: #{cnn_module_forward.6} parent=23 // pred_check_branch
          %244 = sbr.rel (%p242) target = $region28
        $region27: #{cnn_module_forward.6} parent=23 // pred_region
          %s245 = sand.u32 %s37, 1
          %s246 = sand.u32 %s37, 1
          %s247 = smul.addr %s246, 32
          %s248 = scalar_lea.vmem [#allocation3], %s247
          %s249 = smul.addr %s20, 16
          %s250 = sadd.s32 %s21, %s249
          %s251 = smul.addr %s250, 4
          %s252 = scalar_lea.vmem %s0, %s251
          // Predicated region
          $region29: #{cnn_module_forward.6} parent=27 // pred_check
            _
          $region30: #{cnn_module_forward.6} parent=27 // pred_check_branch
            %254 = sbr.rel (0) target = $region32
          $region31: #{cnn_module_forward.6} parent=27 // pred_region
            // Predicated region
            $region33: #{cnn_module_forward.6} parent=31 // pred_check
              _
            $region34: #{cnn_module_forward.6} parent=31 // pred_check_branch
              %256 = sbr.rel target = $region36
            $region35: #{cnn_module_forward.6} parent=31 // pred_region
              // Predicated region
              $region48: #{cnn_module_forward.6} parent=35 // pred_check
                _
              $region49: #{cnn_module_forward.6} parent=35 // pred_check_branch
                %285 = sbr.rel (0) target = $region51
              $region50: #{cnn_module_forward.6} parent=35 // pred_region
                loop: start=0, step=1, limit=1
                $region52: #{cnn_module_forward.6} parent=50 // loop_pre_header
                  _
                $region53: #{cnn_module_forward.6} parent=50 // loop_header
                  %s287 = sphi 0, %s291
                  %p288 = scmp.ge.s32.totalorder %s287, 1
                  %s292 = sphi %s252, %s252
                  %s293 = sphi %s248, %s248
                $region54: #{cnn_module_forward.6} parent=50 // loop_header_branch
                  %290 = sbr.rel (%p288) target = $region58
                $region55: #{cnn_module_forward.6} parent=50 // loop_body
                  _
                $region56: #{cnn_module_forward.6} parent=50 // loop_footer
                  %s291 = sadd.s32 1, %s287
                $region57: #{cnn_module_forward.6} parent=50 // loop_footer_branch
                  %286 = sbr.rel target = $region53
                $region58: #{cnn_module_forward.6} parent=50 // loop_exit
                  _
                loop: start=0, step=1, limit=1
                $region59: #{cnn_module_forward.6} parent=50 // loop_pre_header
                  _
                $region60: #{cnn_module_forward.6} parent=50 // loop_header
                  %s296 = sphi 0, %s300
                  %p297 = scmp.ge.s32.totalorder %s296, 1
                  %s301 = sphi %s252, %s252
                  %s302 = sphi %s248, %s248
                $region61: #{cnn_module_forward.6} parent=50 // loop_header_branch
                  %299 = sbr.rel (%p297) target = $region65
                $region62: #{cnn_module_forward.6} parent=50 // loop_body
                  %v303 = vld [vmem:[%s301] sm:$0xf]
                  %304 = vst [vmem:[%s302] sm:$0xf] %v303
                  %v305 = vld [vmem:[%s301 + $0x8] sm:$0xf]
                  %306 = vst [vmem:[%s302 + $0x4] sm:$0xf] %v305
                  %v307 = vld [vmem:[%s301 + $0x10] sm:$0xf]
                  %308 = vst [vmem:[%s302 + $0x8] sm:$0xf] %v307
                  %v309 = vld [vmem:[%s301 + $0x18] sm:$0xf]
                  %310 = vst [vmem:[%s302 + $0xc] sm:$0xf] %v309
                  %v311 = vld [vmem:[%s301 + $0x20] sm:$0xf]
                  %312 = vst [vmem:[%s302 + $0x10] sm:$0xf] %v311
                  %v313 = vld [vmem:[%s301 + $0x28] sm:$0xf]
                  %314 = vst [vmem:[%s302 + $0x14] sm:$0xf] %v313
                  %v315 = vld [vmem:[%s301 + $0x30] sm:$0xf]
                  %316 = vst [vmem:[%s302 + $0x18] sm:$0xf] %v315
                  %v317 = vld [vmem:[%s301 + $0x38] sm:$0xf]
                  %318 = vst [vmem:[%s302 + $0x1c] sm:$0xf] %v317
                $region63: #{cnn_module_forward.6} parent=50 // loop_footer
                  %s300 = sadd.s32 1, %s296
                $region64: #{cnn_module_forward.6} parent=50 // loop_footer_branch
                  %295 = sbr.rel target = $region60
                $region65: #{cnn_module_forward.6} parent=50 // loop_exit
                  _
              $region51: #{cnn_module_forward.6} parent=35 // pred_fallthru
                _
            $region36: #{cnn_module_forward.6} parent=31 // pred_fallthru
              _
            // Predicated region
            $region37: #{cnn_module_forward.6} parent=31 // pred_check
              _
            $region38: #{cnn_module_forward.6} parent=31 // pred_check_branch
              %258 = sbr.rel (0) target = $region40
            $region39: #{cnn_module_forward.6} parent=31 // pred_region
              loop: start=0, step=1, limit=1
              $region41: #{cnn_module_forward.6} parent=39 // loop_pre_header
                _
              $region42: #{cnn_module_forward.6} parent=39 // loop_header
                %s261 = sphi 0, %s265
                %p262 = scmp.ge.s32.totalorder %s261, 1
                %s266 = sphi %s252, %s252
                %s267 = sphi %s248, %s248
              $region43: #{cnn_module_forward.6} parent=39 // loop_header_branch
                %264 = sbr.rel (%p262) target = $region47
              $region44: #{cnn_module_forward.6} parent=39 // loop_body
                %v268 = vld [vmem:[%s266] sm:$0xf]
                %269 = vst [vmem:[%s267] sm:$0xf] %v268
                %v270 = vld [vmem:[%s266 + $0x8] sm:$0xf]
                %271 = vst [vmem:[%s267 + $0x4] sm:$0xf] %v270
                %v272 = vld [vmem:[%s266 + $0x10] sm:$0xf]
                %273 = vst [vmem:[%s267 + $0x8] sm:$0xf] %v272
                %v274 = vld [vmem:[%s266 + $0x18] sm:$0xf]
                %275 = vst [vmem:[%s267 + $0xc] sm:$0xf] %v274
                %v276 = vld [vmem:[%s266 + $0x20] sm:$0xf]
                %277 = vst [vmem:[%s267 + $0x10] sm:$0xf] %v276
                %v278 = vld [vmem:[%s266 + $0x28] sm:$0xf]
                %279 = vst [vmem:[%s267 + $0x14] sm:$0xf] %v278
                %v280 = vld [vmem:[%s266 + $0x30] sm:$0xf]
                %281 = vst [vmem:[%s267 + $0x18] sm:$0xf] %v280
                %v282 = vld [vmem:[%s266 + $0x38] sm:$0xf]
                %283 = vst [vmem:[%s267 + $0x1c] sm:$0xf] %v282
              $region45: #{cnn_module_forward.6} parent=39 // loop_footer
                %s265 = sadd.s32 1, %s261
              $region46: #{cnn_module_forward.6} parent=39 // loop_footer_branch
                %260 = sbr.rel target = $region42
              $region47: #{cnn_module_forward.6} parent=39 // loop_exit
                _
            $region40: #{cnn_module_forward.6} parent=31 // pred_fallthru
              _
          $region32: #{cnn_module_forward.6} parent=27 // pred_fallthru
            _
          %319 = vnop
        $region28: #{cnn_module_forward.6} parent=23 // pred_fallthru
          _
        // Predicated region
        $region66: #{cnn_module_forward.6} parent=23 // pred_check
          %p320 = pneg %p77
        $region67: #{cnn_module_forward.6} parent=23 // pred_check_branch
          %322 = sbr.rel (%p320) target = $region69
        $region68: #{cnn_module_forward.6} parent=23 // pred_region
          %s323 = sand.u32 %s67, 1
          %s324 = sand.u32 %s67, 1
          %s325 = smul.addr %s324, 32
          %s326 = scalar_lea.vmem [#allocation4], %s325
          %s327 = sadd.s32 %s21, 1
          %s328 = smul.addr %s20, 16
          %s329 = sadd.s32 %s327, %s328
          %s330 = smul.addr %s329, 4
          %s331 = scalar_lea.vmem %s1, %s330
          // Predicated region
          $region70: #{cnn_module_forward.6} parent=68 // pred_check
            _
          $region71: #{cnn_module_forward.6} parent=68 // pred_check_branch
            %333 = sbr.rel (0) target = $region73
          $region72: #{cnn_module_forward.6} parent=68 // pred_region
            // Predicated region
            $region74: #{cnn_module_forward.6} parent=72 // pred_check
              _
            $region75: #{cnn_module_forward.6} parent=72 // pred_check_branch
              %335 = sbr.rel target = $region77
            $region76: #{cnn_module_forward.6} parent=72 // pred_region
              // Predicated region
              $region89: #{cnn_module_forward.6} parent=76 // pred_check
                _
              $region90: #{cnn_module_forward.6} parent=76 // pred_check_branch
                %364 = sbr.rel (0) target = $region92
              $region91: #{cnn_module_forward.6} parent=76 // pred_region
                loop: start=0, step=1, limit=1
                $region93: #{cnn_module_forward.6} parent=91 // loop_pre_header
                  _
                $region94: #{cnn_module_forward.6} parent=91 // loop_header
                  %s366 = sphi 0, %s370
                  %p367 = scmp.ge.s32.totalorder %s366, 1
                  %s371 = sphi %s331, %s331
                  %s372 = sphi %s326, %s326
                $region95: #{cnn_module_forward.6} parent=91 // loop_header_branch
                  %369 = sbr.rel (%p367) target = $region99
                $region96: #{cnn_module_forward.6} parent=91 // loop_body
                  _
                $region97: #{cnn_module_forward.6} parent=91 // loop_footer
                  %s370 = sadd.s32 1, %s366
                $region98: #{cnn_module_forward.6} parent=91 // loop_footer_branch
                  %365 = sbr.rel target = $region94
                $region99: #{cnn_module_forward.6} parent=91 // loop_exit
                  _
                loop: start=0, step=1, limit=1
                $region100: #{cnn_module_forward.6} parent=91 // loop_pre_header
                  _
                $region101: #{cnn_module_forward.6} parent=91 // loop_header
                  %s375 = sphi 0, %s379
                  %p376 = scmp.ge.s32.totalorder %s375, 1
                  %s380 = sphi %s331, %s331
                  %s381 = sphi %s326, %s326
                $region102: #{cnn_module_forward.6} parent=91 // loop_header_branch
                  %378 = sbr.rel (%p376) target = $region106
                $region103: #{cnn_module_forward.6} parent=91 // loop_body
                  %v382 = vld [vmem:[%s380] sm:$0xf]
                  %383 = vst [vmem:[%s381] sm:$0xf] %v382
                  %v384 = vld [vmem:[%s380 + $0x8] sm:$0xf]
                  %385 = vst [vmem:[%s381 + $0x4] sm:$0xf] %v384
                  %v386 = vld [vmem:[%s380 + $0x10] sm:$0xf]
                  %387 = vst [vmem:[%s381 + $0x8] sm:$0xf] %v386
                  %v388 = vld [vmem:[%s380 + $0x18] sm:$0xf]
                  %389 = vst [vmem:[%s381 + $0xc] sm:$0xf] %v388
                  %v390 = vld [vmem:[%s380 + $0x20] sm:$0xf]
                  %391 = vst [vmem:[%s381 + $0x10] sm:$0xf] %v390
                  %v392 = vld [vmem:[%s380 + $0x28] sm:$0xf]
                  %393 = vst [vmem:[%s381 + $0x14] sm:$0xf] %v392
                  %v394 = vld [vmem:[%s380 + $0x30] sm:$0xf]
                  %395 = vst [vmem:[%s381 + $0x18] sm:$0xf] %v394
                  %v396 = vld [vmem:[%s380 + $0x38] sm:$0xf]
                  %397 = vst [vmem:[%s381 + $0x1c] sm:$0xf] %v396
                $region104: #{cnn_module_forward.6} parent=91 // loop_footer
                  %s379 = sadd.s32 1, %s375
                $region105: #{cnn_module_forward.6} parent=91 // loop_footer_branch
                  %374 = sbr.rel target = $region101
                $region106: #{cnn_module_forward.6} parent=91 // loop_exit
                  _
              $region92: #{cnn_module_forward.6} parent=76 // pred_fallthru
                _
            $region77: #{cnn_module_forward.6} parent=72 // pred_fallthru
              _
            // Predicated region
            $region78: #{cnn_module_forward.6} parent=72 // pred_check
              _
            $region79: #{cnn_module_forward.6} parent=72 // pred_check_branch
              %337 = sbr.rel (0) target = $region81
            $region80: #{cnn_module_forward.6} parent=72 // pred_region
              loop: start=0, step=1, limit=1
              $region82: #{cnn_module_forward.6} parent=80 // loop_pre_header
                _
              $region83: #{cnn_module_forward.6} parent=80 // loop_header
                %s340 = sphi 0, %s344
                %p341 = scmp.ge.s32.totalorder %s340, 1
                %s345 = sphi %s331, %s331
                %s346 = sphi %s326, %s326
              $region84: #{cnn_module_forward.6} parent=80 // loop_header_branch
                %343 = sbr.rel (%p341) target = $region88
              $region85: #{cnn_module_forward.6} parent=80 // loop_body
                %v347 = vld [vmem:[%s345] sm:$0xf]
                %348 = vst [vmem:[%s346] sm:$0xf] %v347
                %v349 = vld [vmem:[%s345 + $0x8] sm:$0xf]
                %350 = vst [vmem:[%s346 + $0x4] sm:$0xf] %v349
                %v351 = vld [vmem:[%s345 + $0x10] sm:$0xf]
                %352 = vst [vmem:[%s346 + $0x8] sm:$0xf] %v351
                %v353 = vld [vmem:[%s345 + $0x18] sm:$0xf]
                %354 = vst [vmem:[%s346 + $0xc] sm:$0xf] %v353
                %v355 = vld [vmem:[%s345 + $0x20] sm:$0xf]
                %356 = vst [vmem:[%s346 + $0x10] sm:$0xf] %v355
                %v357 = vld [vmem:[%s345 + $0x28] sm:$0xf]
                %358 = vst [vmem:[%s346 + $0x14] sm:$0xf] %v357
                %v359 = vld [vmem:[%s345 + $0x30] sm:$0xf]
                %360 = vst [vmem:[%s346 + $0x18] sm:$0xf] %v359
                %v361 = vld [vmem:[%s345 + $0x38] sm:$0xf]
                %362 = vst [vmem:[%s346 + $0x1c] sm:$0xf] %v361
              $region86: #{cnn_module_forward.6} parent=80 // loop_footer
                %s344 = sadd.s32 1, %s340
              $region87: #{cnn_module_forward.6} parent=80 // loop_footer_branch
                %339 = sbr.rel target = $region83
              $region88: #{cnn_module_forward.6} parent=80 // loop_exit
                _
            $region81: #{cnn_module_forward.6} parent=72 // pred_fallthru
              _
          $region73: #{cnn_module_forward.6} parent=68 // pred_fallthru
            _
          %398 = vnop
        $region69: #{cnn_module_forward.6} parent=23 // pred_fallthru
          _
      $region24: #{cnn_module_forward.6} parent=5 // pred_fallthru
        _
      %p399 = scmp.le.s32.totalorder 1, %s13
      %p400 = scmp.lt.s32.totalorder %s13, 3
      %p401 = pnand %p399, %p400
      %p402 = pneg %p401
      // Predicated region
      $region107: #{cnn_module_forward.6} parent=5 // pred_check
        _
      $region108: #{cnn_module_forward.6} parent=5 // pred_check_branch
        %404 = sbr.rel (%p401) target = $region110
      $region109: #{cnn_module_forward.6} parent=5 // pred_region
        %s405 = ssub.s32 %s13, 1
        %s406 = sand.u32 %s40, 1
        %s407 = sand.u32 %s40, 1
        %s408 = smul.addr %s407, 32
        %s409 = scalar_lea.vmem [#allocation3], %s408
        // Predicated region
        $region111: #{cnn_module_forward.6} parent=109 // pred_check
          %p410 = pneg %p53
        $region112: #{cnn_module_forward.6} parent=109 // pred_check_branch
          %412 = sbr.rel (%p410) target = $region114
        $region113: #{cnn_module_forward.6} parent=109 // pred_region
          _
        $region114: #{cnn_module_forward.6} parent=109 // pred_fallthru
          _
        %s413 = sand.u32 %s70, 1
        %s414 = sand.u32 %s70, 1
        %s415 = smul.addr %s414, 32
        %s416 = scalar_lea.vmem [#allocation4], %s415
        // Predicated region
        $region115: #{cnn_module_forward.6} parent=109 // pred_check
          %p417 = pneg %p83
        $region116: #{cnn_module_forward.6} parent=109 // pred_check_branch
          %419 = sbr.rel (%p417) target = $region118
        $region117: #{cnn_module_forward.6} parent=109 // pred_region
          _
        $region118: #{cnn_module_forward.6} parent=109 // pred_fallthru
          _
        %s420 = sand.u32 %s40, 1
        %s421 = sand.u32 %s40, 1
        %s422 = smul.addr %s421, 32
        %s423 = scalar_lea.vmem [#allocation3], %s422
        %p424 = pneg %p53
        %p425 = pneg %p50
        %s426 = sand.u32 %s70, 1
        %s427 = sand.u32 %s70, 1
        %s428 = smul.addr %s427, 32
        %s429 = scalar_lea.vmem [#allocation4], %s428
        %p430 = pneg %p83
        %p431 = pneg %p80
        %p432 = pneg %p104
        %p433 = pneg %p101
        %p434 = scmp.lt.s32.totalorder %s23, 0
        %s435 = scalar_select %p434, %s23, 0
        %s436 = scalar_lea.vmem %s3, %s435
        %p437 = pneg %p130
        %p438 = pneg %p127
        %p439 = pneg %p158
        %p440 = pneg %p155
        %p441 = scmp.lt.s32.totalorder %s22, 1
        %s442 = scalar_select %p441, %s22, 1
        %p443 = scmp.lt.s32.totalorder %s23, 0
        %s444 = scalar_select %p443, %s23, 0
        %s445 = smul.addr %s442, 4
        %s446 = sadd.s32 %s444, %s445
        %s447 = smul.addr %s446, 4
        %s448 = scalar_lea.vmem %s4, %s447
        %p449 = pneg %p186
        %p450 = pneg %p183
        %s451 = sadd.s32 %s22, %s23
        %p452 = scmp.lt.s32.totalorder %s451, 1
        %s453 = scalar_select %p452, %s451, 1
        %s454 = smul.addr %s453, 4
        %s455 = smul.addr %s454, 8
        %s456 = scalar_lea.vmem %s5, %s455
        %p457 = pneg %p214
        %p458 = pneg %p211
        %s459 = sadd.s32 %s22, %s23
        %p460 = scmp.lt.s32.totalorder %s459, 1
        %s461 = scalar_select %p460, %s459, 1
        %s462 = smul.addr %s461, 4
        %s463 = smul.addr %s462, 8
        %s464 = scalar_lea.vmem %s6, %s463
        %s465 = sadd.s32 %s23, 1
        %p466 = scmp.lt.s32.totalorder %s23, 0
        %s467 = scalar_select %p466, %s23, 0
        %s468 = scalar_lea.vmem %s3, %s467
        %p469 = scmp.lt.s32.totalorder %s22, 1
        %s470 = scalar_select %p469, %s22, 1
        %p471 = scmp.lt.s32.totalorder %s23, 0
        %s472 = scalar_select %p471, %s23, 0
        %s473 = smul.addr %s470, 4
        %s474 = sadd.s32 %s472, %s473
        %s475 = smul.addr %s474, 4
        %s476 = scalar_lea.vmem %s4, %s475
        %s477 = sadd.s32 %s22, %s23
        %p478 = scmp.lt.s32.totalorder %s477, 1
        %s479 = scalar_select %p478, %s477, 1
        %s480 = smul.addr %s479, 4
        %s481 = smul.addr %s480, 8
        %s482 = scalar_lea.vmem %s5, %s481
        %s483 = sadd.s32 %s22, %s23
        %s484 = sadd.s32 %s22, %s23
        %p485 = scmp.lt.s32.totalorder %s484, 1
        %s486 = scalar_select %p485, %s484, 1
        %s487 = smul.addr %s486, 4
        %s488 = smul.addr %s487, 8
        %s489 = scalar_lea.vmem %s6, %s488
        %s490 = sadd.s32 %s22, %s23
        %v492 = vld [vmem:[%s409] sm:$0xf]
        %v493 = vld [vmem:[%s409 + $0x4] sm:$0xf]
        %v494 = vld [vmem:[%s409 + $0x8] sm:$0xf]
        %v495 = vld [vmem:[%s409 + $0xc] sm:$0xf]
        %v496 = vld [vmem:[%s409 + $0x10] sm:$0xf]
        %v497 = vld [vmem:[%s409 + $0x14] sm:$0xf]
        %v498 = vld [vmem:[%s409 + $0x18] sm:$0xf]
        %v499 = vld [vmem:[%s409 + $0x1c] sm:$0xf]
        %v508 = vunpack.c.l.b16 %v492
        %v509 = vunpack.c.l.b16 %v493
        %v510 = vunpack.c.l.b16 %v494
        %v511 = vunpack.c.l.b16 %v495
        %v512 = vunpack.c.l.b16 %v496
        %v513 = vunpack.c.l.b16 %v497
        %v514 = vunpack.c.l.b16 %v498
        %v515 = vunpack.c.l.b16 %v499
        %v516 = vpack.c.b16 %v509, %v508
        %v517 = vpack.c.b16 %v511, %v510
        %v518 = vpack.c.b16 %v513, %v512
        %v519 = vpack.c.b16 %v515, %v514
        %524 = vst [vmem:[#allocation2] sm:$0xff] %v516
        %525 = vst [vmem:[#allocation2 + $0x10] sm:$0xff] %v517
        %526 = vst [vmem:[#allocation2 + $0x20] sm:$0xff] %v518
        %527 = vst [vmem:[#allocation2 + $0x30] sm:$0xff] %v519
        %v528 = vld [vmem:[%s416] sm:$0xf]
        %v529 = vld [vmem:[%s416 + $0x4] sm:$0xf]
        %v530 = vld [vmem:[%s416 + $0x8] sm:$0xf]
        %v531 = vld [vmem:[%s416 + $0xc] sm:$0xf]
        %v532 = vld [vmem:[%s416 + $0x10] sm:$0xf]
        %v533 = vld [vmem:[%s416 + $0x14] sm:$0xf]
        %v534 = vld [vmem:[%s416 + $0x18] sm:$0xf]
        %v535 = vld [vmem:[%s416 + $0x1c] sm:$0xf]
        %v544 = vunpack.c.l.b16 %v528
        %v545 = vunpack.c.l.b16 %v529
        %v546 = vunpack.c.l.b16 %v530
        %v547 = vunpack.c.l.b16 %v531
        %v548 = vunpack.c.l.b16 %v532
        %v549 = vunpack.c.l.b16 %v533
        %v550 = vunpack.c.l.b16 %v534
        %v551 = vunpack.c.l.b16 %v535
        %v552 = vpack.c.b16 %v545, %v544
        %v553 = vpack.c.b16 %v547, %v546
        %v554 = vpack.c.b16 %v549, %v548
        %v555 = vpack.c.b16 %v551, %v550
        %560 = vst [vmem:[#allocation2 + $0x8] sm:$0xff] %v552
        %561 = vst [vmem:[#allocation2 + $0x18] sm:$0xff] %v553
        %562 = vst [vmem:[#allocation2 + $0x28] sm:$0xff] %v554
        %563 = vst [vmem:[#allocation2 + $0x38] sm:$0xff] %v555
        %v564 = vld [vmem:[%s2] sm:$0xf]
        %v565 = vld [vmem:[%s2 + $0x4] sm:$0xf]
        %v566 = vld [vmem:[%s2 + $0x8] sm:$0xf]
        %v567 = vld [vmem:[%s2 + $0xc] sm:$0xf]
        %v568 = vld [vmem:[#allocation2] sm:$0xff]
        %v569 = vld [vmem:[#allocation2 + $0x10] sm:$0xff]
        %v570 = vld [vmem:[#allocation2 + $0x20] sm:$0xff]
        %v571 = vld [vmem:[#allocation2 + $0x30] sm:$0xff]
        %s572 = scalar_lea.vmem %s2, 16
        %v573 = vld [vmem:[%s572] sm:$0xf]
        %v574 = vld [vmem:[%s572 + $0x4] sm:$0xf]
        %v575 = vld [vmem:[%s572 + $0x8] sm:$0xf]
        %v576 = vld [vmem:[%s572 + $0xc] sm:$0xf]
        %v577 = vld [vmem:[#allocation2] sm:$0xff]
        %v578 = vld [vmem:[#allocation2 + $0x8] sm:$0xff]
        %v579 = vld [vmem:[#allocation2 + $0x10] sm:$0xff]
        %v580 = vld [vmem:[#allocation2 + $0x18] sm:$0xff]
        %v581 = vld [vmem:[#allocation2 + $0x20] sm:$0xff]
        %v582 = vld [vmem:[#allocation2 + $0x28] sm:$0xff]
        %v583 = vld [vmem:[#allocation2 + $0x30] sm:$0xff]
        %v584 = vld [vmem:[#allocation2 + $0x38] sm:$0xff]
        %v589 = vunpack.c.l.b16 %v573
        %v590 = vunpack.c.l.b16 %v574
        %v591 = vunpack.c.l.b16 %v575
        %v592 = vunpack.c.l.b16 %v576
        %v593 = vpack.c.b16 %v590, %v589
        %v594 = vpack.c.b16 %v592, %v591
        %603 = vrot.lane.b32.xlu0 %v577, 127
        %v604 = vpop.permute.xlu0 %603
        %605 = vrot.lane.b32.xlu0 %v578, 127
        %v606 = vpop.permute.xlu0 %605
        %607 = vrot.lane.b32.xlu0 %v579, 127
        %v608 = vpop.permute.xlu0 %607
        %609 = vrot.lane.b32.xlu0 %v580, 127
        %v610 = vpop.permute.xlu0 %609
        %611 = vrot.lane.b32.xlu0 %v581, 127
        %v612 = vpop.permute.xlu0 %611
        %613 = vrot.lane.b32.xlu0 %v582, 127
        %v614 = vpop.permute.xlu0 %613
        %615 = vrot.lane.b32.xlu0 %v583, 127
        %v616 = vpop.permute.xlu0 %615
        %617 = vrot.lane.b32.xlu0 %v584, 127
        %v618 = vpop.permute.xlu0 %617
        %vm619 = vcmask 1039360
        %v620 = vsel %vm619, %v604, %v606
        %v621 = vsel %vm619, %v608, %v610
        %v622 = vsel %vm619, %v612, %v614
        %v623 = vsel %vm619, %v616, %v618
        %vm628 = vcmask 523264
        %v630 = vsel %vm628, %v593, 0
        %v633 = vsel %vm628, %v594, 0
        %635 = vmatprep.subr.bf16.mxu0 0
        %636 = vmatpush1.bf16.msra.mxu0 %v620
        %637 = vmatprep.subr.bf16.mxu0 0
        %638 = vmatpush1.bf16.msra.mxu0 %v621
        %639 = vmatprep.subr.bf16.mxu0 0
        %640 = vmatpush1.bf16.msra.mxu0 %v622
        %641 = vmatprep.subr.bf16.mxu0 0
        %642 = vmatpush1.bf16.msra.mxu0 %v623
        %643 = vmatprep.subr.bf16.mxu0 0
        %644 = vmatpush1.bf16.msra.mxu0 0
        %645 = vmatprep.subr.bf16.mxu0 0
        %646 = vmatpush1.bf16.msra.mxu0 0
        %647 = vmatprep.subr.bf16.mxu0 0
        %648 = vmatpush1.bf16.msra.mxu0 0
        %649 = vmatprep.subr.bf16.mxu0 0
        %650 = vmatpush1.bf16.msra.mxu0 0
        %651 = vmatprep.subr.bf16.mxu0 0
        %652 = vmatpush1.bf16.msra.mxu0 0
        %653 = vmatprep.subr.bf16.mxu0 0
        %654 = vmatpush1.bf16.msra.mxu0 0
        %655 = vmatprep.subr.bf16.mxu0 0
        %656 = vmatpush1.bf16.msra.mxu0 0
        %657 = vmatprep.subr.bf16.mxu0 0
        %658 = vmatpush1.bf16.msra.mxu0 0
        %659 = vmatprep.subr.bf16.mxu0 0
        %660 = vmatpush1.bf16.msra.mxu0 0
        %661 = vmatprep.subr.bf16.mxu0 0
        %662 = vmatpush1.bf16.msra.mxu0 0
        %663 = vmatprep.subr.bf16.mxu0 0
        %664 = vmatpush1.bf16.msra.mxu0 0
        %665 = vmatprep.subr.bf16.mxu0 0
        %666 = vmatpush1.bf16.msra.mxu0 0
        %667 = vmatprep.mubr.bf16.mxu0 0
        %668 = vmatmul.mubr.bf16.gmra.mrb[0].mxu0 %v630
        %v669 = vpop.f32.mrb[0].mxu0
        %v670 = vadd.f32 0.0, %v669
        %v671 = vpop.f32.mrb[0].mxu0
        %v672 = vpop.f32.mrb[0].mxu0
        %v673 = vadd.f32 0.0, %v672
        %v674 = vpop.f32.mrb[0].mxu0
        %675 = vmatprep.mubr.bf16.mxu0 0
        %676 = vmatmul.mubr.bf16.gmra.mrb[0].mxu0 %v633
        %v677 = vpop.f32.mrb[0].mxu0
        %v678 = vadd.f32 0.0, %v677
        %v679 = vpop.f32.mrb[0].mxu0
        %v680 = vpop.f32.mrb[0].mxu0
        %v681 = vadd.f32 0.0, %v680
        %v682 = vpop.f32.mrb[0].mxu0
        %683 = vdwg.mxu0
        %v688 = vunpack.c.l.b16 %v564
        %v689 = vunpack.c.l.b16 %v565
        %v690 = vunpack.c.l.b16 %v566
        %v691 = vunpack.c.l.b16 %v567
        %v692 = vpack.c.b16 %v689, %v688
        %v693 = vpack.c.b16 %v691, %v690
        %v695 = vsel %vm628, %v692, 0
        %v698 = vsel %vm628, %v693, 0
        %700 = vmatprep.subr.bf16.mxu0 0
        %701 = vmatpush1.bf16.msra.mxu0 %v568
        %702 = vmatprep.subr.bf16.mxu0 0
        %703 = vmatpush1.bf16.msra.mxu0 %v569
        %704 = vmatprep.subr.bf16.mxu0 0
        %705 = vmatpush1.bf16.msra.mxu0 %v570
        %706 = vmatprep.subr.bf16.mxu0 0
        %707 = vmatpush1.bf16.msra.mxu0 %v571
        %708 = vmatprep.subr.bf16.mxu0 0
        %709 = vmatpush1.bf16.msra.mxu0 0
        %710 = vmatprep.subr.bf16.mxu0 0
        %711 = vmatpush1.bf16.msra.mxu0 0
        %712 = vmatprep.subr.bf16.mxu0 0
        %713 = vmatpush1.bf16.msra.mxu0 0
        %714 = vmatprep.subr.bf16.mxu0 0
        %715 = vmatpush1.bf16.msra.mxu0 0
        %716 = vmatprep.subr.bf16.mxu0 0
        %717 = vmatpush1.bf16.msra.mxu0 0
        %718 = vmatprep.subr.bf16.mxu0 0
        %719 = vmatpush1.bf16.msra.mxu0 0
        %720 = vmatprep.subr.bf16.mxu0 0
        %721 = vmatpush1.bf16.msra.mxu0 0
        %722 = vmatprep.subr.bf16.mxu0 0
        %723 = vmatpush1.bf16.msra.mxu0 0
        %724 = vmatprep.subr.bf16.mxu0 0
        %725 = vmatpush1.bf16.msra.mxu0 0
        %726 = vmatprep.subr.bf16.mxu0 0
        %727 = vmatpush1.bf16.msra.mxu0 0
        %728 = vmatprep.subr.bf16.mxu0 0
        %729 = vmatpush1.bf16.msra.mxu0 0
        %730 = vmatprep.subr.bf16.mxu0 0
        %731 = vmatpush1.bf16.msra.mxu0 0
        %732 = vmatprep.mubr.bf16.mxu0 0
        %733 = vmatmul.mubr.bf16.gmra.mrb[0].mxu0 %v695
        %v734 = vpop.f32.mrb[0].mxu0
        %v735 = vadd.f32 %v670, %v734
        %v736 = vpop.f32.mrb[0].mxu0
        %v737 = vpop.f32.mrb[0].mxu0
        %v738 = vadd.f32 %v673, %v737
        %v739 = vpop.f32.mrb[0].mxu0
        %740 = vmatprep.mubr.bf16.mxu0 0
        %741 = vmatmul.mubr.bf16.gmra.mrb[0].mxu0 %v698
        %v742 = vpop.f32.mrb[0].mxu0
        %v743 = vadd.f32 %v678, %v742
        %v744 = vpop.f32.mrb[0].mxu0
        %v745 = vpop.f32.mrb[0].mxu0
        %v746 = vadd.f32 %v681, %v745
        %v747 = vpop.f32.mrb[0].mxu0
        %748 = vdwg.mxu0
        %s749 = scalar_lea.vmem %s2, 32
        %v750 = vld [vmem:[%s749] sm:$0xf]
        %v751 = vld [vmem:[%s749 + $0x4] sm:$0xf]
        %v752 = vld [vmem:[%s749 + $0x8] sm:$0xf]
        %v753 = vld [vmem:[%s749 + $0xc] sm:$0xf]
        %v758 = vunpack.c.l.b16 %v750
        %v759 = vunpack.c.l.b16 %v751
        %v760 = vunpack.c.l.b16 %v752
        %v761 = vunpack.c.l.b16 %v753
        %v762 = vpack.c.b16 %v759, %v758
        %v763 = vpack.c.b16 %v761, %v760
        %764 = vrot.lane.b32.xlu0 %v577, 123
        %v765 = vpop.permute.xlu0 %764
        %766 = vrot.lane.b32.xlu0 %v578, 123
        %v767 = vpop.permute.xlu0 %766
        %768 = vrot.lane.b32.xlu0 %v579, 123
        %v769 = vpop.permute.xlu0 %768
        %770 = vrot.lane.b32.xlu0 %v580, 123
        %v771 = vpop.permute.xlu0 %770
        %772 = vrot.lane.b32.xlu0 %v581, 123
        %v773 = vpop.permute.xlu0 %772
        %774 = vrot.lane.b32.xlu0 %v582, 123
        %v775 = vpop.permute.xlu0 %774
        %776 = vrot.lane.b32.xlu0 %v583, 123
        %v777 = vpop.permute.xlu0 %776
        %778 = vrot.lane.b32.xlu0 %v584, 123
        %v779 = vpop.permute.xlu0 %778
        %vm780 = vcmask 1006592
        %v781 = vsel %vm780, %v765, %v767
        %v782 = vsel %vm780, %v769, %v771
        %v783 = vsel %vm780, %v773, %v775
        %v784 = vsel %vm780, %v777, %v779
        %v790 = vsel %vm628, %v762, 0
        %v793 = vsel %vm628, %v763, 0
        %795 = vmatprep.subr.bf16.mxu0 0
        %796 = vmatpush1.bf16.msra.mxu0 %v781
        %797 = vmatprep.subr.bf16.mxu0 0
        %798 = vmatpush1.bf16.msra.mxu0 %v782
        %799 = vmatprep.subr.bf16.mxu0 0
        %800 = vmatpush1.bf16.msra.mxu0 %v783
        %801 = vmatprep.subr.bf16.mxu0 0
        %802 = vmatpush1.bf16.msra.mxu0 %v784
        %803 = vmatprep.subr.bf16.mxu0 0
        %804 = vmatpush1.bf16.msra.mxu0 0
        %805 = vmatprep.subr.bf16.mxu0 0
        %806 = vmatpush1.bf16.msra.mxu0 0
        %807 = vmatprep.subr.bf16.mxu0 0
        %808 = vmatpush1.bf16.msra.mxu0 0
        %809 = vmatprep.subr.bf16.mxu0 0
        %810 = vmatpush1.bf16.msra.mxu0 0
        %811 = vmatprep.subr.bf16.mxu0 0
        %812 = vmatpush1.bf16.msra.mxu0 0
        %813 = vmatprep.subr.bf16.mxu0 0
        %814 = vmatpush1.bf16.msra.mxu0 0
        %815 = vmatprep.subr.bf16.mxu0 0
        %816 = vmatpush1.bf16.msra.mxu0 0
        %817 = vmatprep.subr.bf16.mxu0 0
        %818 = vmatpush1.bf16.msra.mxu0 0
        %819 = vmatprep.subr.bf16.mxu0 0
        %820 = vmatpush1.bf16.msra.mxu0 0
        %821 = vmatprep.subr.bf16.mxu0 0
        %822 = vmatpush1.bf16.msra.mxu0 0
        %823 = vmatprep.subr.bf16.mxu0 0
        %824 = vmatpush1.bf16.msra.mxu0 0
        %825 = vmatprep.subr.bf16.mxu0 0
        %826 = vmatpush1.bf16.msra.mxu0 0
        %827 = vmatprep.mubr.bf16.mxu0 0
        %828 = vmatmul.mubr.bf16.gmra.mrb[0].mxu0 %v790
        %v829 = vpop.f32.mrb[0].mxu0
        %v830 = vadd.f32 0.0, %v829
        %v831 = vpop.f32.mrb[0].mxu0
        %v832 = vpop.f32.mrb[0].mxu0
        %v833 = vadd.f32 0.0, %v832
        %v834 = vpop.f32.mrb[0].mxu0
        %835 = vmatprep.mubr.bf16.mxu0 0
        %836 = vmatmul.mubr.bf16.gmra.mrb[0].mxu0 %v793
        %v837 = vpop.f32.mrb[0].mxu0
        %v838 = vadd.f32 0.0, %v837
        %v839 = vpop.f32.mrb[0].mxu0
        %v840 = vpop.f32.mrb[0].mxu0
        %v841 = vadd.f32 0.0, %v840
        %v842 = vpop.f32.mrb[0].mxu0
        %843 = vdwg.mxu0
        %v844 = vadd.f32 %v735, %v830
        %v845 = vadd.f32 %v738, %v833
        %v846 = vadd.f32 %v743, %v838
        %v847 = vadd.f32 %v746, %v841
        %s848 = scalar_lea.vmem %s2, 48
        %v849 = vld [vmem:[%s848] sm:$0xf]
        %v850 = vld [vmem:[%s848 + $0x4] sm:$0xf]
        %v851 = vld [vmem:[%s848 + $0x8] sm:$0xf]
        %v852 = vld [vmem:[%s848 + $0xc] sm:$0xf]
        %v857 = vunpack.c.l.b16 %v849
        %v858 = vunpack.c.l.b16 %v850
        %v859 = vunpack.c.l.b16 %v851
        %v860 = vunpack.c.l.b16 %v852
        %v861 = vpack.c.b16 %v858, %v857
        %v862 = vpack.c.b16 %v860, %v859
        %863 = vrot.lane.b32.xlu0 %v577, 122
        %v864 = vpop.permute.xlu0 %863
        %865 = vrot.lane.b32.xlu0 %v578, 122
        %v866 = vpop.permute.xlu0 %865
        %867 = vrot.lane.b32.xlu0 %v579, 122
        %v868 = vpop.permute.xlu0 %867
        %869 = vrot.lane.b32.xlu0 %v580, 122
        %v870 = vpop.permute.xlu0 %869
        %871 = vrot.lane.b32.xlu0 %v581, 122
        %v872 = vpop.permute.xlu0 %871
        %873 = vrot.lane.b32.xlu0 %v582, 122
        %v874 = vpop.permute.xlu0 %873
        %875 = vrot.lane.b32.xlu0 %v583, 122
        %v876 = vpop.permute.xlu0 %875
        %877 = vrot.lane.b32.xlu0 %v584, 122
        %v878 = vpop.permute.xlu0 %877
        %vm879 = vcmask 998400
        %v880 = vsel %vm879, %v864, %v866
        %v881 = vsel %vm879, %v868, %v870
        %v882 = vsel %vm879, %v872, %v874
        %v883 = vsel %vm879, %v876, %v878
        %v889 = vsel %vm628, %v861, 0
        %v892 = vsel %vm628, %v862, 0
        %894 = vmatprep.subr.bf16.mxu0 0
        %895 = vmatpush1.bf16.msra.mxu0 %v880
        %896 = vmatprep.subr.bf16.mxu0 0
        %897 = vmatpush1.bf16.msra.mxu0 %v881
        %898 = vmatprep.subr.bf16.mxu0 0
        %899 = vmatpush1.bf16.msra.mxu0 %v882
        %900 = vmatprep.subr.bf16.mxu0 0
        %901 = vmatpush1.bf16.msra.mxu0 %v883
        %902 = vmatprep.subr.bf16.mxu0 0
        %903 = vmatpush1.bf16.msra.mxu0 0
        %904 = vmatprep.subr.bf16.mxu0 0
        %905 = vmatpush1.bf16.msra.mxu0 0
        %906 = vmatprep.subr.bf16.mxu0 0
        %907 = vmatpush1.bf16.msra.mxu0 0
        %908 = vmatprep.subr.bf16.mxu0 0
        %909 = vmatpush1.bf16.msra.mxu0 0
        %910 = vmatprep.subr.bf16.mxu0 0
        %911 = vmatpush1.bf16.msra.mxu0 0
        %912 = vmatprep.subr.bf16.mxu0 0
        %913 = vmatpush1.bf16.msra.mxu0 0
        %914 = vmatprep.subr.bf16.mxu0 0
        %915 = vmatpush1.bf16.msra.mxu0 0
        %916 = vmatprep.subr.bf16.mxu0 0
        %917 = vmatpush1.bf16.msra.mxu0 0
        %918 = vmatprep.subr.bf16.mxu0 0
        %919 = vmatpush1.bf16.msra.mxu0 0
        %920 = vmatprep.subr.bf16.mxu0 0
        %921 = vmatpush1.bf16.msra.mxu0 0
        %922 = vmatprep.subr.bf16.mxu0 0
        %923 = vmatpush1.bf16.msra.mxu0 0
        %924 = vmatprep.subr.bf16.mxu0 0
        %925 = vmatpush1.bf16.msra.mxu0 0
        %926 = vmatprep.mubr.bf16.mxu0 0
        %927 = vmatmul.mubr.bf16.gmra.mrb[0].mxu0 %v889
        %v928 = vpop.f32.mrb[0].mxu0
        %v929 = vadd.f32 0.0, %v928
        %v930 = vpop.f32.mrb[0].mxu0
        %v931 = vpop.f32.mrb[0].mxu0
        %v932 = vadd.f32 0.0, %v931
        %v933 = vpop.f32.mrb[0].mxu0
        %934 = vmatprep.mubr.bf16.mxu0 0
        %935 = vmatmul.mubr.bf16.gmra.mrb[0].mxu0 %v892
        %v936 = vpop.f32.mrb[0].mxu0
        %v937 = vadd.f32 0.0, %v936
        %v938 = vpop.f32.mrb[0].mxu0
        %v939 = vpop.f32.mrb[0].mxu0
        %v940 = vadd.f32 0.0, %v939
        %v941 = vpop.f32.mrb[0].mxu0
        %942 = vdwg.mxu0
        %v943 = vadd.f32 %v844, %v929
        %v944 = vadd.f32 %v845, %v932
        %v945 = vadd.f32 %v846, %v937
        %v946 = vadd.f32 %v847, %v940
        %v947 = vpack.c.bf16 %v944, %v943
        %v948 = vpack.c.bf16 %v946, %v945
        %v951 = vunpack.c.l.b16 %v947
        %v952 = vunpack.c.h.b16 %v947
        %v953 = vunpack.c.l.b16 %v948
        %v954 = vunpack.c.h.b16 %v948
        %v955 = vpack.c.b16 %v951, %v951
        %v956 = vpack.c.b16 %v952, %v952
        %v957 = vpack.c.b16 %v953, %v953
        %v958 = vpack.c.b16 %v954, %v954
        %963 = vst [vmem:[%s476] sm:$0xf] %v955
        %964 = vst [vmem:[%s476 + $0x4] sm:$0xf] %v956
        %965 = vst [vmem:[%s476 + $0x8] sm:$0xf] %v957
        %966 = vst [vmem:[%s476 + $0xc] sm:$0xf] %v958
        %v967 = vld [vmem:[%s468] sm:$0x1]
        %v969 = vlaneseq
        %v970 = vshrl.u32 %v969, 7
        %v971 = vsub.s32 0, %v970
        %v972 = vrot.slane %v967, %v971
        %v974 = vmul.f32 %v943, %v972
        %v975 = vmul.f32 %v944, %v972
        %v976 = vmul.f32 %v945, %v972
        %v977 = vmul.f32 %v946, %v972
        %978 = vadd.xlane.f32.xlu0 %v974
        %v979 = vpop.xlane.xlu0 %978
        %980 = vadd.xlane.f32.xlu0 %v975
        %v981 = vpop.xlane.xlu0 %980
        %982 = vadd.xlane.f32.xlu0 %v976
        %v983 = vpop.xlane.xlu0 %982
        %984 = vadd.xlane.f32.xlu0 %v977
        %v985 = vpop.xlane.xlu0 %984
        %vm986 = vcmask 7168
        %987 = vst.msk [vmem:[%s482] sm:$0xff] %vm986, %v979
        %988 = vst.msk [vmem:[%s482 + $0x8] sm:$0xff] %vm986, %v981
        %989 = vst.msk [vmem:[%s482 + $0x10] sm:$0xff] %vm986, %v983
        %990 = vst.msk [vmem:[%s482 + $0x18] sm:$0xff] %vm986, %v985
        %v991 = vmul.f32 %v974, %v943
        %v992 = vmul.f32 %v975, %v944
        %v993 = vmul.f32 %v976, %v945
        %v994 = vmul.f32 %v977, %v946
        %995 = vadd.xlane.f32.xlu0 %v991
        %v996 = vpop.xlane.xlu0 %995
        %997 = vadd.xlane.f32.xlu0 %v992
        %v998 = vpop.xlane.xlu0 %997
        %999 = vadd.xlane.f32.xlu0 %v993
        %v1000 = vpop.xlane.xlu0 %999
        %1001 = vadd.xlane.f32.xlu0 %v994
        %v1002 = vpop.xlane.xlu0 %1001
        %1003 = vst.msk [vmem:[%s489] sm:$0xff] %vm986, %v996
        %1004 = vst.msk [vmem:[%s489 + $0x8] sm:$0xff] %vm986, %v998
        %1005 = vst.msk [vmem:[%s489 + $0x10] sm:$0xff] %vm986, %v1000
        %1006 = vst.msk [vmem:[%s489 + $0x18] sm:$0xff] %vm986, %v1002
        %p1007 = scmp.lt.s32.totalorder %s22, 1
        %s1008 = scalar_select %p1007, %s22, 1
        %p1009 = scmp.lt.s32.totalorder %s23, 0
        %s1010 = scalar_select %p1009, %s23, 0
        %s1011 = smul.addr %s1008, 4
        %s1012 = sadd.s32 %s1010, %s1011
        %s1013 = smul.addr %s1012, 4
        %s1014 = scalar_lea.vmem %s4, %s1013
        %s1015 = sadd.s32 %s22, %s23
        %p1016 = scmp.lt.s32.totalorder %s1015, 1
        %s1017 = scalar_select %p1016, %s1015, 1
        %s1018 = smul.addr %s1017, 4
        %s1019 = smul.addr %s1018, 8
        %s1020 = scalar_lea.vmem %s5, %s1019
        %s1021 = sadd.s32 %s22, %s23
        %p1022 = scmp.lt.s32.totalorder %s1021, 1
        %s1023 = scalar_select %p1022, %s1021, 1
        %s1024 = smul.addr %s1023, 4
        %s1025 = smul.addr %s1024, 8
        %s1026 = scalar_lea.vmem %s6, %s1025
        // Predicated region
        $region119: #{cnn_module_forward.6} parent=109 // pred_check
          %p1027 = pneg %p155
        $region120: #{cnn_module_forward.6} parent=109 // pred_check_branch
          %1029 = sbr.rel (%p1027) target = $region122
        $region121: #{cnn_module_forward.6} parent=109 // pred_region
          _
        $region122: #{cnn_module_forward.6} parent=109 // pred_fallthru
          _
        // Predicated region
        $region123: #{cnn_module_forward.6} parent=109 // pred_check
          %p1030 = pneg %p183
        $region124: #{cnn_module_forward.6} parent=109 // pred_check_branch
          %1032 = sbr.rel (%p1030) target = $region126
        $region125: #{cnn_module_forward.6} parent=109 // pred_region
          %s1033 = sadd.s32 %s22, %s23
        $region126: #{cnn_module_forward.6} parent=109 // pred_fallthru
          _
        // Predicated region
        $region127: #{cnn_module_forward.6} parent=109 // pred_check
          %p1034 = pneg %p211
        $region128: #{cnn_module_forward.6} parent=109 // pred_check_branch
          %1036 = sbr.rel (%p1034) target = $region130
        $region129: #{cnn_module_forward.6} parent=109 // pred_region
          %s1037 = sadd.s32 %s22, %s23
        $region130: #{cnn_module_forward.6} parent=109 // pred_fallthru
          _
      $region110: #{cnn_module_forward.6} parent=5 // pred_fallthru
        _
      %p1038 = scmp.le.s32.totalorder 2, %s13
      // Predicated region
      $region131: #{cnn_module_forward.6} parent=5 // pred_check
        %p1039 = pneg %p1038
      $region132: #{cnn_module_forward.6} parent=5 // pred_check_branch
        %1041 = sbr.rel (%p1039) target = $region134
      $region133: #{cnn_module_forward.6} parent=5 // pred_region
        %s1042 = ssub.s32 %s13, 2
        // Predicated region
        $region135: #{cnn_module_forward.6} parent=133 // pred_check
          %p1043 = pneg %p161
        $region136: #{cnn_module_forward.6} parent=133 // pred_check_branch
          %1045 = sbr.rel (%p1043) target = $region138
        $region137: #{cnn_module_forward.6} parent=133 // pred_region
          %p1046 = scmp.lt.s32.totalorder %s24, 1
          %s1047 = scalar_select %p1046, %s24, 1
          %p1048 = scmp.lt.s32.totalorder %s25, 0
          %s1049 = scalar_select %p1048, %s25, 0
          %s1050 = smul.addr %s1047, 4
          %s1051 = sadd.s32 %s1049, %s1050
          %s1052 = smul.addr %s1051, 4
          %s1053 = scalar_lea.vmem %s4, %s1052
        $region138: #{cnn_module_forward.6} parent=133 // pred_fallthru
          _
        // Predicated region
        $region139: #{cnn_module_forward.6} parent=133 // pred_check
          %p1054 = pneg %p189
        $region140: #{cnn_module_forward.6} parent=133 // pred_check_branch
          %1056 = sbr.rel (%p1054) target = $region142
        $region141: #{cnn_module_forward.6} parent=133 // pred_region
          %s1057 = sadd.s32 %s24, %s25
          %p1058 = scmp.lt.s32.totalorder %s1057, 1
          %s1059 = scalar_select %p1058, %s1057, 1
          %s1060 = smul.addr %s1059, 4
          %s1061 = smul.addr %s1060, 8
          %s1062 = scalar_lea.vmem %s5, %s1061
        $region142: #{cnn_module_forward.6} parent=133 // pred_fallthru
          _
        // Predicated region
        $region143: #{cnn_module_forward.6} parent=133 // pred_check
          %p1063 = pneg %p217
        $region144: #{cnn_module_forward.6} parent=133 // pred_check_branch
          %1065 = sbr.rel (%p1063) target = $region146
        $region145: #{cnn_module_forward.6} parent=133 // pred_region
          %s1066 = sadd.s32 %s24, %s25
          %p1067 = scmp.lt.s32.totalorder %s1066, 1
          %s1068 = scalar_select %p1067, %s1066, 1
          %s1069 = smul.addr %s1068, 4
          %s1070 = smul.addr %s1069, 8
          %s1071 = scalar_lea.vmem %s6, %s1070
        $region146: #{cnn_module_forward.6} parent=133 // pred_fallthru
          _
      $region134: #{cnn_module_forward.6} parent=5 // pred_fallthru
        _
    $region6: #{cnn_module_forward.6} parent=1 // loop_footer
      %s17 = sadd.s32 1, %s13
    $region7: #{cnn_module_forward.6} parent=1 // loop_footer_branch
      %12 = sbr.rel target = $region3
    $region8: #{cnn_module_forward.6} parent=1 // loop_exit
      _

// kernel: cnn_module_forward.7
$region0: #{cnn_module_forward.7}
  #allocation0 [shape = 'u32[]', space=smem, size = 0x4, offset = 0x4, fixed_abs, tag = 'smem constant byte address 0x4 - core index']
  #allocation1 [shape = 'u32[144,128]{1,0:T(1,128)}', space=vmem, size = 0x12000, scoped, tag = 'internal scratch']
  %s0 = inlined_call_operand.vmem [shape: bf16[2,512], index: 0, kind: input, shape index: {}]
  %s1 = inlined_call_operand.vmem [shape: bf16[512,8], index: 1, kind: input, shape index: {}]
  %s2 = inlined_call_operand.vmem [shape: f32[1,8], index: 2, kind: input, shape index: {}]
  %s3 = inlined_call_operand.hbm [shape: f32[2,8], index: 3, kind: output, shape index: {}]
  %s4 = sld [smem:[#allocation0]]
  $region22: #{cnn_module_forward.7} parent=0
    _
  %s6 = ssub.s32 1, %s4
  %s7 = scalar_select 0, %s6, %s4
  $region1: #{cnn_module_forward.7} parent=0
    #allocation2 [shape = 'u8[1024]{0}', space=vmem, size = 0x400, scoped, tag = 'output window, operand 0, single buffered']
    #allocation3 [shape = 's32[1]{0}', space=sflag, size = 0x4, scoped, tag = 'scoped memory for cnn_module_forward.7']
    %8 = vsyncpa [#allocation3], 0
    // Predicated region
    $region2: #{cnn_module_forward.7} parent=1 // pred_check
      _
    $region3: #{cnn_module_forward.7} parent=1 // pred_check_branch
      %10 = sbr.rel (0) target = $region5
    $region4: #{cnn_module_forward.7} parent=1 // pred_region
      _
    $region5: #{cnn_module_forward.7} parent=1 // pred_fallthru
      _
    // Predicated region
    $region6: #{cnn_module_forward.7} parent=1 // pred_check
      _
    $region7: #{cnn_module_forward.7} parent=1 // pred_check_branch
      %12 = sbr.rel (0) target = $region9
    $region8: #{cnn_module_forward.7} parent=1 // pred_region
      _
    $region9: #{cnn_module_forward.7} parent=1 // pred_fallthru
      _
    // Predicated region
    $region10: #{cnn_module_forward.7} parent=1 // pred_check
      _
    $region11: #{cnn_module_forward.7} parent=1 // pred_check_branch
      %14 = sbr.rel (0) target = $region13
    $region12: #{cnn_module_forward.7} parent=1 // pred_region
      _
    $region13: #{cnn_module_forward.7} parent=1 // pred_fallthru
      _
    %v16 = vld [vmem:[%s0] sm:$0xf]
    %v17 = vld [vmem:[%s1] sm:$0xf]
    %v18 = vld [vmem:[%s1 + $0x4] sm:$0xf]
    %v19 = vld [vmem:[%s1 + $0x8] sm:$0xf]
    %v20 = vld [vmem:[%s1 + $0xc] sm:$0xf]
    %v21 = vld [vmem:[%s1 + $0x10] sm:$0xf]
    %v22 = vld [vmem:[%s1 + $0x14] sm:$0xf]
    %v23 = vld [vmem:[%s1 + $0x18] sm:$0xf]
    %v24 = vld [vmem:[%s1 + $0x1c] sm:$0xf]
    %v25 = vld [vmem:[%s1 + $0x20] sm:$0xf]
    %v26 = vld [vmem:[%s1 + $0x24] sm:$0xf]
    %v27 = vld [vmem:[%s1 + $0x28] sm:$0xf]
    %v28 = vld [vmem:[%s1 + $0x2c] sm:$0xf]
    %v29 = vld [vmem:[%s1 + $0x30] sm:$0xf]
    %v30 = vld [vmem:[%s1 + $0x34] sm:$0xf]
    %v31 = vld [vmem:[%s1 + $0x38] sm:$0xf]
    %v32 = vld [vmem:[%s1 + $0x3c] sm:$0xf]
    %v33 = vld [vmem:[%s1 + $0x40] sm:$0xf]
    %v34 = vld [vmem:[%s1 + $0x44] sm:$0xf]
    %v35 = vld [vmem:[%s1 + $0x48] sm:$0xf]
    %v36 = vld [vmem:[%s1 + $0x4c] sm:$0xf]
    %v37 = vld [vmem:[%s1 + $0x50] sm:$0xf]
    %v38 = vld [vmem:[%s1 + $0x54] sm:$0xf]
    %v39 = vld [vmem:[%s1 + $0x58] sm:$0xf]
    %v40 = vld [vmem:[%s1 + $0x5c] sm:$0xf]
    %v41 = vld [vmem:[%s1 + $0x60] sm:$0xf]
    %v42 = vld [vmem:[%s1 + $0x64] sm:$0xf]
    %v43 = vld [vmem:[%s1 + $0x68] sm:$0xf]
    %v44 = vld [vmem:[%s1 + $0x6c] sm:$0xf]
    %v45 = vld [vmem:[%s1 + $0x70] sm:$0xf]
    %v46 = vld [vmem:[%s1 + $0x74] sm:$0xf]
    %v47 = vld [vmem:[%s1 + $0x78] sm:$0xf]
    %v48 = vld [vmem:[%s1 + $0x7c] sm:$0xf]
    %v49 = vld [vmem:[%s1 + $0x80] sm:$0xf]
    %v50 = vld [vmem:[%s1 + $0x84] sm:$0xf]
    %v51 = vld [vmem:[%s1 + $0x88] sm:$0xf]
    %v52 = vld [vmem:[%s1 + $0x8c] sm:$0xf]
    %v53 = vld [vmem:[%s1 + $0x90] sm:$0xf]
    %v54 = vld [vmem:[%s1 + $0x94] sm:$0xf]
    %v55 = vld [vmem:[%s1 + $0x98] sm:$0xf]
    %v56 = vld [vmem:[%s1 + $0x9c] sm:$0xf]
    %v57 = vld [vmem:[%s1 + $0xa0] sm:$0xf]
    %v58 = vld [vmem:[%s1 + $0xa4] sm:$0xf]
    %v59 = vld [vmem:[%s1 + $0xa8] sm:$0xf]
    %v60 = vld [vmem:[%s1 + $0xac] sm:$0xf]
    %v61 = vld [vmem:[%s1 + $0xb0] sm:$0xf]
    %v62 = vld [vmem:[%s1 + $0xb4] sm:$0xf]
    %v63 = vld [vmem:[%s1 + $0xb8] sm:$0xf]
    %v64 = vld [vmem:[%s1 + $0xbc] sm:$0xf]
    %v65 = vld [vmem:[%s1 + $0xc0] sm:$0xf]
    %v66 = vld [vmem:[%s1 + $0xc4] sm:$0xf]
    %v67 = vld [vmem:[%s1 + $0xc8] sm:$0xf]
    %v68 = vld [vmem:[%s1 + $0xcc] sm:$0xf]
    %v69 = vld [vmem:[%s1 + $0xd0] sm:$0xf]
    %v70 = vld [vmem:[%s1 + $0xd4] sm:$0xf]
    %v71 = vld [vmem:[%s1 + $0xd8] sm:$0xf]
    %v72 = vld [vmem:[%s1 + $0xdc] sm:$0xf]
    %v73 = vld [vmem:[%s1 + $0xe0] sm:$0xf]
    %v74 = vld [vmem:[%s1 + $0xe4] sm:$0xf]
    %v75 = vld [vmem:[%s1 + $0xe8] sm:$0xf]
    %v76 = vld [vmem:[%s1 + $0xec] sm:$0xf]
    %v77 = vld [vmem:[%s1 + $0xf0] sm:$0xf]
    %v78 = vld [vmem:[%s1 + $0xf4] sm:$0xf]
    %v79 = vld [vmem:[%s1 + $0xf8] sm:$0xf]
    %v80 = vld [vmem:[%s1 + $0xfc] sm:$0xf]
    %v81 = vld [vmem:[%s2] sm:$0x1]
    %v83 = vlaneseq
    %v84 = vshrl.u32 %v83, 7
    %v85 = vsub.s32 0, %v84
    %v86 = vrot.slane %v81, %v85
    %v90 = vunpack.c.l.s4 1966171168
    %v91 = vunpack.c.0.s8 %v90
    %v92 = vlaneseq
    %v93 = vshrl.u32 %v92, 7
    %v94 = vsub.s32 %v91, %v93
    %v95 = vrot.slane %v16, %v94
    %v96 = vcombine.high %v95, %v95
    %v98 = vunpack.c.l.s4 1966171168
    %v99 = vunpack.c.0.s8 %v98
    %v100 = vlaneseq
    %v101 = vshrl.u32 %v100, 7
    %v102 = vsub.s32 %v99, %v101
    %v103 = vrot.slane %v95, %v102
    %v105 = vunpack.c.l.s4 1966171168
    %v106 = vunpack.c.0.s8 %v105
    %v107 = vlaneseq
    %v108 = vshrl.u32 %v107, 7
    %v109 = vsub.s32 %v106, %v108
    %v110 = vrot.slane %v96, %v109
    %v111 = vcombine.high %v103, %v103
    %v112 = vcombine.high %v110, %v110
    %v181 = vunpack.c.l.b16 %v17
    %v182 = vunpack.c.l.b16 %v18
    %v183 = vunpack.c.l.b16 %v19
    %v184 = vunpack.c.l.b16 %v20
    %v185 = vunpack.c.l.b16 %v21
    %v186 = vunpack.c.l.b16 %v22
    %v187 = vunpack.c.l.b16 %v23
    %v188 = vunpack.c.l.b16 %v24
    %v189 = vunpack.c.l.b16 %v25
    %v190 = vunpack.c.l.b16 %v26
    %v191 = vunpack.c.l.b16 %v27
    %v192 = vunpack.c.l.b16 %v28
    %v193 = vunpack.c.l.b16 %v29
    %v194 = vunpack.c.l.b16 %v30
    %v195 = vunpack.c.l.b16 %v31
    %v196 = vunpack.c.l.b16 %v32
    %v197 = vunpack.c.l.b16 %v33
    %v198 = vunpack.c.l.b16 %v34
    %v199 = vunpack.c.l.b16 %v35
    %v200 = vunpack.c.l.b16 %v36
    %v201 = vunpack.c.l.b16 %v37
    %v202 = vunpack.c.l.b16 %v38
    %v203 = vunpack.c.l.b16 %v39
    %v204 = vunpack.c.l.b16 %v40
    %v205 = vunpack.c.l.b16 %v41
    %v206 = vunpack.c.l.b16 %v42
    %v207 = vunpack.c.l.b16 %v43
    %v208 = vunpack.c.l.b16 %v44
    %v209 = vunpack.c.l.b16 %v45
    %v210 = vunpack.c.l.b16 %v46
    %v211 = vunpack.c.l.b16 %v47
    %v212 = vunpack.c.l.b16 %v48
    %v213 = vunpack.c.l.b16 %v49
    %v214 = vunpack.c.l.b16 %v50
    %v215 = vunpack.c.l.b16 %v51
    %v216 = vunpack.c.l.b16 %v52
    %v217 = vunpack.c.l.b16 %v53
    %v218 = vunpack.c.l.b16 %v54
    %v219 = vunpack.c.l.b16 %v55
    %v220 = vunpack.c.l.b16 %v56
    %v221 = vunpack.c.l.b16 %v57
    %v222 = vunpack.c.l.b16 %v58
    %v223 = vunpack.c.l.b16 %v59
    %v224 = vunpack.c.l.b16 %v60
    %v225 = vunpack.c.l.b16 %v61
    %v226 = vunpack.c.l.b16 %v62
    %v227 = vunpack.c.l.b16 %v63
    %v228 = vunpack.c.l.b16 %v64
    %v229 = vunpack.c.l.b16 %v65
    %v230 = vunpack.c.l.b16 %v66
    %v231 = vunpack.c.l.b16 %v67
    %v232 = vunpack.c.l.b16 %v68
    %v233 = vunpack.c.l.b16 %v69
    %v234 = vunpack.c.l.b16 %v70
    %v235 = vunpack.c.l.b16 %v71
    %v236 = vunpack.c.l.b16 %v72
    %v237 = vunpack.c.l.b16 %v73
    %v238 = vunpack.c.l.b16 %v74
    %v239 = vunpack.c.l.b16 %v75
    %v240 = vunpack.c.l.b16 %v76
    %v241 = vunpack.c.l.b16 %v77
    %v242 = vunpack.c.l.b16 %v78
    %v243 = vunpack.c.l.b16 %v79
    %v244 = vunpack.c.l.b16 %v80
    %v245 = vpack.c.b16 %v182, %v181
    %v246 = vpack.c.b16 %v184, %v183
    %v247 = vpack.c.b16 %v186, %v185
    %v248 = vpack.c.b16 %v188, %v187
    %v249 = vpack.c.b16 %v190, %v189
    %v250 = vpack.c.b16 %v192, %v191
    %v251 = vpack.c.b16 %v194, %v193
    %v252 = vpack.c.b16 %v196, %v195
    %v253 = vpack.c.b16 %v198, %v197
    %v254 = vpack.c.b16 %v200, %v199
    %v255 = vpack.c.b16 %v202, %v201
    %v256 = vpack.c.b16 %v204, %v203
    %v257 = vpack.c.b16 %v206, %v205
    %v258 = vpack.c.b16 %v208, %v207
    %v259 = vpack.c.b16 %v210, %v209
    %v260 = vpack.c.b16 %v212, %v211
    %v261 = vpack.c.b16 %v214, %v213
    %v262 = vpack.c.b16 %v216, %v215
    %v263 = vpack.c.b16 %v218, %v217
    %v264 = vpack.c.b16 %v220, %v219
    %v265 = vpack.c.b16 %v222, %v221
    %v266 = vpack.c.b16 %v224, %v223
    %v267 = vpack.c.b16 %v226, %v225
    %v268 = vpack.c.b16 %v228, %v227
    %v269 = vpack.c.b16 %v230, %v229
    %v270 = vpack.c.b16 %v232, %v231
    %v271 = vpack.c.b16 %v234, %v233
    %v272 = vpack.c.b16 %v236, %v235
    %v273 = vpack.c.b16 %v238, %v237
    %v274 = vpack.c.b16 %v240, %v239
    %v275 = vpack.c.b16 %v242, %v241
    %v276 = vpack.c.b16 %v244, %v243
    %309 = vmatprep.subr.bf16.mxu0 0
    %310 = vmatpush1.bf16.msra.mxu0 %v245
    %311 = vmatprep.subr.bf16.mxu0 0
    %312 = vmatpush1.bf16.msra.mxu0 %v246
    %313 = vmatprep.subr.bf16.mxu0 0
    %314 = vmatpush1.bf16.msra.mxu0 %v247
    %315 = vmatprep.subr.bf16.mxu0 0
    %316 = vmatpush1.bf16.msra.mxu0 %v248
    %317 = vmatprep.subr.bf16.mxu0 0
    %318 = vmatpush1.bf16.msra.mxu0 %v249
    %319 = vmatprep.subr.bf16.mxu0 0
    %320 = vmatpush1.bf16.msra.mxu0 %v250
    %321 = vmatprep.subr.bf16.mxu0 0
    %322 = vmatpush1.bf16.msra.mxu0 %v251
    %323 = vmatprep.subr.bf16.mxu0 0
    %324 = vmatpush1.bf16.msra.mxu0 %v252
    %325 = vmatprep.subr.bf16.mxu0 0
    %326 = vmatpush1.bf16.msra.mxu0 %v253
    %327 = vmatprep.subr.bf16.mxu0 0
    %328 = vmatpush1.bf16.msra.mxu0 %v254
    %329 = vmatprep.subr.bf16.mxu0 0
    %330 = vmatpush1.bf16.msra.mxu0 %v255
    %331 = vmatprep.subr.bf16.mxu0 0
    %332 = vmatpush1.bf16.msra.mxu0 %v256
    %333 = vmatprep.subr.bf16.mxu0 0
    %334 = vmatpush1.bf16.msra.mxu0 %v257
    %335 = vmatprep.subr.bf16.mxu0 0
    %336 = vmatpush1.bf16.msra.mxu0 %v258
    %337 = vmatprep.subr.bf16.mxu0 0
    %338 = vmatpush1.bf16.msra.mxu0 %v259
    %339 = vmatprep.subr.bf16.mxu0 0
    %340 = vmatpush1.bf16.msra.mxu0 %v260
    %341 = vmatprep.mubr.bf16.mxu0 %v110
    %342 = vmatmul.mubr.bf16.gmra.mrb[0].mxu0 %v103
    %v343 = vpop.f32.mrb[0].mxu0
    %v344 = vadd.f32 %v86, %v343
    %v345 = vpop.f32.mrb[0].mxu0
    %v346 = vpop.f32.mrb[0].mxu0
    %v347 = vpop.f32.mrb[0].mxu0
    %348 = vdwg.mxu0
    %349 = vmatprep.subr.bf16.mxu0 0
    %350 = vmatpush1.bf16.msra.mxu0 %v261
    %351 = vmatprep.subr.bf16.mxu0 0
    %352 = vmatpush1.bf16.msra.mxu0 %v262
    %353 = vmatprep.subr.bf16.mxu0 0
    %354 = vmatpush1.bf16.msra.mxu0 %v263
    %355 = vmatprep.subr.bf16.mxu0 0
    %356 = vmatpush1.bf16.msra.mxu0 %v264
    %357 = vmatprep.subr.bf16.mxu0 0
    %358 = vmatpush1.bf16.msra.mxu0 %v265
    %359 = vmatprep.subr.bf16.mxu0 0
    %360 = vmatpush1.bf16.msra.mxu0 %v266
    %361 = vmatprep.subr.bf16.mxu0 0
    %362 = vmatpush1.bf16.msra.mxu0 %v267
    %363 = vmatprep.subr.bf16.mxu0 0
    %364 = vmatpush1.bf16.msra.mxu0 %v268
    %365 = vmatprep.subr.bf16.mxu0 0
    %366 = vmatpush1.bf16.msra.mxu0 %v269
    %367 = vmatprep.subr.bf16.mxu0 0
    %368 = vmatpush1.bf16.msra.mxu0 %v270
    %369 = vmatprep.subr.bf16.mxu0 0
    %370 = vmatpush1.bf16.msra.mxu0 %v271
    %371 = vmatprep.subr.bf16.mxu0 0
    %372 = vmatpush1.bf16.msra.mxu0 %v272
    %373 = vmatprep.subr.bf16.mxu0 0
    %374 = vmatpush1.bf16.msra.mxu0 %v273
    %375 = vmatprep.subr.bf16.mxu0 0
    %376 = vmatpush1.bf16.msra.mxu0 %v274
    %377 = vmatprep.subr.bf16.mxu0 0
    %378 = vmatpush1.bf16.msra.mxu0 %v275
    %379 = vmatprep.subr.bf16.mxu0 0
    %380 = vmatpush1.bf16.msra.mxu0 %v276
    %381 = vmatprep.mubr.bf16.mxu0 %v112
    %382 = vmatmul.mubr.bf16.gmra.mrb[0].mxu0 %v111
    %v383 = vpop.f32.mrb[0].mxu0
    %v384 = vadd.f32 %v344, %v383
    %v385 = vpop.f32.mrb[0].mxu0
    %v386 = vpop.f32.mrb[0].mxu0
    %v387 = vpop.f32.mrb[0].mxu0
    %388 = vdwg.mxu0
    %vm389 = vcmask 58368
    %390 = vst.msk [vmem:[#allocation2] sm:$0x3] %vm389, %v384
    // Predicated region
    $region14: #{cnn_module_forward.7} parent=1 // pred_check
      _
    $region15: #{cnn_module_forward.7} parent=1 // pred_check_branch
      %392 = sbr.rel (0) target = $region17
    $region16: #{cnn_module_forward.7} parent=1 // pred_region
      %s394 = ssub.s32 32, 32
      %395 = vsyncadd [#allocation3], %s394
      %s397 = sshll.u32 [#allocation2], 4
      %s398 = int_to_ptr.vmem [resolvable:$true] %s397
      %400 = dma.vmem_to_hbm [thread:$0]  %s398, 32, %s3, [#allocation3]
    $region17: #{cnn_module_forward.7} parent=1 // pred_fallthru
      _
    // Predicated region
    $region18: #{cnn_module_forward.7} parent=1 // pred_check
      _
    $region19: #{cnn_module_forward.7} parent=1 // pred_check_branch
      %402 = sbr.rel (0) target = $region21
    $region20: #{cnn_module_forward.7} parent=1 // pred_region
      %403 = dma.done [#allocation3], 32
    $region21: #{cnn_module_forward.7} parent=1 // pred_fallthru
      _
    %404 = vsyncpa [#allocation3], 1

</llo_original>
